<compile_context>
chip_gen: v7x
topology: tpu7x:2x2x1
jax: 0.10.0
libtpu: 0.0.40
codegen_flags: <defaults>
</compile_context>

<pallas_src>
import math

import jax
import jax.numpy as jnp
import numpy as np
from jax.experimental import pallas as pl
from jax.experimental.pallas import tpu as pltpu

# Model hyper-parameters (ESMTransformerAggregation defaults, num_layers=1).
EMBED_DIM = 128
NUM_HEADS = 4
HEAD_DIM = EMBED_DIM // NUM_HEADS
FFN_DIM = EMBED_DIM * 4
LN_EPS = 1e-5                      # nn.LayerNorm default (ESM1bLayerNorm)
ATTN_SCALE = HEAD_DIM ** -0.5
NEG_INF = -1e30                    # finite stand-in for masked_fill(-inf)


# ----------------------------- in-kernel helpers -----------------------------

def _layer_norm(v, w, b):
    mu = jnp.mean(v, axis=-1, keepdims=True)
    c = v - mu
    var = jnp.mean(c * c, axis=-1, keepdims=True)
    return c * jax.lax.rsqrt(var + LN_EPS) * w + b


def _erf_approx(z):
    # Abramowitz & Stegun 7.1.26, |error| <= 1.5e-7 (TPU-friendly: exp/mul only).
    a1, a2, a3, a4, a5 = (0.254829592, -0.284496736, 1.421413741,
                          -1.453152027, 1.061405429)
    p = 0.3275911
    s = jnp.where(z >= 0.0, 1.0, -1.0)
    az = jnp.abs(z)
    t = 1.0 / (1.0 + p * az)
    poly = ((((a5 * t + a4) * t + a3) * t + a2) * t + a1) * t
    return s * (1.0 - poly * jnp.exp(-az * az))


def _gelu_exact(v):
    # ESM gelu: 0.5 * x * (1 + erf(x / sqrt(2)))
    return 0.5 * v * (1.0 + _erf_approx(v * (1.0 / math.sqrt(2.0))))


# --------------------------------- kernel ------------------------------------

def esm_agg_kernel(x_ref,
                   ln1_w_ref, ln1_b_ref,
                   wq_ref, bq_ref,
                   wkv_ref, bkv_ref,
                   wo_ref, bo_ref,
                   ln2_w_ref, ln2_b_ref,
                   w1_ref, b1_ref, w2_ref, b2_ref,
                   lnf_w_ref, lnf_b_ref,
                   cos_ref, sin_ref, hmask_ref,
                   o_ref):
    x = x_ref[...]                                   # (TB, L, D)
    tb, seq, d = x.shape

    # padding_mask = (x == 0).all(-1);  x = x * (1 - padding_mask)
    absx = jnp.abs(x)
    row_pad = (jnp.max(absx, axis=-1, keepdims=True) == 0.0)          # (TB, L, 1)
    x = x * (1.0 - row_pad.astype(x.dtype))

    # Key-padding mask in lane-major (TB, 1, L) form via a tiny batched matmul
    # (sum_d |x| == 0  <=>  padded), avoiding an explicit sublane->lane transpose.
    ones_q = jnp.ones((tb, 1, d), jnp.float32)
    key_abs = jnp.einsum('bqd,bkd->bqk', ones_q, absx,
                         preferred_element_type=jnp.float32)          # (TB, 1, L)
    key_pad = key_abs == 0.0

    ln1_w = ln1_w_ref[...]
    ln1_b = ln1_b_ref[...]

    # ---- Full-sequence path: LayerNorm -> fused [K | rotate_half(K) | V] -----
    x2 = x.reshape(tb * seq, d)
    h_full = _layer_norm(x2, ln1_w, ln1_b)                            # (TB*L, D)
    kv = jnp.dot(h_full, wkv_ref[...],
                 preferred_element_type=jnp.float32) + bkv_ref[...]   # (TB*L, 3D)
    k_plain = kv[:, :d].reshape(tb, seq, d)
    k_half = kv[:, d:2 * d].reshape(tb, seq, d)
    v3 = kv[:, 2 * d:].reshape(tb, seq, d)
    cos = cos_ref[...][None]                                          # (1, L, D)
    sin = sin_ref[...][None]
    k3 = k_plain * cos + k_half * sin                                 # rotary K

    # ---- Token-0 path: query (rotary at position 0 is the identity) ----------
    x0 = x[:, 0:1, :].reshape(tb, d)                                  # (TB, D)
    h0 = _layer_norm(x0, ln1_w, ln1_b)
    q = jnp.dot(h0, wq_ref[...],
                preferred_element_type=jnp.float32) + bq_ref[...]     # scale folded in

    # ---- Attention for token 0: all heads in one batched matmul --------------
    # Head-h lanes of q are isolated with full-width, lane-aligned masks, so the
    # (TB, H, L) scores come out of a single K=128 contraction per sequence.
    hmask3 = hmask_ref[...].reshape(1, NUM_HEADS, d)                  # (1, H, D)
    q4 = q.reshape(tb, 1, d) * hmask3                                 # (TB, H, D)
    s = jnp.einsum('bhd,bkd->bhk', q4, k3,
                   preferred_element_type=jnp.float32)                # (TB, H, L)
    s = jnp.where(key_pad, NEG_INF, s)
    s = s - jnp.max(s, axis=-1, keepdims=True)
    p = jnp.exp(s)
    p = p / jnp.sum(p, axis=-1, keepdims=True)
    ctx_h = jnp.einsum('bhk,bkd->bhd', p, v3,
                       preferred_element_type=jnp.float32)            # (TB, H, D)
    # concat(heads): each head only keeps its own lanes, summed across heads.
    ctx = jnp.sum(ctx_h * hmask3, axis=1, keepdims=True).reshape(tb, d)
    attn = jnp.dot(ctx, wo_ref[...],
                   preferred_element_type=jnp.float32) + bo_ref[...]
    x0 = x0 + attn

    # ---- Feed-forward (token 0 only) -----------------------------------------
    residual = x0
    h = _layer_norm(x0, ln2_w_ref[...], ln2_b_ref[...])
    h = jnp.dot(h, w1_ref[...], preferred_element_type=jnp.float32) + b1_ref[...]
    h = _gelu_exact(h)
    h = jnp.dot(h, w2_ref[...], preferred_element_type=jnp.float32) + b2_ref[...]
    x0 = residual + h

    # -------------------------- emb_layer_norm_after --------------------------
    out = _layer_norm(x0, lnf_w_ref[...], lnf_b_ref[...])
    o_ref[...] = out.reshape(o_ref.shape)


# ------------------------------ glue (plain JAX) ------------------------------

def rotary_tables(seq_len):
    inv_freq = 1.0 / (10000.0 ** (jnp.arange(0, HEAD_DIM, 2, dtype=jnp.float32)
                                  / HEAD_DIM))
    t = jnp.arange(seq_len, dtype=jnp.float32)
    freqs = t[:, None] * inv_freq[None, :]           # (L, Hd/2)
    emb = jnp.concatenate([freqs, freqs], axis=-1)   # (L, Hd)
    cos = jnp.cos(emb)
    sin = jnp.sin(emb)
    return jnp.tile(cos, (1, NUM_HEADS)), jnp.tile(sin, (1, NUM_HEADS))  # (L, D)


def rotate_half_matrix():
    # (D, D) block-diagonal R with x @ R == per-head rotate_half(x).
    half = HEAD_DIM // 2
    blk = np.zeros((HEAD_DIM, HEAD_DIM), dtype=np.float32)
    for i in range(half):
        blk[i + half, i] = -1.0          # out_i        = -x_{i+half}
        blk[i, i + half] = 1.0           # out_{i+half} =  x_i
    full = np.zeros((EMBED_DIM, EMBED_DIM), dtype=np.float32)
    for h in range(NUM_HEADS):
        s = h * HEAD_DIM
        full[s:s + HEAD_DIM, s:s + HEAD_DIM] = blk
    return jnp.asarray(full)


def head_mask_matrix():
    # (H, D): row h is 1.0 on head h's lanes, 0 elsewhere (lane-aligned masks).
    m = np.zeros((NUM_HEADS, EMBED_DIM), dtype=np.float32)
    for h in range(NUM_HEADS):
        m[h, h * HEAD_DIM:(h + 1) * HEAD_DIM] = 1.0
    return jnp.asarray(m)


def init_params(key):
    ks = iter(jax.random.split(key, 32))

    def linear(din, dout):
        w = 0.02 * jax.random.normal(next(ks), (din, dout), jnp.float32)   # W.T layout
        b = 0.02 * jax.random.normal(next(ks), (1, dout), jnp.float32)
        return w, b

    def layer_norm_params(d):
        w = 1.0 + 0.1 * jax.random.normal(next(ks), (1, d), jnp.float32)
        b = 0.02 * jax.random.normal(next(ks), (1, d), jnp.float32)
        return w, b

    p = {}
    p["ln1_w"], p["ln1_b"] = layer_norm_params(EMBED_DIM)
    p["wq"], p["bq"] = linear(EMBED_DIM, EMBED_DIM)
    p["wk"], p["bk"] = linear(EMBED_DIM, EMBED_DIM)
    p["wv"], p["bv"] = linear(EMBED_DIM, EMBED_DIM)
    p["wo"], p["bo"] = linear(EMBED_DIM, EMBED_DIM)
    p["ln2_w"], p["ln2_b"] = layer_norm_params(EMBED_DIM)
    p["w1"], p["b1"] = linear(EMBED_DIM, FFN_DIM)
    p["w2"], p["b2"] = linear(FFN_DIM, EMBED_DIM)
    p["lnf_w"], p["lnf_b"] = layer_norm_params(EMBED_DIM)
    return p


def _full_spec(a):
    n = a.ndim
    return pl.BlockSpec(a.shape, lambda b, _n=n: (0,) * _n)


def _pick_tb(batch, seq_len):
    # Double-buffered (TB, L, D) f32 input must fit inside the default scoped
    # VMEM (16 MiB on v5e, 32 MiB on v6e/v7x) next to <1 MiB of weights, so
    # budget ~8 MiB for the input buffers.  Keep TB a divisor of B.
    budget = 8 * 1024 * 1024
    per_seq = 2 * seq_len * EMBED_DIM * 4
    tb = max(1, min(batch, budget // per_seq))
    while batch % tb != 0:
        tb -= 1
    return tb


def esm_transformer_aggregation(x, params, tb=None):
    B, L, D = x.shape
    assert D == EMBED_DIM
    if tb is None:
        tb = _pick_tb(B, L)
    assert B % tb == 0

    cos_full, sin_full = rotary_tables(L)            # (L, D) tiled across heads
    rot = rotate_half_matrix()                       # exact +-1 permutation

    hi = jax.lax.Precision.HIGHEST
    # Fold the attention scale into Wq/bq; fuse K, rotate_half(K), V weights
    # into one wide (D, 3D) projection (single MXU pass with N=384).
    wq_s = params["wq"] * ATTN_SCALE
    bq_s = params["bq"] * ATTN_SCALE
    wk, bk = params["wk"], params["bk"]
    w_kv = jnp.concatenate(
        [wk, jnp.dot(wk, rot, precision=hi), params["wv"]], axis=1)   # (D, 3D)
    b_kv = jnp.concatenate(
        [bk, jnp.dot(bk, rot, precision=hi), params["bv"]], axis=1)   # (1, 3D)

    weights = [params["ln1_w"], params["ln1_b"],
               wq_s, bq_s, w_kv, b_kv,
               params["wo"], params["bo"],
               params["ln2_w"], params["ln2_b"],
               params["w1"], params["b1"], params["w2"], params["b2"],
               params["lnf_w"], params["lnf_b"],
               cos_full, sin_full, head_mask_matrix()]

    in_specs = ([pl.BlockSpec((tb, L, D), lambda b: (b, 0, 0))]
                + [_full_spec(a) for a in weights])

    out = pl.pallas_call(
        esm_agg_kernel,
        out_shape=jax.ShapeDtypeStruct((B, 1, D), x.dtype),
        grid=(B // tb,),
        in_specs=in_specs,
        out_specs=pl.BlockSpec((tb, 1, D), lambda b: (b, 0, 0)),
        compiler_params=pltpu.CompilerParams(dimension_semantics=("parallel",)),
    )(x, *weights)
    return out[:, 0, :]          # (B, D) — first token, as in the PyTorch module


# --------------------------- pure-JAX reference check -------------------------

def reference_forward(x, params):
    B, L, D = x.shape
    H, Hd = NUM_HEADS, HEAD_DIM
    pad = jnp.all(x == 0.0, axis=-1)                            # (B, L)
    x = x * (1.0 - pad[..., None].astype(x.dtype))

    def ln(v, w, b):
        mu = jnp.mean(v, axis=-1, keepdims=True)
        var = jnp.mean((v - mu) ** 2, axis=-1, keepdims=True)
        return (v - mu) * jax.lax.rsqrt(var + LN_EPS) * w + b

    cos_full, sin_full = rotary_tables(L)
    cos = cos_full[:, :Hd]
    sin = sin_full[:, :Hd]

    def rotate_half(t):
        return jnp.concatenate([-t[..., Hd // 2:], t[..., :Hd // 2]], axis=-1)

    residual = x
    h = ln(x, params["ln1_w"], params["ln1_b"])
    q = (h @ params["wq"] + params["bq"]) * ATTN_SCALE
    k = h @ params["wk"] + params["bk"]
    v = h @ params["wv"] + params["bv"]
    qh = q.reshape(B, L, H, Hd)
    kh = k.reshape(B, L, H, Hd)
    vh = v.reshape(B, L, H, Hd)
    qh = qh * cos[None, :, None, :] + rotate_half(qh) * sin[None, :, None, :]
    kh = kh * cos[None, :, None, :] + rotate_half(kh) * sin[None, :, None, :]
    scores = jnp.einsum("blhd,bmhd->bhlm", qh, kh)
    scores = jnp.where(pad[:, None, None, :], NEG_INF, scores)
    scores = scores - jnp.max(scores, axis=-1, keepdims=True)
    p = jnp.exp(scores)
    p = p / jnp.sum(p, axis=-1, keepdims=True)
    ctx = jnp.einsum("bhlm,bmhd->blhd", p, vh).reshape(B, L, D)
    x = residual + ctx @ params["wo"] + params["bo"]

    residual = x
    h = ln(x, params["ln2_w"], params["ln2_b"])
    h = h @ params["w1"] + params["b1"]
    h = 0.5 * h * (1.0 + jax.lax.erf(h / jnp.sqrt(2.0)))        # exact gelu
    h = h @ params["w2"] + params["b2"]
    x = residual + h

    x = ln(x, params["lnf_w"], params["lnf_b"])
    return x[:, 0]


if __name__ == "__main__":
    B, L = 4, 16
    key = jax.random.PRNGKey(0)
    k_x, k_p = jax.random.split(key)
    x = jax.random.normal(k_x, (B, L, EMBED_DIM), jnp.float32)
    x = x.at[1, L - 3:].set(0.0)      # last three tokens of batch 1 are padding
    x = x.at[3, L - 5:].set(0.0)      # last five tokens of batch 3 are padding
    params = init_params(k_p)

    out = esm_transformer_aggregation(x, params, tb=2)   # grid=(2,), TB=2 per step
    out = jax.block_until_ready(out)
    assert out.shape == (B, EMBED_DIM)

    ref = reference_forward(x, params)
    np.testing.assert_allclose(np.asarray(out), np.asarray(ref),
                               rtol=2e-3, atol=2e-3)
    print("KERNEL_OK")
</pallas_src>

<mosaic_0001>
module attributes {stable_mosaic.version = 11 : i64} {
  func.func @esm_agg_kernel(%arg0: i32, %arg1: memref<2x16x128xf32, #tpu.memory_space<vmem>>, %arg2: memref<1x128xf32, #tpu.memory_space<vmem>>, %arg3: memref<1x128xf32, #tpu.memory_space<vmem>>, %arg4: memref<128x128xf32, #tpu.memory_space<vmem>>, %arg5: memref<1x128xf32, #tpu.memory_space<vmem>>, %arg6: memref<128x384xf32, #tpu.memory_space<vmem>>, %arg7: memref<1x384xf32, #tpu.memory_space<vmem>>, %arg8: memref<128x128xf32, #tpu.memory_space<vmem>>, %arg9: memref<1x128xf32, #tpu.memory_space<vmem>>, %arg10: memref<1x128xf32, #tpu.memory_space<vmem>>, %arg11: memref<1x128xf32, #tpu.memory_space<vmem>>, %arg12: memref<128x512xf32, #tpu.memory_space<vmem>>, %arg13: memref<1x512xf32, #tpu.memory_space<vmem>>, %arg14: memref<512x128xf32, #tpu.memory_space<vmem>>, %arg15: memref<1x128xf32, #tpu.memory_space<vmem>>, %arg16: memref<1x128xf32, #tpu.memory_space<vmem>>, %arg17: memref<1x128xf32, #tpu.memory_space<vmem>>, %arg18: memref<16x128xf32, #tpu.memory_space<vmem>>, %arg19: memref<16x128xf32, #tpu.memory_space<vmem>>, %arg20: memref<4x128xf32, #tpu.memory_space<vmem>>, %arg21: memref<2x1x128xf32, #tpu.memory_space<vmem>>) attributes {dimension_semantics = [#tpu.dimension_semantics<parallel>], iteration_bounds = array<i64: 2>, scalar_prefetch = 0 : i64, scratch_operands = 0 : i64, tpu.core_type = #tpu.core_type<tc>, window_params = [{transform_indices = @transform_0, window_bounds = array<i64: 2, 16, 128>}, {pipeline_mode = #tpu.pipeline_mode<synchronous>, transform_indices = @transform_1, window_bounds = array<i64: 1, 128>}, {pipeline_mode = #tpu.pipeline_mode<synchronous>, transform_indices = @transform_2, window_bounds = array<i64: 1, 128>}, {pipeline_mode = #tpu.pipeline_mode<synchronous>, transform_indices = @transform_3, window_bounds = array<i64: 128, 128>}, {pipeline_mode = #tpu.pipeline_mode<synchronous>, transform_indices = @transform_4, window_bounds = array<i64: 1, 128>}, {pipeline_mode = #tpu.pipeline_mode<synchronous>, transform_indices = @transform_5, window_bounds = array<i64: 128, 384>}, {pipeline_mode = #tpu.pipeline_mode<synchronous>, transform_indices = @transform_6, window_bounds = array<i64: 1, 384>}, {pipeline_mode = #tpu.pipeline_mode<synchronous>, transform_indices = @transform_7, window_bounds = array<i64: 128, 128>}, {pipeline_mode = #tpu.pipeline_mode<synchronous>, transform_indices = @transform_8, window_bounds = array<i64: 1, 128>}, {pipeline_mode = #tpu.pipeline_mode<synchronous>, transform_indices = @transform_9, window_bounds = array<i64: 1, 128>}, {pipeline_mode = #tpu.pipeline_mode<synchronous>, transform_indices = @transform_10, window_bounds = array<i64: 1, 128>}, {pipeline_mode = #tpu.pipeline_mode<synchronous>, transform_indices = @transform_11, window_bounds = array<i64: 128, 512>}, {pipeline_mode = #tpu.pipeline_mode<synchronous>, transform_indices = @transform_12, window_bounds = array<i64: 1, 512>}, {pipeline_mode = #tpu.pipeline_mode<synchronous>, transform_indices = @transform_13, window_bounds = array<i64: 512, 128>}, {pipeline_mode = #tpu.pipeline_mode<synchronous>, transform_indices = @transform_14, window_bounds = array<i64: 1, 128>}, {pipeline_mode = #tpu.pipeline_mode<synchronous>, transform_indices = @transform_15, window_bounds = array<i64: 1, 128>}, {pipeline_mode = #tpu.pipeline_mode<synchronous>, transform_indices = @transform_16, window_bounds = array<i64: 1, 128>}, {pipeline_mode = #tpu.pipeline_mode<synchronous>, transform_indices = @transform_17, window_bounds = array<i64: 16, 128>}, {pipeline_mode = #tpu.pipeline_mode<synchronous>, transform_indices = @transform_18, window_bounds = array<i64: 16, 128>}, {pipeline_mode = #tpu.pipeline_mode<synchronous>, transform_indices = @transform_19, window_bounds = array<i64: 4, 128>}, {transform_indices = @transform_20, window_bounds = array<i64: 2, 1, 128>}]} {
    %c0 = arith.constant 0 : index
    %c0_0 = arith.constant 0 : index
    %c0_1 = arith.constant 0 : index
    %0 = vector.load %arg1[%c0, %c0_0, %c0_1] : memref<2x16x128xf32, #tpu.memory_space<vmem>>, vector<2x16x128xf32>
    %1 = math.absf %0 : vector<2x16x128xf32>
    %cst = arith.constant dense<0xFF800000> : vector<2x16xf32>
    %2 = vector.multi_reduction <maximumf>, %1, %cst [2] : vector<2x16x128xf32> to vector<2x16xf32>
    %3 = vector.shape_cast %2 : vector<2x16xf32> to vector<2x16x1xf32>
    %cst_2 = arith.constant 0.000000e+00 : f32
    %4 = vector.broadcast %cst_2 : f32 to vector<2x16x1xf32>
    %5 = arith.cmpf oeq, %3, %4 : vector<2x16x1xf32>
    %6 = arith.extui %5 : vector<2x16x1xi1> to vector<2x16x1xi32>
    %7 = arith.sitofp %6 : vector<2x16x1xi32> to vector<2x16x1xf32>
    %cst_3 = arith.constant 1.000000e+00 : f32
    %8 = vector.broadcast %cst_3 : f32 to vector<2x16x1xf32>
    %9 = arith.subf %8, %7 : vector<2x16x1xf32>
    %10 = vector.broadcast %9 : vector<2x16x1xf32> to vector<2x16x128xf32>
    %11 = arith.mulf %0, %10 : vector<2x16x128xf32>
    %cst_4 = arith.constant 1.000000e+00 : f32
    %12 = vector.broadcast %cst_4 : f32 to vector<2x1x128xf32>
    "tpu.trace_start"() <{level = 10 : i32, message = "bqd,bkd->bqk"}> : () -> ()
    %cst_5 = arith.constant dense<0.000000e+00> : vector<2x1x16xf32>
    %13 = tpu.matmul %12, %1, %cst_5 {dimension_numbers = #tpu.dot_dimension_numbers<[2], [2], [1], [1], [0, 0, 0, 1, 1, 1], [0], [0]>} : vector<2x1x128xf32>, vector<2x16x128xf32>, vector<2x1x16xf32> -> vector<2x1x16xf32>
    %cst_6 = arith.constant 0.000000e+00 : f32
    "tpu.trace_stop"() : () -> ()
    %14 = vector.broadcast %cst_6 : f32 to vector<2x1x16xf32>
    %15 = arith.cmpf oeq, %13, %14 : vector<2x1x16xf32>
    %c0_7 = arith.constant 0 : index
    %c0_8 = arith.constant 0 : index
    %16 = vector.load %arg2[%c0_7, %c0_8] : memref<1x128xf32, #tpu.memory_space<vmem>>, vector<1x128xf32>
    %c0_9 = arith.constant 0 : index
    %c0_10 = arith.constant 0 : index
    %17 = vector.load %arg3[%c0_9, %c0_10] : memref<1x128xf32, #tpu.memory_space<vmem>>, vector<1x128xf32>
    %18 = vector.shape_cast %11 : vector<2x16x128xf32> to vector<32x128xf32>
    %cst_11 = arith.constant dense<0.000000e+00> : vector<32xf32>
    %19 = vector.multi_reduction <add>, %18, %cst_11 [1] : vector<32x128xf32> to vector<32xf32>
    %20 = vector.shape_cast %19 : vector<32xf32> to vector<32x1xf32>
    %cst_12 = arith.constant 1.280000e+02 : f32
    %21 = vector.broadcast %cst_12 : f32 to vector<32x1xf32>
    %22 = arith.divf %20, %21 : vector<32x1xf32>
    %23 = vector.broadcast %22 : vector<32x1xf32> to vector<32x128xf32>
    %24 = arith.subf %18, %23 : vector<32x128xf32>
    %25 = arith.mulf %24, %24 : vector<32x128xf32>
    %cst_13 = arith.constant dense<0.000000e+00> : vector<32xf32>
    %26 = vector.multi_reduction <add>, %25, %cst_13 [1] : vector<32x128xf32> to vector<32xf32>
    %27 = vector.shape_cast %26 : vector<32xf32> to vector<32x1xf32>
    %cst_14 = arith.constant 1.280000e+02 : f32
    %28 = vector.broadcast %cst_14 : f32 to vector<32x1xf32>
    %29 = arith.divf %27, %28 : vector<32x1xf32>
    %cst_15 = arith.constant 9.99999974E-6 : f32
    %30 = vector.broadcast %cst_15 : f32 to vector<32x1xf32>
    %31 = arith.addf %29, %30 : vector<32x1xf32>
    %32 = math.rsqrt %31 : vector<32x1xf32>
    %33 = vector.broadcast %32 : vector<32x1xf32> to vector<32x128xf32>
    %34 = arith.mulf %24, %33 : vector<32x128xf32>
    %35 = vector.broadcast %16 : vector<1x128xf32> to vector<32x128xf32>
    %36 = arith.mulf %34, %35 : vector<32x128xf32>
    %37 = vector.broadcast %17 : vector<1x128xf32> to vector<32x128xf32>
    %38 = arith.addf %36, %37 : vector<32x128xf32>
    %c0_16 = arith.constant 0 : index
    %c0_17 = arith.constant 0 : index
    %39 = vector.load %arg6[%c0_16, %c0_17] : memref<128x384xf32, #tpu.memory_space<vmem>>, vector<128x384xf32>
    %cst_18 = arith.constant dense<0.000000e+00> : vector<32x384xf32>
    %40 = tpu.matmul %38, %39, %cst_18 {dimension_numbers = #tpu.dot_dimension_numbers<[1], [0], [0], [1], [0, 0, 1, 1], [], []>} : vector<32x128xf32>, vector<128x384xf32>, vector<32x384xf32> -> vector<32x384xf32>
    %c0_19 = arith.constant 0 : index
    %c0_20 = arith.constant 0 : index
    %41 = vector.load %arg7[%c0_19, %c0_20] : memref<1x384xf32, #tpu.memory_space<vmem>>, vector<1x384xf32>
    %42 = vector.broadcast %41 : vector<1x384xf32> to vector<32x384xf32>
    %43 = arith.addf %40, %42 : vector<32x384xf32>
    %44 = vector.extract_strided_slice %43 {offsets = [0, 0], sizes = [32, 128], strides = [1, 1]} : vector<32x384xf32> to vector<32x128xf32>
    %45 = vector.shape_cast %44 : vector<32x128xf32> to vector<2x16x128xf32>
    %46 = vector.extract_strided_slice %43 {offsets = [0, 128], sizes = [32, 128], strides = [1, 1]} : vector<32x384xf32> to vector<32x128xf32>
    %47 = vector.shape_cast %46 : vector<32x128xf32> to vector<2x16x128xf32>
    %48 = vector.extract_strided_slice %43 {offsets = [0, 256], sizes = [32, 128], strides = [1, 1]} : vector<32x384xf32> to vector<32x128xf32>
    %49 = vector.shape_cast %48 : vector<32x128xf32> to vector<2x16x128xf32>
    %c0_21 = arith.constant 0 : index
    %c0_22 = arith.constant 0 : index
    %50 = vector.load %arg18[%c0_21, %c0_22] : memref<16x128xf32, #tpu.memory_space<vmem>>, vector<16x128xf32>
    %51 = vector.shape_cast %50 : vector<16x128xf32> to vector<1x16x128xf32>
    %c0_23 = arith.constant 0 : index
    %c0_24 = arith.constant 0 : index
    %52 = vector.load %arg19[%c0_23, %c0_24] : memref<16x128xf32, #tpu.memory_space<vmem>>, vector<16x128xf32>
    %53 = vector.shape_cast %52 : vector<16x128xf32> to vector<1x16x128xf32>
    %54 = vector.broadcast %51 : vector<1x16x128xf32> to vector<2x16x128xf32>
    %55 = arith.mulf %45, %54 : vector<2x16x128xf32>
    %56 = vector.broadcast %53 : vector<1x16x128xf32> to vector<2x16x128xf32>
    %57 = arith.mulf %47, %56 : vector<2x16x128xf32>
    %58 = arith.addf %55, %57 : vector<2x16x128xf32>
    %59 = vector.extract_strided_slice %11 {offsets = [0, 0, 0], sizes = [2, 1, 128], strides = [1, 1, 1]} : vector<2x16x128xf32> to vector<2x1x128xf32>
    %60 = vector.shape_cast %59 : vector<2x1x128xf32> to vector<2x128xf32>
    %cst_25 = arith.constant dense<0.000000e+00> : vector<2xf32>
    %61 = vector.multi_reduction <add>, %60, %cst_25 [1] : vector<2x128xf32> to vector<2xf32>
    %62 = vector.shape_cast %61 : vector<2xf32> to vector<2x1xf32>
    %cst_26 = arith.constant 1.280000e+02 : f32
    %63 = vector.broadcast %cst_26 : f32 to vector<2x1xf32>
    %64 = arith.divf %62, %63 : vector<2x1xf32>
    %65 = vector.broadcast %64 : vector<2x1xf32> to vector<2x128xf32>
    %66 = arith.subf %60, %65 : vector<2x128xf32>
    %67 = arith.mulf %66, %66 : vector<2x128xf32>
    %cst_27 = arith.constant dense<0.000000e+00> : vector<2xf32>
    %68 = vector.multi_reduction <add>, %67, %cst_27 [1] : vector<2x128xf32> to vector<2xf32>
    %69 = vector.shape_cast %68 : vector<2xf32> to vector<2x1xf32>
    %cst_28 = arith.constant 1.280000e+02 : f32
    %70 = vector.broadcast %cst_28 : f32 to vector<2x1xf32>
    %71 = arith.divf %69, %70 : vector<2x1xf32>
    %cst_29 = arith.constant 9.99999974E-6 : f32
    %72 = vector.broadcast %cst_29 : f32 to vector<2x1xf32>
    %73 = arith.addf %71, %72 : vector<2x1xf32>
    %74 = math.rsqrt %73 : vector<2x1xf32>
    %75 = vector.broadcast %74 : vector<2x1xf32> to vector<2x128xf32>
    %76 = arith.mulf %66, %75 : vector<2x128xf32>
    %77 = vector.broadcast %16 : vector<1x128xf32> to vector<2x128xf32>
    %78 = arith.mulf %76, %77 : vector<2x128xf32>
    %79 = vector.broadcast %17 : vector<1x128xf32> to vector<2x128xf32>
    %80 = arith.addf %78, %79 : vector<2x128xf32>
    %c0_30 = arith.constant 0 : index
    %c0_31 = arith.constant 0 : index
    %81 = vector.load %arg4[%c0_30, %c0_31] : memref<128x128xf32, #tpu.memory_space<vmem>>, vector<128x128xf32>
    %cst_32 = arith.constant dense<0.000000e+00> : vector<2x128xf32>
    %82 = tpu.matmul %80, %81, %cst_32 {dimension_numbers = #tpu.dot_dimension_numbers<[1], [0], [0], [1], [0, 0, 1, 1], [], []>} : vector<2x128xf32>, vector<128x128xf32>, vector<2x128xf32> -> vector<2x128xf32>
    %c0_33 = arith.constant 0 : index
    %c0_34 = arith.constant 0 : index
    %83 = vector.load %arg5[%c0_33, %c0_34] : memref<1x128xf32, #tpu.memory_space<vmem>>, vector<1x128xf32>
    %84 = vector.broadcast %83 : vector<1x128xf32> to vector<2x128xf32>
    %85 = arith.addf %82, %84 : vector<2x128xf32>
    %c0_35 = arith.constant 0 : index
    %c0_36 = arith.constant 0 : index
    %86 = vector.load %arg20[%c0_35, %c0_36] : memref<4x128xf32, #tpu.memory_space<vmem>>, vector<4x128xf32>
    %87 = vector.shape_cast %86 : vector<4x128xf32> to vector<1x4x128xf32>
    %88 = vector.shape_cast %85 : vector<2x128xf32> to vector<2x1x128xf32>
    %89 = vector.broadcast %88 : vector<2x1x128xf32> to vector<2x4x128xf32>
    %90 = vector.broadcast %87 : vector<1x4x128xf32> to vector<2x4x128xf32>
    %91 = arith.mulf %89, %90 : vector<2x4x128xf32>
    "tpu.trace_start"() <{level = 10 : i32, message = "bhd,bkd->bhk"}> : () -> ()
    %cst_37 = arith.constant dense<0.000000e+00> : vector<2x4x16xf32>
    %92 = tpu.matmul %91, %58, %cst_37 {dimension_numbers = #tpu.dot_dimension_numbers<[2], [2], [1], [1], [0, 0, 0, 1, 1, 1], [0], [0]>} : vector<2x4x128xf32>, vector<2x16x128xf32>, vector<2x4x16xf32> -> vector<2x4x16xf32>
    %cst_38 = arith.constant -1.000000e+30 : f32
    "tpu.trace_stop"() : () -> ()
    %93 = vector.shape_cast %15 : vector<2x1x16xi1> to vector<2x1x16xi1>
    %94 = vector.broadcast %93 : vector<2x1x16xi1> to vector<2x4x16xi1>
    %95 = vector.broadcast %cst_38 : f32 to vector<2x4x16xf32>
    %96 = arith.select %94, %95, %92 : vector<2x4x16xi1>, vector<2x4x16xf32>
    %cst_39 = arith.constant dense<0xFF800000> : vector<2x4xf32>
    %97 = vector.multi_reduction <maximumf>, %96, %cst_39 [2] : vector<2x4x16xf32> to vector<2x4xf32>
    %98 = vector.shape_cast %97 : vector<2x4xf32> to vector<2x4x1xf32>
    %99 = vector.broadcast %98 : vector<2x4x1xf32> to vector<2x4x16xf32>
    %100 = arith.subf %96, %99 : vector<2x4x16xf32>
    %101 = math.exp %100 : vector<2x4x16xf32>
    %cst_40 = arith.constant dense<0.000000e+00> : vector<2x4xf32>
    %102 = vector.multi_reduction <add>, %101, %cst_40 [2] : vector<2x4x16xf32> to vector<2x4xf32>
    %103 = vector.shape_cast %102 : vector<2x4xf32> to vector<2x4x1xf32>
    %104 = vector.broadcast %103 : vector<2x4x1xf32> to vector<2x4x16xf32>
    %105 = arith.divf %101, %104 : vector<2x4x16xf32>
    "tpu.trace_start"() <{level = 10 : i32, message = "bhk,bkd->bhd"}> : () -> ()
    %cst_41 = arith.constant dense<0.000000e+00> : vector<2x4x128xf32>
    %106 = tpu.matmul %105, %49, %cst_41 {dimension_numbers = #tpu.dot_dimension_numbers<[2], [1], [1], [2], [0, 0, 0, 1, 1, 2], [0], [0]>} : vector<2x4x16xf32>, vector<2x16x128xf32>, vector<2x4x128xf32> -> vector<2x4x128xf32>
    "tpu.trace_stop"() : () -> ()
    %107 = vector.broadcast %87 : vector<1x4x128xf32> to vector<2x4x128xf32>
    %108 = arith.mulf %106, %107 : vector<2x4x128xf32>
    %cst_42 = arith.constant dense<0.000000e+00> : vector<2x128xf32>
    %109 = vector.multi_reduction <add>, %108, %cst_42 [1] : vector<2x4x128xf32> to vector<2x128xf32>
    %110 = vector.shape_cast %109 : vector<2x128xf32> to vector<2x1x128xf32>
    %111 = vector.shape_cast %110 : vector<2x1x128xf32> to vector<2x128xf32>
    %c0_43 = arith.constant 0 : index
    %c0_44 = arith.constant 0 : index
    %112 = vector.load %arg8[%c0_43, %c0_44] : memref<128x128xf32, #tpu.memory_space<vmem>>, vector<128x128xf32>
    %cst_45 = arith.constant dense<0.000000e+00> : vector<2x128xf32>
    %113 = tpu.matmul %111, %112, %cst_45 {dimension_numbers = #tpu.dot_dimension_numbers<[1], [0], [0], [1], [0, 0, 1, 1], [], []>} : vector<2x128xf32>, vector<128x128xf32>, vector<2x128xf32> -> vector<2x128xf32>
    %c0_46 = arith.constant 0 : index
    %c0_47 = arith.constant 0 : index
    %114 = vector.load %arg9[%c0_46, %c0_47] : memref<1x128xf32, #tpu.memory_space<vmem>>, vector<1x128xf32>
    %115 = vector.broadcast %114 : vector<1x128xf32> to vector<2x128xf32>
    %116 = arith.addf %113, %115 : vector<2x128xf32>
    %117 = arith.addf %60, %116 : vector<2x128xf32>
    %c0_48 = arith.constant 0 : index
    %c0_49 = arith.constant 0 : index
    %118 = vector.load %arg10[%c0_48, %c0_49] : memref<1x128xf32, #tpu.memory_space<vmem>>, vector<1x128xf32>
    %c0_50 = arith.constant 0 : index
    %c0_51 = arith.constant 0 : index
    %119 = vector.load %arg11[%c0_50, %c0_51] : memref<1x128xf32, #tpu.memory_space<vmem>>, vector<1x128xf32>
    %cst_52 = arith.constant dense<0.000000e+00> : vector<2xf32>
    %120 = vector.multi_reduction <add>, %117, %cst_52 [1] : vector<2x128xf32> to vector<2xf32>
    %121 = vector.shape_cast %120 : vector<2xf32> to vector<2x1xf32>
    %cst_53 = arith.constant 1.280000e+02 : f32
    %122 = vector.broadcast %cst_53 : f32 to vector<2x1xf32>
    %123 = arith.divf %121, %122 : vector<2x1xf32>
    %124 = vector.broadcast %123 : vector<2x1xf32> to vector<2x128xf32>
    %125 = arith.subf %117, %124 : vector<2x128xf32>
    %126 = arith.mulf %125, %125 : vector<2x128xf32>
    %cst_54 = arith.constant dense<0.000000e+00> : vector<2xf32>
    %127 = vector.multi_reduction <add>, %126, %cst_54 [1] : vector<2x128xf32> to vector<2xf32>
    %128 = vector.shape_cast %127 : vector<2xf32> to vector<2x1xf32>
    %cst_55 = arith.constant 1.280000e+02 : f32
    %129 = vector.broadcast %cst_55 : f32 to vector<2x1xf32>
    %130 = arith.divf %128, %129 : vector<2x1xf32>
    %cst_56 = arith.constant 9.99999974E-6 : f32
    %131 = vector.broadcast %cst_56 : f32 to vector<2x1xf32>
    %132 = arith.addf %130, %131 : vector<2x1xf32>
    %133 = math.rsqrt %132 : vector<2x1xf32>
    %134 = vector.broadcast %133 : vector<2x1xf32> to vector<2x128xf32>
    %135 = arith.mulf %125, %134 : vector<2x128xf32>
    %136 = vector.broadcast %118 : vector<1x128xf32> to vector<2x128xf32>
    %137 = arith.mulf %135, %136 : vector<2x128xf32>
    %138 = vector.broadcast %119 : vector<1x128xf32> to vector<2x128xf32>
    %139 = arith.addf %137, %138 : vector<2x128xf32>
    %c0_57 = arith.constant 0 : index
    %c0_58 = arith.constant 0 : index
    %140 = vector.load %arg12[%c0_57, %c0_58] : memref<128x512xf32, #tpu.memory_space<vmem>>, vector<128x512xf32>
    %cst_59 = arith.constant dense<0.000000e+00> : vector<2x512xf32>
    %141 = tpu.matmul %139, %140, %cst_59 {dimension_numbers = #tpu.dot_dimension_numbers<[1], [0], [0], [1], [0, 0, 1, 1], [], []>} : vector<2x128xf32>, vector<128x512xf32>, vector<2x512xf32> -> vector<2x512xf32>
    %c0_60 = arith.constant 0 : index
    %c0_61 = arith.constant 0 : index
    %142 = vector.load %arg13[%c0_60, %c0_61] : memref<1x512xf32, #tpu.memory_space<vmem>>, vector<1x512xf32>
    %143 = vector.broadcast %142 : vector<1x512xf32> to vector<2x512xf32>
    %144 = arith.addf %141, %143 : vector<2x512xf32>
    %cst_62 = arith.constant 5.000000e-01 : f32
    %145 = vector.broadcast %cst_62 : f32 to vector<2x512xf32>
    %146 = arith.mulf %145, %144 : vector<2x512xf32>
    %cst_63 = arith.constant 0.707106769 : f32
    %147 = vector.broadcast %cst_63 : f32 to vector<2x512xf32>
    %148 = arith.mulf %144, %147 : vector<2x512xf32>
    %cst_64 = arith.constant 0.000000e+00 : f32
    %149 = vector.broadcast %cst_64 : f32 to vector<2x512xf32>
    %150 = arith.cmpf oge, %148, %149 : vector<2x512xf32>
    %cst_65 = arith.constant 1.000000e+00 : f32
    %cst_66 = arith.constant -1.000000e+00 : f32
    %151 = vector.broadcast %cst_65 : f32 to vector<2x512xf32>
    %152 = vector.broadcast %cst_66 : f32 to vector<2x512xf32>
    %153 = arith.select %150, %151, %152 : vector<2x512xi1>, vector<2x512xf32>
    %154 = math.absf %148 : vector<2x512xf32>
    %cst_67 = arith.constant 0.327591091 : f32
    %155 = vector.broadcast %cst_67 : f32 to vector<2x512xf32>
    %156 = arith.mulf %155, %154 : vector<2x512xf32>
    %cst_68 = arith.constant 1.000000e+00 : f32
    %157 = vector.broadcast %cst_68 : f32 to vector<2x512xf32>
    %158 = arith.addf %157, %156 : vector<2x512xf32>
    %cst_69 = arith.constant 1.000000e+00 : f32
    %159 = vector.broadcast %cst_69 : f32 to vector<2x512xf32>
    %160 = arith.divf %159, %158 : vector<2x512xf32>
    %cst_70 = arith.constant 1.06140542 : f32
    %161 = vector.broadcast %cst_70 : f32 to vector<2x512xf32>
    %162 = arith.mulf %161, %160 : vector<2x512xf32>
    %cst_71 = arith.constant -1.45315206 : f32
    %163 = vector.broadcast %cst_71 : f32 to vector<2x512xf32>
    %164 = arith.addf %162, %163 : vector<2x512xf32>
    %165 = arith.mulf %164, %160 : vector<2x512xf32>
    %cst_72 = arith.constant 1.42141378 : f32
    %166 = vector.broadcast %cst_72 : f32 to vector<2x512xf32>
    %167 = arith.addf %165, %166 : vector<2x512xf32>
    %168 = arith.mulf %167, %160 : vector<2x512xf32>
    %cst_73 = arith.constant -0.284496725 : f32
    %169 = vector.broadcast %cst_73 : f32 to vector<2x512xf32>
    %170 = arith.addf %168, %169 : vector<2x512xf32>
    %171 = arith.mulf %170, %160 : vector<2x512xf32>
    %cst_74 = arith.constant 0.254829586 : f32
    %172 = vector.broadcast %cst_74 : f32 to vector<2x512xf32>
    %173 = arith.addf %171, %172 : vector<2x512xf32>
    %174 = arith.mulf %173, %160 : vector<2x512xf32>
    %cst_75 = arith.constant 0.000000e+00 : f32
    %175 = vector.broadcast %cst_75 : f32 to vector<2x512xf32>
    %176 = arith.subf %175, %154 : vector<2x512xf32>
    %177 = arith.mulf %176, %154 : vector<2x512xf32>
    %178 = math.exp %177 : vector<2x512xf32>
    %179 = arith.mulf %174, %178 : vector<2x512xf32>
    %cst_76 = arith.constant 1.000000e+00 : f32
    %180 = vector.broadcast %cst_76 : f32 to vector<2x512xf32>
    %181 = arith.subf %180, %179 : vector<2x512xf32>
    %182 = arith.mulf %153, %181 : vector<2x512xf32>
    %cst_77 = arith.constant 1.000000e+00 : f32
    %183 = vector.broadcast %cst_77 : f32 to vector<2x512xf32>
    %184 = arith.addf %183, %182 : vector<2x512xf32>
    %185 = arith.mulf %146, %184 : vector<2x512xf32>
    %c0_78 = arith.constant 0 : index
    %c0_79 = arith.constant 0 : index
    %186 = vector.load %arg14[%c0_78, %c0_79] : memref<512x128xf32, #tpu.memory_space<vmem>>, vector<512x128xf32>
    %cst_80 = arith.constant dense<0.000000e+00> : vector<2x128xf32>
    %187 = tpu.matmul %185, %186, %cst_80 {dimension_numbers = #tpu.dot_dimension_numbers<[1], [0], [0], [1], [0, 0, 1, 1], [], []>} : vector<2x512xf32>, vector<512x128xf32>, vector<2x128xf32> -> vector<2x128xf32>
    %c0_81 = arith.constant 0 : index
    %c0_82 = arith.constant 0 : index
    %188 = vector.load %arg15[%c0_81, %c0_82] : memref<1x128xf32, #tpu.memory_space<vmem>>, vector<1x128xf32>
    %189 = vector.broadcast %188 : vector<1x128xf32> to vector<2x128xf32>
    %190 = arith.addf %187, %189 : vector<2x128xf32>
    %191 = arith.addf %117, %190 : vector<2x128xf32>
    %c0_83 = arith.constant 0 : index
    %c0_84 = arith.constant 0 : index
    %192 = vector.load %arg16[%c0_83, %c0_84] : memref<1x128xf32, #tpu.memory_space<vmem>>, vector<1x128xf32>
    %c0_85 = arith.constant 0 : index
    %c0_86 = arith.constant 0 : index
    %193 = vector.load %arg17[%c0_85, %c0_86] : memref<1x128xf32, #tpu.memory_space<vmem>>, vector<1x128xf32>
    %cst_87 = arith.constant dense<0.000000e+00> : vector<2xf32>
    %194 = vector.multi_reduction <add>, %191, %cst_87 [1] : vector<2x128xf32> to vector<2xf32>
    %195 = vector.shape_cast %194 : vector<2xf32> to vector<2x1xf32>
    %cst_88 = arith.constant 1.280000e+02 : f32
    %196 = vector.broadcast %cst_88 : f32 to vector<2x1xf32>
    %197 = arith.divf %195, %196 : vector<2x1xf32>
    %198 = vector.broadcast %197 : vector<2x1xf32> to vector<2x128xf32>
    %199 = arith.subf %191, %198 : vector<2x128xf32>
    %200 = arith.mulf %199, %199 : vector<2x128xf32>
    %cst_89 = arith.constant dense<0.000000e+00> : vector<2xf32>
    %201 = vector.multi_reduction <add>, %200, %cst_89 [1] : vector<2x128xf32> to vector<2xf32>
    %202 = vector.shape_cast %201 : vector<2xf32> to vector<2x1xf32>
    %cst_90 = arith.constant 1.280000e+02 : f32
    %203 = vector.broadcast %cst_90 : f32 to vector<2x1xf32>
    %204 = arith.divf %202, %203 : vector<2x1xf32>
    %cst_91 = arith.constant 9.99999974E-6 : f32
    %205 = vector.broadcast %cst_91 : f32 to vector<2x1xf32>
    %206 = arith.addf %204, %205 : vector<2x1xf32>
    %207 = math.rsqrt %206 : vector<2x1xf32>
    %208 = vector.broadcast %207 : vector<2x1xf32> to vector<2x128xf32>
    %209 = arith.mulf %199, %208 : vector<2x128xf32>
    %210 = vector.broadcast %192 : vector<1x128xf32> to vector<2x128xf32>
    %211 = arith.mulf %209, %210 : vector<2x128xf32>
    %212 = vector.broadcast %193 : vector<1x128xf32> to vector<2x128xf32>
    %213 = arith.addf %211, %212 : vector<2x128xf32>
    %214 = vector.shape_cast %213 : vector<2x128xf32> to vector<2x1x128xf32>
    %c0_92 = arith.constant 0 : index
    %c0_93 = arith.constant 0 : index
    %c0_94 = arith.constant 0 : index
    %215 = vector.load %arg21[%c0_92, %c0_93, %c0_94] : memref<2x1x128xf32, #tpu.memory_space<vmem>>, vector<2x1x128xf32>
    tpu.vector_store %arg21[%c0_92, %c0_93, %c0_94], %214 {strides = array<i32>} : memref<2x1x128xf32, #tpu.memory_space<vmem>>, vector<2x1x128xf32>,
    return
  }
  func.func @transform_0(%arg0: i32) -> (i32, i32, i32) {
    %c0_i32 = arith.constant 0 : i32
    %c0_i32_0 = arith.constant 0 : i32
    %c0_i32_1 = arith.constant 0 : i32
    return %arg0, %c0_i32, %c0_i32_0 : i32, i32, i32
  }
  func.func @transform_1(%arg0: i32) -> (i32, i32) {
    %c0_i32 = arith.constant 0 : i32
    %c0_i32_0 = arith.constant 0 : i32
    %c0_i32_1 = arith.constant 0 : i32
    return %c0_i32, %c0_i32_0 : i32, i32
  }
  func.func @transform_2(%arg0: i32) -> (i32, i32) {
    %c0_i32 = arith.constant 0 : i32
    %c0_i32_0 = arith.constant 0 : i32
    %c0_i32_1 = arith.constant 0 : i32
    return %c0_i32, %c0_i32_0 : i32, i32
  }
  func.func @transform_3(%arg0: i32) -> (i32, i32) {
    %c0_i32 = arith.constant 0 : i32
    %c0_i32_0 = arith.constant 0 : i32
    %c0_i32_1 = arith.constant 0 : i32
    return %c0_i32, %c0_i32_0 : i32, i32
  }
  func.func @transform_4(%arg0: i32) -> (i32, i32) {
    %c0_i32 = arith.constant 0 : i32
    %c0_i32_0 = arith.constant 0 : i32
    %c0_i32_1 = arith.constant 0 : i32
    return %c0_i32, %c0_i32_0 : i32, i32
  }
  func.func @transform_5(%arg0: i32) -> (i32, i32) {
    %c0_i32 = arith.constant 0 : i32
    %c0_i32_0 = arith.constant 0 : i32
    %c0_i32_1 = arith.constant 0 : i32
    return %c0_i32, %c0_i32_0 : i32, i32
  }
  func.func @transform_6(%arg0: i32) -> (i32, i32) {
    %c0_i32 = arith.constant 0 : i32
    %c0_i32_0 = arith.constant 0 : i32
    %c0_i32_1 = arith.constant 0 : i32
    return %c0_i32, %c0_i32_0 : i32, i32
  }
  func.func @transform_7(%arg0: i32) -> (i32, i32) {
    %c0_i32 = arith.constant 0 : i32
    %c0_i32_0 = arith.constant 0 : i32
    %c0_i32_1 = arith.constant 0 : i32
    return %c0_i32, %c0_i32_0 : i32, i32
  }
  func.func @transform_8(%arg0: i32) -> (i32, i32) {
    %c0_i32 = arith.constant 0 : i32
    %c0_i32_0 = arith.constant 0 : i32
    %c0_i32_1 = arith.constant 0 : i32
    return %c0_i32, %c0_i32_0 : i32, i32
  }
  func.func @transform_9(%arg0: i32) -> (i32, i32) {
    %c0_i32 = arith.constant 0 : i32
    %c0_i32_0 = arith.constant 0 : i32
    %c0_i32_1 = arith.constant 0 : i32
    return %c0_i32, %c0_i32_0 : i32, i32
  }
  func.func @transform_10(%arg0: i32) -> (i32, i32) {
    %c0_i32 = arith.constant 0 : i32
    %c0_i32_0 = arith.constant 0 : i32
    %c0_i32_1 = arith.constant 0 : i32
    return %c0_i32, %c0_i32_0 : i32, i32
  }
  func.func @transform_11(%arg0: i32) -> (i32, i32) {
    %c0_i32 = arith.constant 0 : i32
    %c0_i32_0 = arith.constant 0 : i32
    %c0_i32_1 = arith.constant 0 : i32
    return %c0_i32, %c0_i32_0 : i32, i32
  }
  func.func @transform_12(%arg0: i32) -> (i32, i32) {
    %c0_i32 = arith.constant 0 : i32
    %c0_i32_0 = arith.constant 0 : i32
    %c0_i32_1 = arith.constant 0 : i32
    return %c0_i32, %c0_i32_0 : i32, i32
  }
  func.func @transform_13(%arg0: i32) -> (i32, i32) {
    %c0_i32 = arith.constant 0 : i32
    %c0_i32_0 = arith.constant 0 : i32
    %c0_i32_1 = arith.constant 0 : i32
    return %c0_i32, %c0_i32_0 : i32, i32
  }
  func.func @transform_14(%arg0: i32) -> (i32, i32) {
    %c0_i32 = arith.constant 0 : i32
    %c0_i32_0 = arith.constant 0 : i32
    %c0_i32_1 = arith.constant 0 : i32
    return %c0_i32, %c0_i32_0 : i32, i32
  }
  func.func @transform_15(%arg0: i32) -> (i32, i32) {
    %c0_i32 = arith.constant 0 : i32
    %c0_i32_0 = arith.constant 0 : i32
    %c0_i32_1 = arith.constant 0 : i32
    return %c0_i32, %c0_i32_0 : i32, i32
  }
  func.func @transform_16(%arg0: i32) -> (i32, i32) {
    %c0_i32 = arith.constant 0 : i32
    %c0_i32_0 = arith.constant 0 : i32
    %c0_i32_1 = arith.constant 0 : i32
    return %c0_i32, %c0_i32_0 : i32, i32
  }
  func.func @transform_17(%arg0: i32) -> (i32, i32) {
    %c0_i32 = arith.constant 0 : i32
    %c0_i32_0 = arith.constant 0 : i32
    %c0_i32_1 = arith.constant 0 : i32
    return %c0_i32, %c0_i32_0 : i32, i32
  }
  func.func @transform_18(%arg0: i32) -> (i32, i32) {
    %c0_i32 = arith.constant 0 : i32
    %c0_i32_0 = arith.constant 0 : i32
    %c0_i32_1 = arith.constant 0 : i32
    return %c0_i32, %c0_i32_0 : i32, i32
  }
  func.func @transform_19(%arg0: i32) -> (i32, i32) {
    %c0_i32 = arith.constant 0 : i32
    %c0_i32_0 = arith.constant 0 : i32
    %c0_i32_1 = arith.constant 0 : i32
    return %c0_i32, %c0_i32_0 : i32, i32
  }
  func.func @transform_20(%arg0: i32) -> (i32, i32, i32) {
    %c0_i32 = arith.constant 0 : i32
    %c0_i32_0 = arith.constant 0 : i32
    %c0_i32_1 = arith.constant 0 : i32
    return %arg0, %c0_i32, %c0_i32_0 : i32, i32, i32
  }
}

</mosaic_0001>

<llo_original>
// kernel: tpu_custom_call.1
$region0: #{tpu_custom_call.1}
  #allocation0 [shape = 'u32[]', space=smem, size = 0x4, offset = 0x4, fixed_abs, tag = 'smem constant byte address 0x4 - core index']
  #allocation1 [shape = 'u32[144,128]{1,0:T(1,128)}', space=vmem, size = 0x12000, scoped, tag = 'internal scratch']
  %s0 = inlined_call_operand.hbm [shape: f32[4,16,128], index: 0, kind: input, shape index: {}]
  %s1 = inlined_call_operand.vmem [shape: f32[1,128], index: 1, kind: input, shape index: {}]
  %s2 = inlined_call_operand.hbm [shape: f32[1,128], index: 2, kind: input, shape index: {}]
  %s3 = inlined_call_operand.hbm [shape: f32[128,128], index: 3, kind: input, shape index: {}]
  %s4 = inlined_call_operand.hbm [shape: f32[1,128], index: 4, kind: input, shape index: {}]
  %s5 = inlined_call_operand.hbm [shape: f32[128,384], index: 5, kind: input, shape index: {}]
  %s6 = inlined_call_operand.hbm [shape: f32[1,384], index: 6, kind: input, shape index: {}]
  %s7 = inlined_call_operand.hbm [shape: f32[128,128], index: 7, kind: input, shape index: {}]
  %s8 = inlined_call_operand.hbm [shape: f32[1,128], index: 8, kind: input, shape index: {}]
  %s9 = inlined_call_operand.hbm [shape: f32[1,128], index: 9, kind: input, shape index: {}]
  %s10 = inlined_call_operand.hbm [shape: f32[1,128], index: 10, kind: input, shape index: {}]
  %s11 = inlined_call_operand.hbm [shape: f32[128,512], index: 11, kind: input, shape index: {}]
  %s12 = inlined_call_operand.vmem [shape: f32[1,512], index: 12, kind: input, shape index: {}]
  %s13 = inlined_call_operand.hbm [shape: f32[512,128], index: 13, kind: input, shape index: {}]
  %s14 = inlined_call_operand.vmem [shape: f32[1,128], index: 14, kind: input, shape index: {}]
  %s15 = inlined_call_operand.vmem [shape: f32[1,128], index: 15, kind: input, shape index: {}]
  %s16 = inlined_call_operand.vmem [shape: f32[1,128], index: 16, kind: input, shape index: {}]
  %s17 = inlined_call_operand.vmem [shape: f32[16,128], index: 17, kind: input, shape index: {}]
  %s18 = inlined_call_operand.vmem [shape: f32[16,128], index: 18, kind: input, shape index: {}]
  %s19 = inlined_call_operand.vmem [shape: f32[4,128], index: 19, kind: input, shape index: {}]
  %s20 = inlined_call_operand.hbm [shape: f32[4,1,128], index: 20, kind: output, shape index: {}]
  %s21 = sld [smem:[#allocation0]]
  $region161: #{tpu_custom_call.1} parent=0
    _
  %s23 = ssub.s32 1, %s21
  %s24 = scalar_select 0, %s23, %s21
  $region1: #{tpu_custom_call.1} parent=0
    #allocation2 [shape = 'u8[32768]{0}', space=vmem, size = 0x8000, scoped, tag = 'input window, operand 0']
    #allocation3 [shape = 's32[2]{0}', space=sflag, size = 0x8, scoped, tag = 'scoped memory for tpu_custom_call.1']
    #allocation4 [shape = 's32[2]{0}', space=sflag, size = 0x8, scoped, tag = 'scoped memory for tpu_custom_call.1']
    #allocation5 [shape = 'u8[512]{0}', space=vmem, size = 0x400, scoped, tag = 'input window, operand 2, single buffered']
    #allocation6 [shape = 's32[1]{0}', space=sflag, size = 0x4, scoped, tag = 'scoped memory for tpu_custom_call.1']
    #allocation7 [shape = 'u8[65536]{0}', space=vmem, size = 0x10000, scoped, tag = 'input window, operand 3, single buffered']
    #allocation8 [shape = 'u8[512]{0}', space=vmem, size = 0x400, scoped, tag = 'input window, operand 4, single buffered']
    #allocation9 [shape = 's32[1]{0}', space=sflag, size = 0x4, scoped, tag = 'scoped memory for tpu_custom_call.1']
    #allocation10 [shape = 'u8[196608]{0}', space=vmem, size = 0x30000, scoped, tag = 'input window, operand 5, single buffered']
    #allocation11 [shape = 'u8[1536]{0}', space=vmem, size = 0x800, scoped, tag = 'input window, operand 6, single buffered']
    #allocation12 [shape = 's32[1]{0}', space=sflag, size = 0x4, scoped, tag = 'scoped memory for tpu_custom_call.1']
    #allocation13 [shape = 'u8[65536]{0}', space=vmem, size = 0x10000, scoped, tag = 'input window, operand 7, single buffered']
    #allocation14 [shape = 'u8[512]{0}', space=vmem, size = 0x400, scoped, tag = 'input window, operand 8, single buffered']
    #allocation15 [shape = 's32[1]{0}', space=sflag, size = 0x4, scoped, tag = 'scoped memory for tpu_custom_call.1']
    #allocation16 [shape = 'u8[512]{0}', space=vmem, size = 0x400, scoped, tag = 'input window, operand 9, single buffered']
    #allocation17 [shape = 'u8[512]{0}', space=vmem, size = 0x400, scoped, tag = 'input window, operand 10, single buffered']
    #allocation18 [shape = 's32[1]{0}', space=sflag, size = 0x4, scoped, tag = 'scoped memory for tpu_custom_call.1']
    #allocation19 [shape = 'u8[262144]{0}', space=vmem, size = 0x40000, scoped, tag = 'input window, operand 11, single buffered']
    #allocation20 [shape = 'u8[262144]{0}', space=vmem, size = 0x40000, scoped, tag = 'input window, operand 13, single buffered']
    #allocation21 [shape = 's32[1]{0}', space=sflag, size = 0x4, scoped, tag = 'scoped memory for tpu_custom_call.1']
    #allocation22 [shape = 'u8[2048]{0}', space=vmem, size = 0x800, scoped, tag = 'output window, operand 0']
    %25 = vsyncpa [#allocation3], 0
    %s26 = scalar_lea.sflag [#allocation3], 1
    %27 = vsyncpa %s26, 0
    %28 = vsyncpa [#allocation6], 0
    %29 = vsyncpa [#allocation9], 0
    %30 = vsyncpa [#allocation12], 0
    %31 = vsyncpa [#allocation15], 0
    %32 = vsyncpa [#allocation18], 0
    %33 = vsyncpa [#allocation21], 0
    %34 = vsyncpa [#allocation4], 0
    %s35 = scalar_lea.sflag [#allocation4], 1
    %36 = vsyncpa %s35, 0
    loop: start=0, step=1, limit=4
    $region2: #{tpu_custom_call.1} parent=1 // loop_pre_header
      _
    $region3: #{tpu_custom_call.1} parent=1 // loop_header
      %s38 = sphi 0, %s42
      %p39 = scmp.ge.s32.totalorder %s38, 4
      %s48 = sphi 0, %s50
      %s51 = sphi 0, %s48
      %s52 = sphi 0, %s51
      %s68 = sphi 0, %s52
      %s72 = sphi 0, %s72
      %s74 = sphi 0, %s72
      %s75 = sphi 0, %s74
      %s89 = sphi 0, %s75
      %s93 = sphi 0, %s93
      %s95 = sphi 0, %s93
      %s96 = sphi 0, %s95
      %s110 = sphi 0, %s96
      %s114 = sphi 0, %s114
      %s116 = sphi 0, %s114
      %s117 = sphi 0, %s116
      %s131 = sphi 0, %s117
      %s135 = sphi 0, %s135
      %s137 = sphi 0, %s135
      %s138 = sphi 0, %s137
      %s152 = sphi 0, %s138
      %s156 = sphi 0, %s156
      %s158 = sphi 0, %s156
      %s159 = sphi 0, %s158
      %s173 = sphi 0, %s159
      %s177 = sphi 0, %s177
      %s179 = sphi 0, %s177
      %s180 = sphi 0, %s179
      %s194 = sphi 0, %s180
      %s198 = sphi 0, %s198
      %s200 = sphi 0, %s198
      %s201 = sphi 0, %s200
      %s215 = sphi 0, %s201
      %s219 = sphi 0, %s219
      %s221 = sphi 0, %s219
      %s222 = sphi 0, %s221
      %s236 = sphi 0, %s222
      %s240 = sphi 0, %s240
      %s242 = sphi 0, %s240
      %s243 = sphi 0, %s242
      %s257 = sphi 0, %s243
      %s261 = sphi 0, %s261
      %s263 = sphi 0, %s261
      %s264 = sphi 0, %s263
      %s278 = sphi 0, %s264
      %s282 = sphi 0, %s282
      %s284 = sphi 0, %s282
      %s285 = sphi 0, %s284
      %s299 = sphi 0, %s285
      %s303 = sphi 0, %s303
      %s305 = sphi 0, %s303
      %s306 = sphi 0, %s305
      %s320 = sphi 0, %s306
      %s324 = sphi 0, %s324
      %s326 = sphi 0, %s324
      %s327 = sphi 0, %s326
      %s341 = sphi 0, %s327
      %s345 = sphi 0, %s345
      %s347 = sphi 0, %s345
      %s348 = sphi 0, %s347
      %s362 = sphi 0, %s348
      %s366 = sphi 0, %s366
      %s368 = sphi 0, %s366
      %s369 = sphi 0, %s368
      %s383 = sphi 0, %s369
      %s387 = sphi 0, %s387
      %s389 = sphi 0, %s387
      %s390 = sphi 0, %s389
      %s404 = sphi 0, %s390
      %s408 = sphi 0, %s408
      %s410 = sphi 0, %s408
      %s411 = sphi 0, %s410
      %s425 = sphi 0, %s411
      %s429 = sphi 0, %s429
      %s431 = sphi 0, %s429
      %s432 = sphi 0, %s431
      %s446 = sphi 0, %s432
      %s450 = sphi 0, %s450
      %s452 = sphi 0, %s450
      %s453 = sphi 0, %s452
      %s467 = sphi 0, %s453
      %s473 = sphi 0, %s475
      %s476 = sphi 0, %s473
      %s477 = sphi 0, %s476
      %s493 = sphi 0, %s477
    $region4: #{tpu_custom_call.1} parent=1 // loop_header_branch
      %41 = sbr.rel (%p39) target = $region8
    $region5: #{tpu_custom_call.1} parent=1 // loop_body
      %s43 = ssub.s32 %s38, 1
      %s44 = ssub.s32 %s38, 2
      %s45 = sadd.s32 %s38, 1
      %s46 = ssub.s32 %s38, %s45
      %p47 = scmp.eq.s32.totalorder %s46, 0
      %s49 = sadd.s32 %s48, 1
      %s50 = scalar_select %p47, %s48, %s49
      %p53 = pneg %p47
      %p54 = scmp.eq.s32.totalorder %s38, 1
      %p55 = por %p53, %p54
      %p56 = scmp.ne.s32.totalorder %s48, %s51
      %p57 = scmp.eq.s32.totalorder %s38, 0
      %p58 = por %p56, %p57
      %p59 = scmp.ne.s32.totalorder %s48, %s51
      %p60 = scmp.eq.s32.totalorder %s43, 1
      %p61 = por %p59, %p60
      %p62 = scmp.ne.s32.totalorder %s51, %s52
      %p63 = scmp.eq.s32.totalorder %s43, 0
      %p64 = por %p62, %p63
      %p65 = scmp.ne.s32.totalorder %s51, %s52
      %p66 = scmp.eq.s32.totalorder %s44, 1
      %p67 = por %p65, %p66
      %p69 = scmp.ne.s32.totalorder %s52, %s68
      %p70 = scmp.eq.s32.totalorder %s44, 0
      %p71 = por %p69, %p70
      %s73 = sadd.s32 %s72, 1
      %p76 = scmp.eq.s32.totalorder %s38, 1
      %p77 = scmp.ne.s32.totalorder %s72, %s74
      %p78 = scmp.eq.s32.totalorder %s38, 0
      %p79 = por %p77, %p78
      %p80 = scmp.ne.s32.totalorder %s72, %s74
      %p81 = scmp.eq.s32.totalorder %s43, 1
      %p82 = por %p80, %p81
      %p83 = scmp.ne.s32.totalorder %s74, %s75
      %p84 = scmp.eq.s32.totalorder %s43, 0
      %p85 = por %p83, %p84
      %p86 = scmp.ne.s32.totalorder %s74, %s75
      %p87 = scmp.eq.s32.totalorder %s44, 1
      %p88 = por %p86, %p87
      %p90 = scmp.ne.s32.totalorder %s75, %s89
      %p91 = scmp.eq.s32.totalorder %s44, 0
      %p92 = por %p90, %p91
      %s94 = sadd.s32 %s93, 1
      %p97 = scmp.eq.s32.totalorder %s38, 1
      %p98 = scmp.ne.s32.totalorder %s93, %s95
      %p99 = scmp.eq.s32.totalorder %s38, 0
      %p100 = por %p98, %p99
      %p101 = scmp.ne.s32.totalorder %s93, %s95
      %p102 = scmp.eq.s32.totalorder %s43, 1
      %p103 = por %p101, %p102
      %p104 = scmp.ne.s32.totalorder %s95, %s96
      %p105 = scmp.eq.s32.totalorder %s43, 0
      %p106 = por %p104, %p105
      %p107 = scmp.ne.s32.totalorder %s95, %s96
      %p108 = scmp.eq.s32.totalorder %s44, 1
      %p109 = por %p107, %p108
      %p111 = scmp.ne.s32.totalorder %s96, %s110
      %p112 = scmp.eq.s32.totalorder %s44, 0
      %p113 = por %p111, %p112
      %s115 = sadd.s32 %s114, 1
      %p118 = scmp.eq.s32.totalorder %s38, 1
      %p119 = scmp.ne.s32.totalorder %s114, %s116
      %p120 = scmp.eq.s32.totalorder %s38, 0
      %p121 = por %p119, %p120
      %p122 = scmp.ne.s32.totalorder %s114, %s116
      %p123 = scmp.eq.s32.totalorder %s43, 1
      %p124 = por %p122, %p123
      %p125 = scmp.ne.s32.totalorder %s116, %s117
      %p126 = scmp.eq.s32.totalorder %s43, 0
      %p127 = por %p125, %p126
      %p128 = scmp.ne.s32.totalorder %s116, %s117
      %p129 = scmp.eq.s32.totalorder %s44, 1
      %p130 = por %p128, %p129
      %p132 = scmp.ne.s32.totalorder %s117, %s131
      %p133 = scmp.eq.s32.totalorder %s44, 0
      %p134 = por %p132, %p133
      %s136 = sadd.s32 %s135, 1
      %p139 = scmp.eq.s32.totalorder %s38, 1
      %p140 = scmp.ne.s32.totalorder %s135, %s137
      %p141 = scmp.eq.s32.totalorder %s38, 0
      %p142 = por %p140, %p141
      %p143 = scmp.ne.s32.totalorder %s135, %s137
      %p144 = scmp.eq.s32.totalorder %s43, 1
      %p145 = por %p143, %p144
      %p146 = scmp.ne.s32.totalorder %s137, %s138
      %p147 = scmp.eq.s32.totalorder %s43, 0
      %p148 = por %p146, %p147
      %p149 = scmp.ne.s32.totalorder %s137, %s138
      %p150 = scmp.eq.s32.totalorder %s44, 1
      %p151 = por %p149, %p150
      %p153 = scmp.ne.s32.totalorder %s138, %s152
      %p154 = scmp.eq.s32.totalorder %s44, 0
      %p155 = por %p153, %p154
      %s157 = sadd.s32 %s156, 1
      %p160 = scmp.eq.s32.totalorder %s38, 1
      %p161 = scmp.ne.s32.totalorder %s156, %s158
      %p162 = scmp.eq.s32.totalorder %s38, 0
      %p163 = por %p161, %p162
      %p164 = scmp.ne.s32.totalorder %s156, %s158
      %p165 = scmp.eq.s32.totalorder %s43, 1
      %p166 = por %p164, %p165
      %p167 = scmp.ne.s32.totalorder %s158, %s159
      %p168 = scmp.eq.s32.totalorder %s43, 0
      %p169 = por %p167, %p168
      %p170 = scmp.ne.s32.totalorder %s158, %s159
      %p171 = scmp.eq.s32.totalorder %s44, 1
      %p172 = por %p170, %p171
      %p174 = scmp.ne.s32.totalorder %s159, %s173
      %p175 = scmp.eq.s32.totalorder %s44, 0
      %p176 = por %p174, %p175
      %s178 = sadd.s32 %s177, 1
      %p181 = scmp.eq.s32.totalorder %s38, 1
      %p182 = scmp.ne.s32.totalorder %s177, %s179
      %p183 = scmp.eq.s32.totalorder %s38, 0
      %p184 = por %p182, %p183
      %p185 = scmp.ne.s32.totalorder %s177, %s179
      %p186 = scmp.eq.s32.totalorder %s43, 1
      %p187 = por %p185, %p186
      %p188 = scmp.ne.s32.totalorder %s179, %s180
      %p189 = scmp.eq.s32.totalorder %s43, 0
      %p190 = por %p188, %p189
      %p191 = scmp.ne.s32.totalorder %s179, %s180
      %p192 = scmp.eq.s32.totalorder %s44, 1
      %p193 = por %p191, %p192
      %p195 = scmp.ne.s32.totalorder %s180, %s194
      %p196 = scmp.eq.s32.totalorder %s44, 0
      %p197 = por %p195, %p196
      %s199 = sadd.s32 %s198, 1
      %p202 = scmp.eq.s32.totalorder %s38, 1
      %p203 = scmp.ne.s32.totalorder %s198, %s200
      %p204 = scmp.eq.s32.totalorder %s38, 0
      %p205 = por %p203, %p204
      %p206 = scmp.ne.s32.totalorder %s198, %s200
      %p207 = scmp.eq.s32.totalorder %s43, 1
      %p208 = por %p206, %p207
      %p209 = scmp.ne.s32.totalorder %s200, %s201
      %p210 = scmp.eq.s32.totalorder %s43, 0
      %p211 = por %p209, %p210
      %p212 = scmp.ne.s32.totalorder %s200, %s201
      %p213 = scmp.eq.s32.totalorder %s44, 1
      %p214 = por %p212, %p213
      %p216 = scmp.ne.s32.totalorder %s201, %s215
      %p217 = scmp.eq.s32.totalorder %s44, 0
      %p218 = por %p216, %p217
      %s220 = sadd.s32 %s219, 1
      %p223 = scmp.eq.s32.totalorder %s38, 1
      %p224 = scmp.ne.s32.totalorder %s219, %s221
      %p225 = scmp.eq.s32.totalorder %s38, 0
      %p226 = por %p224, %p225
      %p227 = scmp.ne.s32.totalorder %s219, %s221
      %p228 = scmp.eq.s32.totalorder %s43, 1
      %p229 = por %p227, %p228
      %p230 = scmp.ne.s32.totalorder %s221, %s222
      %p231 = scmp.eq.s32.totalorder %s43, 0
      %p232 = por %p230, %p231
      %p233 = scmp.ne.s32.totalorder %s221, %s222
      %p234 = scmp.eq.s32.totalorder %s44, 1
      %p235 = por %p233, %p234
      %p237 = scmp.ne.s32.totalorder %s222, %s236
      %p238 = scmp.eq.s32.totalorder %s44, 0
      %p239 = por %p237, %p238
      %s241 = sadd.s32 %s240, 1
      %p244 = scmp.eq.s32.totalorder %s38, 1
      %p245 = scmp.ne.s32.totalorder %s240, %s242
      %p246 = scmp.eq.s32.totalorder %s38, 0
      %p247 = por %p245, %p246
      %p248 = scmp.ne.s32.totalorder %s240, %s242
      %p249 = scmp.eq.s32.totalorder %s43, 1
      %p250 = por %p248, %p249
      %p251 = scmp.ne.s32.totalorder %s242, %s243
      %p252 = scmp.eq.s32.totalorder %s43, 0
      %p253 = por %p251, %p252
      %p254 = scmp.ne.s32.totalorder %s242, %s243
      %p255 = scmp.eq.s32.totalorder %s44, 1
      %p256 = por %p254, %p255
      %p258 = scmp.ne.s32.totalorder %s243, %s257
      %p259 = scmp.eq.s32.totalorder %s44, 0
      %p260 = por %p258, %p259
      %s262 = sadd.s32 %s261, 1
      %p265 = scmp.eq.s32.totalorder %s38, 1
      %p266 = scmp.ne.s32.totalorder %s261, %s263
      %p267 = scmp.eq.s32.totalorder %s38, 0
      %p268 = por %p266, %p267
      %p269 = scmp.ne.s32.totalorder %s261, %s263
      %p270 = scmp.eq.s32.totalorder %s43, 1
      %p271 = por %p269, %p270
      %p272 = scmp.ne.s32.totalorder %s263, %s264
      %p273 = scmp.eq.s32.totalorder %s43, 0
      %p274 = por %p272, %p273
      %p275 = scmp.ne.s32.totalorder %s263, %s264
      %p276 = scmp.eq.s32.totalorder %s44, 1
      %p277 = por %p275, %p276
      %p279 = scmp.ne.s32.totalorder %s264, %s278
      %p280 = scmp.eq.s32.totalorder %s44, 0
      %p281 = por %p279, %p280
      %s283 = sadd.s32 %s282, 1
      %p286 = scmp.eq.s32.totalorder %s38, 1
      %p287 = scmp.ne.s32.totalorder %s282, %s284
      %p288 = scmp.eq.s32.totalorder %s38, 0
      %p289 = por %p287, %p288
      %p290 = scmp.ne.s32.totalorder %s282, %s284
      %p291 = scmp.eq.s32.totalorder %s43, 1
      %p292 = por %p290, %p291
      %p293 = scmp.ne.s32.totalorder %s284, %s285
      %p294 = scmp.eq.s32.totalorder %s43, 0
      %p295 = por %p293, %p294
      %p296 = scmp.ne.s32.totalorder %s284, %s285
      %p297 = scmp.eq.s32.totalorder %s44, 1
      %p298 = por %p296, %p297
      %p300 = scmp.ne.s32.totalorder %s285, %s299
      %p301 = scmp.eq.s32.totalorder %s44, 0
      %p302 = por %p300, %p301
      %s304 = sadd.s32 %s303, 1
      %p307 = scmp.eq.s32.totalorder %s38, 1
      %p308 = scmp.ne.s32.totalorder %s303, %s305
      %p309 = scmp.eq.s32.totalorder %s38, 0
      %p310 = por %p308, %p309
      %p311 = scmp.ne.s32.totalorder %s303, %s305
      %p312 = scmp.eq.s32.totalorder %s43, 1
      %p313 = por %p311, %p312
      %p314 = scmp.ne.s32.totalorder %s305, %s306
      %p315 = scmp.eq.s32.totalorder %s43, 0
      %p316 = por %p314, %p315
      %p317 = scmp.ne.s32.totalorder %s305, %s306
      %p318 = scmp.eq.s32.totalorder %s44, 1
      %p319 = por %p317, %p318
      %p321 = scmp.ne.s32.totalorder %s306, %s320
      %p322 = scmp.eq.s32.totalorder %s44, 0
      %p323 = por %p321, %p322
      %s325 = sadd.s32 %s324, 1
      %p328 = scmp.eq.s32.totalorder %s38, 1
      %p329 = scmp.ne.s32.totalorder %s324, %s326
      %p330 = scmp.eq.s32.totalorder %s38, 0
      %p331 = por %p329, %p330
      %p332 = scmp.ne.s32.totalorder %s324, %s326
      %p333 = scmp.eq.s32.totalorder %s43, 1
      %p334 = por %p332, %p333
      %p335 = scmp.ne.s32.totalorder %s326, %s327
      %p336 = scmp.eq.s32.totalorder %s43, 0
      %p337 = por %p335, %p336
      %p338 = scmp.ne.s32.totalorder %s326, %s327
      %p339 = scmp.eq.s32.totalorder %s44, 1
      %p340 = por %p338, %p339
      %p342 = scmp.ne.s32.totalorder %s327, %s341
      %p343 = scmp.eq.s32.totalorder %s44, 0
      %p344 = por %p342, %p343
      %s346 = sadd.s32 %s345, 1
      %p349 = scmp.eq.s32.totalorder %s38, 1
      %p350 = scmp.ne.s32.totalorder %s345, %s347
      %p351 = scmp.eq.s32.totalorder %s38, 0
      %p352 = por %p350, %p351
      %p353 = scmp.ne.s32.totalorder %s345, %s347
      %p354 = scmp.eq.s32.totalorder %s43, 1
      %p355 = por %p353, %p354
      %p356 = scmp.ne.s32.totalorder %s347, %s348
      %p357 = scmp.eq.s32.totalorder %s43, 0
      %p358 = por %p356, %p357
      %p359 = scmp.ne.s32.totalorder %s347, %s348
      %p360 = scmp.eq.s32.totalorder %s44, 1
      %p361 = por %p359, %p360
      %p363 = scmp.ne.s32.totalorder %s348, %s362
      %p364 = scmp.eq.s32.totalorder %s44, 0
      %p365 = por %p363, %p364
      %s367 = sadd.s32 %s366, 1
      %p370 = scmp.eq.s32.totalorder %s38, 1
      %p371 = scmp.ne.s32.totalorder %s366, %s368
      %p372 = scmp.eq.s32.totalorder %s38, 0
      %p373 = por %p371, %p372
      %p374 = scmp.ne.s32.totalorder %s366, %s368
      %p375 = scmp.eq.s32.totalorder %s43, 1
      %p376 = por %p374, %p375
      %p377 = scmp.ne.s32.totalorder %s368, %s369
      %p378 = scmp.eq.s32.totalorder %s43, 0
      %p379 = por %p377, %p378
      %p380 = scmp.ne.s32.totalorder %s368, %s369
      %p381 = scmp.eq.s32.totalorder %s44, 1
      %p382 = por %p380, %p381
      %p384 = scmp.ne.s32.totalorder %s369, %s383
      %p385 = scmp.eq.s32.totalorder %s44, 0
      %p386 = por %p384, %p385
      %s388 = sadd.s32 %s387, 1
      %p391 = scmp.eq.s32.totalorder %s38, 1
      %p392 = scmp.ne.s32.totalorder %s387, %s389
      %p393 = scmp.eq.s32.totalorder %s38, 0
      %p394 = por %p392, %p393
      %p395 = scmp.ne.s32.totalorder %s387, %s389
      %p396 = scmp.eq.s32.totalorder %s43, 1
      %p397 = por %p395, %p396
      %p398 = scmp.ne.s32.totalorder %s389, %s390
      %p399 = scmp.eq.s32.totalorder %s43, 0
      %p400 = por %p398, %p399
      %p401 = scmp.ne.s32.totalorder %s389, %s390
      %p402 = scmp.eq.s32.totalorder %s44, 1
      %p403 = por %p401, %p402
      %p405 = scmp.ne.s32.totalorder %s390, %s404
      %p406 = scmp.eq.s32.totalorder %s44, 0
      %p407 = por %p405, %p406
      %s409 = sadd.s32 %s408, 1
      %p412 = scmp.eq.s32.totalorder %s38, 1
      %p413 = scmp.ne.s32.totalorder %s408, %s410
      %p414 = scmp.eq.s32.totalorder %s38, 0
      %p415 = por %p413, %p414
      %p416 = scmp.ne.s32.totalorder %s408, %s410
      %p417 = scmp.eq.s32.totalorder %s43, 1
      %p418 = por %p416, %p417
      %p419 = scmp.ne.s32.totalorder %s410, %s411
      %p420 = scmp.eq.s32.totalorder %s43, 0
      %p421 = por %p419, %p420
      %p422 = scmp.ne.s32.totalorder %s410, %s411
      %p423 = scmp.eq.s32.totalorder %s44, 1
      %p424 = por %p422, %p423
      %p426 = scmp.ne.s32.totalorder %s411, %s425
      %p427 = scmp.eq.s32.totalorder %s44, 0
      %p428 = por %p426, %p427
      %s430 = sadd.s32 %s429, 1
      %p433 = scmp.eq.s32.totalorder %s38, 1
      %p434 = scmp.ne.s32.totalorder %s429, %s431
      %p435 = scmp.eq.s32.totalorder %s38, 0
      %p436 = por %p434, %p435
      %p437 = scmp.ne.s32.totalorder %s429, %s431
      %p438 = scmp.eq.s32.totalorder %s43, 1
      %p439 = por %p437, %p438
      %p440 = scmp.ne.s32.totalorder %s431, %s432
      %p441 = scmp.eq.s32.totalorder %s43, 0
      %p442 = por %p440, %p441
      %p443 = scmp.ne.s32.totalorder %s431, %s432
      %p444 = scmp.eq.s32.totalorder %s44, 1
      %p445 = por %p443, %p444
      %p447 = scmp.ne.s32.totalorder %s432, %s446
      %p448 = scmp.eq.s32.totalorder %s44, 0
      %p449 = por %p447, %p448
      %s451 = sadd.s32 %s450, 1
      %p454 = scmp.eq.s32.totalorder %s38, 1
      %p455 = scmp.ne.s32.totalorder %s450, %s452
      %p456 = scmp.eq.s32.totalorder %s38, 0
      %p457 = por %p455, %p456
      %p458 = scmp.ne.s32.totalorder %s450, %s452
      %p459 = scmp.eq.s32.totalorder %s43, 1
      %p460 = por %p458, %p459
      %p461 = scmp.ne.s32.totalorder %s452, %s453
      %p462 = scmp.eq.s32.totalorder %s43, 0
      %p463 = por %p461, %p462
      %p464 = scmp.ne.s32.totalorder %s452, %s453
      %p465 = scmp.eq.s32.totalorder %s44, 1
      %p466 = por %p464, %p465
      %p468 = scmp.ne.s32.totalorder %s453, %s467
      %p469 = scmp.eq.s32.totalorder %s44, 0
      %p470 = por %p468, %p469
      %s471 = ssub.s32 %s38, %s45
      %p472 = scmp.eq.s32.totalorder %s471, 0
      %s474 = sadd.s32 %s473, 1
      %s475 = scalar_select %p472, %s473, %s474
      %p478 = pneg %p472
      %p479 = scmp.eq.s32.totalorder %s38, 1
      %p480 = por %p478, %p479
      %p481 = scmp.ne.s32.totalorder %s473, %s476
      %p482 = scmp.eq.s32.totalorder %s38, 0
      %p483 = por %p481, %p482
      %p484 = scmp.ne.s32.totalorder %s473, %s476
      %p485 = scmp.eq.s32.totalorder %s43, 1
      %p486 = por %p484, %p485
      %p487 = scmp.ne.s32.totalorder %s476, %s477
      %p488 = scmp.eq.s32.totalorder %s43, 0
      %p489 = por %p487, %p488
      %p490 = scmp.ne.s32.totalorder %s476, %s477
      %p491 = scmp.eq.s32.totalorder %s44, 1
      %p492 = por %p490, %p491
      %p494 = scmp.ne.s32.totalorder %s477, %s493
      %p495 = scmp.eq.s32.totalorder %s44, 0
      %p496 = por %p494, %p495
      %p497 = scmp.le.s32.totalorder 1, %s38
      %p498 = scmp.lt.s32.totalorder %s38, 3
      %p499 = pnand %p497, %p498
      %p500 = pneg %p499
      // Predicated region
      $region9: #{tpu_custom_call.1} parent=5 // pred_check
        _
      $region10: #{tpu_custom_call.1} parent=5 // pred_check_branch
        %502 = sbr.rel (%p499) target = $region12
      $region11: #{tpu_custom_call.1} parent=5 // pred_region
        %s503 = ssub.s32 %s38, 1
        // Predicated region
        $region13: #{tpu_custom_call.1} parent=11 // pred_check
          %p504 = pneg %p85
        $region14: #{tpu_custom_call.1} parent=11 // pred_check_branch
          %506 = sbr.rel (%p504) target = $region16
        $region15: #{tpu_custom_call.1} parent=11 // pred_region
          _
        $region16: #{tpu_custom_call.1} parent=11 // pred_fallthru
          _
        // Predicated region
        $region17: #{tpu_custom_call.1} parent=11 // pred_check
          %p507 = pneg %p106
        $region18: #{tpu_custom_call.1} parent=11 // pred_check_branch
          %509 = sbr.rel (%p507) target = $region20
        $region19: #{tpu_custom_call.1} parent=11 // pred_region
          %s511 = ssub.s32 16, 16
          %512 = vsyncadd [#allocation6], %s511
          %s514 = sshll.u32 [#allocation5], 4
          %s515 = int_to_ptr.vmem [resolvable:$true] %s514
          %517 = dma.hbm_to_vmem [thread:$0]  %s2, 16, %s515, [#allocation6]
        $region20: #{tpu_custom_call.1} parent=11 // pred_fallthru
          _
        // Predicated region
        $region21: #{tpu_custom_call.1} parent=11 // pred_check
          %p518 = pneg %p127
        $region22: #{tpu_custom_call.1} parent=11 // pred_check_branch
          %520 = sbr.rel (%p518) target = $region24
        $region23: #{tpu_custom_call.1} parent=11 // pred_region
          %s522 = ssub.s32 2048, 2048
          %523 = vsyncadd [#allocation6], %s522
          %s524 = sshll.u32 [#allocation7], 4
          %s525 = int_to_ptr.vmem [resolvable:$true] %s524
          %530 = dma.hbm_to_vmem [thread:$0]  %s3, 2048, %s525, [#allocation6], 128, 128, 8
        $region24: #{tpu_custom_call.1} parent=11 // pred_fallthru
          _
        // Predicated region
        $region25: #{tpu_custom_call.1} parent=11 // pred_check
          %p531 = pneg %p148
        $region26: #{tpu_custom_call.1} parent=11 // pred_check_branch
          %533 = sbr.rel (%p531) target = $region28
        $region27: #{tpu_custom_call.1} parent=11 // pred_region
          %s535 = ssub.s32 16, 16
          %536 = vsyncadd [#allocation9], %s535
          %s538 = sshll.u32 [#allocation8], 4
          %s539 = int_to_ptr.vmem [resolvable:$true] %s538
          %541 = dma.hbm_to_vmem [thread:$0]  %s4, 16, %s539, [#allocation9]
        $region28: #{tpu_custom_call.1} parent=11 // pred_fallthru
          _
        // Predicated region
        $region29: #{tpu_custom_call.1} parent=11 // pred_check
          %p542 = pneg %p169
        $region30: #{tpu_custom_call.1} parent=11 // pred_check_branch
          %544 = sbr.rel (%p542) target = $region32
        $region31: #{tpu_custom_call.1} parent=11 // pred_region
          %s546 = ssub.s32 6144, 6144
          %547 = vsyncadd [#allocation9], %s546
          %s548 = sshll.u32 [#allocation10], 4
          %s549 = int_to_ptr.vmem [resolvable:$true] %s548
          %554 = dma.hbm_to_vmem [thread:$0]  %s5, 6144, %s549, [#allocation9], 384, 384, 24
        $region32: #{tpu_custom_call.1} parent=11 // pred_fallthru
          _
        // Predicated region
        $region33: #{tpu_custom_call.1} parent=11 // pred_check
          %p555 = pneg %p190
        $region34: #{tpu_custom_call.1} parent=11 // pred_check_branch
          %557 = sbr.rel (%p555) target = $region36
        $region35: #{tpu_custom_call.1} parent=11 // pred_region
          %s559 = ssub.s32 48, 48
          %560 = vsyncadd [#allocation12], %s559
          %s562 = sshll.u32 [#allocation11], 4
          %s563 = int_to_ptr.vmem [resolvable:$true] %s562
          %565 = dma.hbm_to_vmem [thread:$0]  %s6, 48, %s563, [#allocation12]
        $region36: #{tpu_custom_call.1} parent=11 // pred_fallthru
          _
        // Predicated region
        $region37: #{tpu_custom_call.1} parent=11 // pred_check
          %p566 = pneg %p211
        $region38: #{tpu_custom_call.1} parent=11 // pred_check_branch
          %568 = sbr.rel (%p566) target = $region40
        $region39: #{tpu_custom_call.1} parent=11 // pred_region
          %s570 = ssub.s32 2048, 2048
          %571 = vsyncadd [#allocation12], %s570
          %s572 = sshll.u32 [#allocation13], 4
          %s573 = int_to_ptr.vmem [resolvable:$true] %s572
          %578 = dma.hbm_to_vmem [thread:$0]  %s7, 2048, %s573, [#allocation12], 128, 128, 8
        $region40: #{tpu_custom_call.1} parent=11 // pred_fallthru
          _
        // Predicated region
        $region41: #{tpu_custom_call.1} parent=11 // pred_check
          %p579 = pneg %p232
        $region42: #{tpu_custom_call.1} parent=11 // pred_check_branch
          %581 = sbr.rel (%p579) target = $region44
        $region43: #{tpu_custom_call.1} parent=11 // pred_region
          %s583 = ssub.s32 16, 16
          %584 = vsyncadd [#allocation15], %s583
          %s586 = sshll.u32 [#allocation14], 4
          %s587 = int_to_ptr.vmem [resolvable:$true] %s586
          %589 = dma.hbm_to_vmem [thread:$0]  %s8, 16, %s587, [#allocation15]
        $region44: #{tpu_custom_call.1} parent=11 // pred_fallthru
          _
        // Predicated region
        $region45: #{tpu_custom_call.1} parent=11 // pred_check
          %p590 = pneg %p253
        $region46: #{tpu_custom_call.1} parent=11 // pred_check_branch
          %592 = sbr.rel (%p590) target = $region48
        $region47: #{tpu_custom_call.1} parent=11 // pred_region
          %s594 = ssub.s32 16, 16
          %595 = vsyncadd [#allocation15], %s594
          %s597 = sshll.u32 [#allocation16], 4
          %s598 = int_to_ptr.vmem [resolvable:$true] %s597
          %600 = dma.hbm_to_vmem [thread:$0]  %s9, 16, %s598, [#allocation15]
        $region48: #{tpu_custom_call.1} parent=11 // pred_fallthru
          _
        // Predicated region
        $region49: #{tpu_custom_call.1} parent=11 // pred_check
          %p601 = pneg %p274
        $region50: #{tpu_custom_call.1} parent=11 // pred_check_branch
          %603 = sbr.rel (%p601) target = $region52
        $region51: #{tpu_custom_call.1} parent=11 // pred_region
          %s605 = ssub.s32 16, 16
          %606 = vsyncadd [#allocation18], %s605
          %s608 = sshll.u32 [#allocation17], 4
          %s609 = int_to_ptr.vmem [resolvable:$true] %s608
          %611 = dma.hbm_to_vmem [thread:$0]  %s10, 16, %s609, [#allocation18]
        $region52: #{tpu_custom_call.1} parent=11 // pred_fallthru
          _
        // Predicated region
        $region53: #{tpu_custom_call.1} parent=11 // pred_check
          %p612 = pneg %p295
        $region54: #{tpu_custom_call.1} parent=11 // pred_check_branch
          %614 = sbr.rel (%p612) target = $region56
        $region55: #{tpu_custom_call.1} parent=11 // pred_region
          %s616 = ssub.s32 8192, 8192
          %617 = vsyncadd [#allocation18], %s616
          %s618 = sshll.u32 [#allocation19], 4
          %s619 = int_to_ptr.vmem [resolvable:$true] %s618
          %624 = dma.hbm_to_vmem [thread:$0]  %s11, 8192, %s619, [#allocation18], 512, 512, 32
        $region56: #{tpu_custom_call.1} parent=11 // pred_fallthru
          _
        // Predicated region
        $region57: #{tpu_custom_call.1} parent=11 // pred_check
          %p625 = pneg %p316
        $region58: #{tpu_custom_call.1} parent=11 // pred_check_branch
          %627 = sbr.rel (%p625) target = $region60
        $region59: #{tpu_custom_call.1} parent=11 // pred_region
          _
        $region60: #{tpu_custom_call.1} parent=11 // pred_fallthru
          _
        // Predicated region
        $region61: #{tpu_custom_call.1} parent=11 // pred_check
          %p628 = pneg %p337
        $region62: #{tpu_custom_call.1} parent=11 // pred_check_branch
          %630 = sbr.rel (%p628) target = $region64
        $region63: #{tpu_custom_call.1} parent=11 // pred_region
          %s632 = ssub.s32 8192, 8192
          %633 = vsyncadd [#allocation21], %s632
          %s634 = sshll.u32 [#allocation20], 4
          %s635 = int_to_ptr.vmem [resolvable:$true] %s634
          %640 = dma.hbm_to_vmem [thread:$0]  %s13, 8192, %s635, [#allocation21], 128, 128, 8
        $region64: #{tpu_custom_call.1} parent=11 // pred_fallthru
          _
        // Predicated region
        $region65: #{tpu_custom_call.1} parent=11 // pred_check
          %p641 = pneg %p358
        $region66: #{tpu_custom_call.1} parent=11 // pred_check_branch
          %643 = sbr.rel (%p641) target = $region68
        $region67: #{tpu_custom_call.1} parent=11 // pred_region
          _
        $region68: #{tpu_custom_call.1} parent=11 // pred_fallthru
          _
        // Predicated region
        $region69: #{tpu_custom_call.1} parent=11 // pred_check
          %p644 = pneg %p379
        $region70: #{tpu_custom_call.1} parent=11 // pred_check_branch
          %646 = sbr.rel (%p644) target = $region72
        $region71: #{tpu_custom_call.1} parent=11 // pred_region
          _
        $region72: #{tpu_custom_call.1} parent=11 // pred_fallthru
          _
        // Predicated region
        $region73: #{tpu_custom_call.1} parent=11 // pred_check
          %p647 = pneg %p400
        $region74: #{tpu_custom_call.1} parent=11 // pred_check_branch
          %649 = sbr.rel (%p647) target = $region76
        $region75: #{tpu_custom_call.1} parent=11 // pred_region
          _
        $region76: #{tpu_custom_call.1} parent=11 // pred_fallthru
          _
        // Predicated region
        $region77: #{tpu_custom_call.1} parent=11 // pred_check
          %p650 = pneg %p421
        $region78: #{tpu_custom_call.1} parent=11 // pred_check_branch
          %652 = sbr.rel (%p650) target = $region80
        $region79: #{tpu_custom_call.1} parent=11 // pred_region
          _
        $region80: #{tpu_custom_call.1} parent=11 // pred_fallthru
          _
        // Predicated region
        $region81: #{tpu_custom_call.1} parent=11 // pred_check
          %p653 = pneg %p442
        $region82: #{tpu_custom_call.1} parent=11 // pred_check_branch
          %655 = sbr.rel (%p653) target = $region84
        $region83: #{tpu_custom_call.1} parent=11 // pred_region
          _
        $region84: #{tpu_custom_call.1} parent=11 // pred_fallthru
          _
        // Predicated region
        $region85: #{tpu_custom_call.1} parent=11 // pred_check
          %p656 = pneg %p463
        $region86: #{tpu_custom_call.1} parent=11 // pred_check_branch
          %658 = sbr.rel (%p656) target = $region88
        $region87: #{tpu_custom_call.1} parent=11 // pred_region
          _
        $region88: #{tpu_custom_call.1} parent=11 // pred_fallthru
          _
      $region12: #{tpu_custom_call.1} parent=5 // pred_fallthru
        _
      %p659 = scmp.lt.s32.totalorder %s38, 2
      // Predicated region
      $region89: #{tpu_custom_call.1} parent=5 // pred_check
        %p660 = pneg %p659
      $region90: #{tpu_custom_call.1} parent=5 // pred_check_branch
        %662 = sbr.rel (%p660) target = $region92
      $region91: #{tpu_custom_call.1} parent=5 // pred_region
        // Predicated region
        $region93: #{tpu_custom_call.1} parent=91 // pred_check
          %p663 = pneg %p58
        $region94: #{tpu_custom_call.1} parent=91 // pred_check_branch
          %665 = sbr.rel (%p663) target = $region96
        $region95: #{tpu_custom_call.1} parent=91 // pred_region
          %s666 = sand.u32 %s48, 1
          %s667 = scalar_lea.sflag [#allocation3], %s666
          %s668 = sand.u32 %s48, 1
          %s669 = smul.addr %s668, 32
          %s670 = scalar_lea.vmem [#allocation2], %s669
          %s671 = smul.u32 2, %s38
          %s673 = ssub.s32 512, 512
          %674 = vsyncadd %s667, %s673
          %s675 = smul.addr %s671, 2
          %s676 = smul.addr %s675, 128
          %s677 = scalar_lea.hbm %s0, %s676
          %s678 = sshll.u32 %s670, 4
          %s679 = int_to_ptr.vmem [resolvable:$true] %s678
          %684 = dma.hbm_to_vmem [thread:$0]  %s677, 512, %s679, %s667, 128, 128, 8
        $region96: #{tpu_custom_call.1} parent=91 // pred_fallthru
          _
      $region92: #{tpu_custom_call.1} parent=5 // pred_fallthru
        _
      %p685 = scmp.le.s32.totalorder 1, %s38
      %p686 = scmp.lt.s32.totalorder %s38, 3
      %p687 = pnand %p685, %p686
      %p688 = pneg %p687
      // Predicated region
      $region97: #{tpu_custom_call.1} parent=5 // pred_check
        _
      $region98: #{tpu_custom_call.1} parent=5 // pred_check_branch
        %690 = sbr.rel (%p687) target = $region100
      $region99: #{tpu_custom_call.1} parent=5 // pred_region
        %s691 = ssub.s32 %s38, 1
        %s692 = sand.u32 %s51, 1
        %s693 = scalar_lea.sflag [#allocation3], %s692
        %s694 = sand.u32 %s51, 1
        %s695 = smul.addr %s694, 32
        %s696 = scalar_lea.vmem [#allocation2], %s695
        // Predicated region
        $region101: #{tpu_custom_call.1} parent=99 // pred_check
          %p697 = pneg %p64
        $region102: #{tpu_custom_call.1} parent=99 // pred_check_branch
          %699 = sbr.rel (%p697) target = $region104
        $region103: #{tpu_custom_call.1} parent=99 // pred_region
          %700 = dma.done %s693, 512
        $region104: #{tpu_custom_call.1} parent=99 // pred_fallthru
          _
        // Predicated region
        $region105: #{tpu_custom_call.1} parent=99 // pred_check
          %p701 = pneg %p106
        $region106: #{tpu_custom_call.1} parent=99 // pred_check_branch
          %703 = sbr.rel (%p701) target = $region108
        $region107: #{tpu_custom_call.1} parent=99 // pred_region
          %704 = dma.done [#allocation6], 16
        $region108: #{tpu_custom_call.1} parent=99 // pred_fallthru
          _
        // Predicated region
        $region109: #{tpu_custom_call.1} parent=99 // pred_check
          %p705 = pneg %p127
        $region110: #{tpu_custom_call.1} parent=99 // pred_check_branch
          %707 = sbr.rel (%p705) target = $region112
        $region111: #{tpu_custom_call.1} parent=99 // pred_region
          %708 = dma.done [#allocation6], 2048
        $region112: #{tpu_custom_call.1} parent=99 // pred_fallthru
          _
        // Predicated region
        $region113: #{tpu_custom_call.1} parent=99 // pred_check
          %p709 = pneg %p148
        $region114: #{tpu_custom_call.1} parent=99 // pred_check_branch
          %711 = sbr.rel (%p709) target = $region116
        $region115: #{tpu_custom_call.1} parent=99 // pred_region
          %712 = dma.done [#allocation9], 16
        $region116: #{tpu_custom_call.1} parent=99 // pred_fallthru
          _
        // Predicated region
        $region117: #{tpu_custom_call.1} parent=99 // pred_check
          %p713 = pneg %p169
        $region118: #{tpu_custom_call.1} parent=99 // pred_check_branch
          %715 = sbr.rel (%p713) target = $region120
        $region119: #{tpu_custom_call.1} parent=99 // pred_region
          %716 = dma.done [#allocation9], 6144
        $region120: #{tpu_custom_call.1} parent=99 // pred_fallthru
          _
        // Predicated region
        $region121: #{tpu_custom_call.1} parent=99 // pred_check
          %p717 = pneg %p190
        $region122: #{tpu_custom_call.1} parent=99 // pred_check_branch
          %719 = sbr.rel (%p717) target = $region124
        $region123: #{tpu_custom_call.1} parent=99 // pred_region
          %720 = dma.done [#allocation12], 48
        $region124: #{tpu_custom_call.1} parent=99 // pred_fallthru
          _
        // Predicated region
        $region125: #{tpu_custom_call.1} parent=99 // pred_check
          %p721 = pneg %p211
        $region126: #{tpu_custom_call.1} parent=99 // pred_check_branch
          %723 = sbr.rel (%p721) target = $region128
        $region127: #{tpu_custom_call.1} parent=99 // pred_region
          %724 = dma.done [#allocation12], 2048
        $region128: #{tpu_custom_call.1} parent=99 // pred_fallthru
          _
        // Predicated region
        $region129: #{tpu_custom_call.1} parent=99 // pred_check
          %p725 = pneg %p232
        $region130: #{tpu_custom_call.1} parent=99 // pred_check_branch
          %727 = sbr.rel (%p725) target = $region132
        $region131: #{tpu_custom_call.1} parent=99 // pred_region
          %728 = dma.done [#allocation15], 16
        $region132: #{tpu_custom_call.1} parent=99 // pred_fallthru
          _
        // Predicated region
        $region133: #{tpu_custom_call.1} parent=99 // pred_check
          %p729 = pneg %p253
        $region134: #{tpu_custom_call.1} parent=99 // pred_check_branch
          %731 = sbr.rel (%p729) target = $region136
        $region135: #{tpu_custom_call.1} parent=99 // pred_region
          %732 = dma.done [#allocation15], 16
        $region136: #{tpu_custom_call.1} parent=99 // pred_fallthru
          _
        // Predicated region
        $region137: #{tpu_custom_call.1} parent=99 // pred_check
          %p733 = pneg %p274
        $region138: #{tpu_custom_call.1} parent=99 // pred_check_branch
          %735 = sbr.rel (%p733) target = $region140
        $region139: #{tpu_custom_call.1} parent=99 // pred_region
          %736 = dma.done [#allocation18], 16
        $region140: #{tpu_custom_call.1} parent=99 // pred_fallthru
          _
        // Predicated region
        $region141: #{tpu_custom_call.1} parent=99 // pred_check
          %p737 = pneg %p295
        $region142: #{tpu_custom_call.1} parent=99 // pred_check_branch
          %739 = sbr.rel (%p737) target = $region144
        $region143: #{tpu_custom_call.1} parent=99 // pred_region
          %740 = dma.done [#allocation18], 8192
        $region144: #{tpu_custom_call.1} parent=99 // pred_fallthru
          _
        // Predicated region
        $region145: #{tpu_custom_call.1} parent=99 // pred_check
          %p741 = pneg %p337
        $region146: #{tpu_custom_call.1} parent=99 // pred_check_branch
          %743 = sbr.rel (%p741) target = $region148
        $region147: #{tpu_custom_call.1} parent=99 // pred_region
          %744 = dma.done [#allocation21], 8192
        $region148: #{tpu_custom_call.1} parent=99 // pred_fallthru
          _
        %s745 = sand.u32 %s51, 1
        %s746 = scalar_lea.sflag [#allocation3], %s745
        %s747 = sand.u32 %s51, 1
        %s748 = smul.addr %s747, 32
        %s749 = scalar_lea.vmem [#allocation2], %s748
        %p750 = pneg %p64
        %p751 = pneg %p61
        %p752 = pneg %p85
        %p753 = pneg %p82
        %p754 = pneg %p106
        %p755 = pneg %p103
        %p756 = pneg %p127
        %p757 = pneg %p124
        %p758 = pneg %p148
        %p759 = pneg %p145
        %p760 = pneg %p169
        %p761 = pneg %p166
        %p762 = pneg %p190
        %p763 = pneg %p187
        %p764 = pneg %p211
        %p765 = pneg %p208
        %p766 = pneg %p232
        %p767 = pneg %p229
        %p768 = pneg %p253
        %p769 = pneg %p250
        %p770 = pneg %p274
        %p771 = pneg %p271
        %p772 = pneg %p295
        %p773 = pneg %p292
        %p774 = pneg %p316
        %p775 = pneg %p313
        %p776 = pneg %p337
        %p777 = pneg %p334
        %p778 = pneg %p358
        %p779 = pneg %p355
        %p780 = pneg %p379
        %p781 = pneg %p376
        %p782 = pneg %p400
        %p783 = pneg %p397
        %p784 = pneg %p421
        %p785 = pneg %p418
        %p786 = pneg %p442
        %p787 = pneg %p439
        %p788 = pneg %p463
        %p789 = pneg %p460
        %p790 = pneg %p489
        %p791 = pneg %p486
        %s792 = sand.u32 %s476, 1
        %s793 = scalar_lea.sflag [#allocation4], %s792
        %s794 = sand.u32 %s476, 1
        %s795 = smul.addr %s794, 2
        %s796 = scalar_lea.vmem [#allocation22], %s795
        %s797 = smul.u32 2, %s43
        %s798 = smul.u32 2, %s43
        %v799 = vld [vmem:[%s696] sm:$0xff]
        %v800 = vld [vmem:[%s696 + $0x8] sm:$0xff]
        %v801 = vld [vmem:[%s696 + $0x10] sm:$0xff]
        %v802 = vld [vmem:[%s696 + $0x18] sm:$0xff]
        %v803 = vand.u32 2147483647, %v799
        %v804 = vand.u32 2147483647, %v800
        %v805 = vand.u32 2147483647, %v801
        %v806 = vand.u32 2147483647, %v802
        %807 = vmax.xlane.f32.xlu0 %v803
        %v808 = vpop.xlane.xlu0 %807
        %809 = vmax.xlane.f32.xlu0 %v804
        %v810 = vpop.xlane.xlu0 %809
        %811 = vmax.xlane.f32.xlu0 %v805
        %v812 = vpop.xlane.xlu0 %811
        %813 = vmax.xlane.f32.xlu0 %v806
        %v814 = vpop.xlane.xlu0 %813
        %vm815 = vcmp.eq.f32.partialorder %v808, 0.0
        %vm816 = vcmp.eq.f32.partialorder %v810, 0.0
        %vm817 = vcmp.eq.f32.partialorder %v812, 0.0
        %vm818 = vcmp.eq.f32.partialorder %v814, 0.0
        %v819 = vsel %vm815, 1, 0
        %v820 = vsel %vm816, 1, 0
        %v821 = vsel %vm817, 1, 0
        %v822 = vsel %vm818, 1, 0
        %v823 = vcvt.s32.f32 %v819
        %v824 = vcvt.s32.f32 %v820
        %v825 = vcvt.s32.f32 %v821
        %v826 = vcvt.s32.f32 %v822
        %v827 = vsub.f32 1.0, %v823
        %v828 = vsub.f32 1.0, %v824
        %v829 = vsub.f32 1.0, %v825
        %v830 = vsub.f32 1.0, %v826
        %v831 = vmul.f32 %v799, %v827
        %v832 = vmul.f32 %v800, %v828
        %v833 = vmul.f32 %v801, %v829
        %v834 = vmul.f32 %v802, %v830
        %835 = vmatprep.subr.mxu0 0.0
        %836 = vmatpush1.xpose.msra.mxu0 %v803
        %837 = vmatprep.subr.mxu0 0.0
        %838 = vmatpush1.xpose.msra.mxu0 %v804
        %839 = vmatprep.subr.mxu0 0.0
        %840 = vmatpush1.xpose.msra.mxu0 0.0
        %841 = vmatprep.subr.mxu0 0.0
        %842 = vmatpush1.xpose.msra.mxu0 0.0
        %843 = vmatprep.subr.mxu0 0.0
        %844 = vmatpush1.xpose.msra.mxu0 0.0
        %845 = vmatprep.subr.mxu0 0.0
        %846 = vmatpush1.xpose.msra.mxu0 0.0
        %847 = vmatprep.subr.mxu0 0.0
        %848 = vmatpush1.xpose.msra.mxu0 0.0
        %849 = vmatprep.subr.mxu0 0.0
        %850 = vmatpush1.xpose.msra.mxu0 0.0
        %851 = vmatprep.subr.mxu0 0.0
        %852 = vmatpush1.xpose.msra.mxu0 0.0
        %853 = vmatprep.subr.mxu0 0.0
        %854 = vmatpush1.xpose.msra.mxu0 0.0
        %855 = vmatprep.subr.mxu0 0.0
        %856 = vmatpush1.xpose.msra.mxu0 0.0
        %857 = vmatprep.subr.mxu0 0.0
        %858 = vmatpush1.xpose.msra.mxu0 0.0
        %859 = vmatprep.subr.mxu0 0.0
        %860 = vmatpush1.xpose.msra.mxu0 0.0
        %861 = vmatprep.subr.mxu0 0.0
        %862 = vmatpush1.xpose.msra.mxu0 0.0
        %863 = vmatprep.subr.mxu0 0.0
        %864 = vmatpush1.xpose.msra.mxu0 0.0
        %865 = vmatprep.subr.mxu0 0.0
        %866 = vmatpush1.xpose.msra.mxu0 0.0
        %867 = vmatprep.subr.mxu0 0.0
        %868 = vmatpush1.xpose.msra.mxu0 0.0
        %869 = vmatprep.subr.mxu0 0.0
        %870 = vmatpush1.xpose.msra.mxu0 0.0
        %871 = vmatprep.subr.mxu0 0.0
        %872 = vmatpush1.xpose.msra.mxu0 0.0
        %873 = vmatprep.subr.mxu0 0.0
        %874 = vmatpush1.xpose.msra.mxu0 0.0
        %875 = vmatprep.subr.mxu0 0.0
        %876 = vmatpush1.xpose.msra.mxu0 0.0
        %877 = vmatprep.subr.mxu0 0.0
        %878 = vmatpush1.xpose.msra.mxu0 0.0
        %879 = vmatprep.subr.mxu0 0.0
        %880 = vmatpush1.xpose.msra.mxu0 0.0
        %881 = vmatprep.subr.mxu0 0.0
        %882 = vmatpush1.xpose.msra.mxu0 0.0
        %883 = vmatprep.subr.mxu0 0.0
        %884 = vmatpush1.xpose.msra.mxu0 0.0
        %885 = vmatprep.subr.mxu0 0.0
        %886 = vmatpush1.xpose.msra.mxu0 0.0
        %887 = vmatprep.subr.mxu0 0.0
        %888 = vmatpush1.xpose.msra.mxu0 0.0
        %889 = vmatprep.subr.mxu0 0.0
        %890 = vmatpush1.xpose.msra.mxu0 0.0
        %891 = vmatprep.subr.mxu0 0.0
        %892 = vmatpush1.xpose.msra.mxu0 0.0
        %893 = vmatprep.subr.mxu0 0.0
        %894 = vmatpush1.xpose.msra.mxu0 0.0
        %895 = vmatprep.subr.mxu0 0.0
        %896 = vmatpush1.xpose.msra.mxu0 0.0
        %897 = vmatprep.subr.mxu0 0.0
        %898 = vmatpush1.xpose.msra.mxu0 0.0
        %899 = vmatprep.mubr.f32.mxu0 0.0
        %900 = vmatmul.mubr.f32.gmra.mrb[0].mxu0 1.0
        %v901 = vpop.f32.mrb[0].mxu0
        %v902 = vadd.f32 0.0, %v901
        %v903 = vpop.f32.mrb[0].mxu0
        %904 = vdwg.mxu0
        %905 = vmatprep.subr.mxu0 0.0
        %906 = vmatpush1.xpose.msra.mxu0 %v805
        %907 = vmatprep.subr.mxu0 0.0
        %908 = vmatpush1.xpose.msra.mxu0 %v806
        %909 = vmatprep.subr.mxu0 0.0
        %910 = vmatpush1.xpose.msra.mxu0 0.0
        %911 = vmatprep.subr.mxu0 0.0
        %912 = vmatpush1.xpose.msra.mxu0 0.0
        %913 = vmatprep.subr.mxu0 0.0
        %914 = vmatpush1.xpose.msra.mxu0 0.0
        %915 = vmatprep.subr.mxu0 0.0
        %916 = vmatpush1.xpose.msra.mxu0 0.0
        %917 = vmatprep.subr.mxu0 0.0
        %918 = vmatpush1.xpose.msra.mxu0 0.0
        %919 = vmatprep.subr.mxu0 0.0
        %920 = vmatpush1.xpose.msra.mxu0 0.0
        %921 = vmatprep.subr.mxu0 0.0
        %922 = vmatpush1.xpose.msra.mxu0 0.0
        %923 = vmatprep.subr.mxu0 0.0
        %924 = vmatpush1.xpose.msra.mxu0 0.0
        %925 = vmatprep.subr.mxu0 0.0
        %926 = vmatpush1.xpose.msra.mxu0 0.0
        %927 = vmatprep.subr.mxu0 0.0
        %928 = vmatpush1.xpose.msra.mxu0 0.0
        %929 = vmatprep.subr.mxu0 0.0
        %930 = vmatpush1.xpose.msra.mxu0 0.0
        %931 = vmatprep.subr.mxu0 0.0
        %932 = vmatpush1.xpose.msra.mxu0 0.0
        %933 = vmatprep.subr.mxu0 0.0
        %934 = vmatpush1.xpose.msra.mxu0 0.0
        %935 = vmatprep.subr.mxu0 0.0
        %936 = vmatpush1.xpose.msra.mxu0 0.0
        %937 = vmatprep.subr.mxu0 0.0
        %938 = vmatpush1.xpose.msra.mxu0 0.0
        %939 = vmatprep.subr.mxu0 0.0
        %940 = vmatpush1.xpose.msra.mxu0 0.0
        %941 = vmatprep.subr.mxu0 0.0
        %942 = vmatpush1.xpose.msra.mxu0 0.0
        %943 = vmatprep.subr.mxu0 0.0
        %944 = vmatpush1.xpose.msra.mxu0 0.0
        %945 = vmatprep.subr.mxu0 0.0
        %946 = vmatpush1.xpose.msra.mxu0 0.0
        %947 = vmatprep.subr.mxu0 0.0
        %948 = vmatpush1.xpose.msra.mxu0 0.0
        %949 = vmatprep.subr.mxu0 0.0
        %950 = vmatpush1.xpose.msra.mxu0 0.0
        %951 = vmatprep.subr.mxu0 0.0
        %952 = vmatpush1.xpose.msra.mxu0 0.0
        %953 = vmatprep.subr.mxu0 0.0
        %954 = vmatpush1.xpose.msra.mxu0 0.0
        %955 = vmatprep.subr.mxu0 0.0
        %956 = vmatpush1.xpose.msra.mxu0 0.0
        %957 = vmatprep.subr.mxu0 0.0
        %958 = vmatpush1.xpose.msra.mxu0 0.0
        %959 = vmatprep.subr.mxu0 0.0
        %960 = vmatpush1.xpose.msra.mxu0 0.0
        %961 = vmatprep.subr.mxu0 0.0
        %962 = vmatpush1.xpose.msra.mxu0 0.0
        %963 = vmatprep.subr.mxu0 0.0
        %964 = vmatpush1.xpose.msra.mxu0 0.0
        %965 = vmatprep.subr.mxu0 0.0
        %966 = vmatpush1.xpose.msra.mxu0 0.0
        %967 = vmatprep.subr.mxu0 0.0
        %968 = vmatpush1.xpose.msra.mxu0 0.0
        %969 = vmatprep.mubr.f32.mxu0 0.0
        %970 = vmatmul.mubr.f32.gmra.mrb[0].mxu0 1.0
        %v971 = vpop.f32.mrb[0].mxu0
        %v972 = vadd.f32 0.0, %v971
        %v973 = vpop.f32.mrb[0].mxu0
        %974 = vdwg.mxu0
        %vm975 = vcmp.eq.f32.partialorder %v902, 0.0
        %vm976 = vcmp.eq.f32.partialorder %v972, 0.0
        %v977 = vld [vmem:[%s1] sm:$0x1]
        %v978 = vld [vmem:[#allocation5] sm:$0x1]
        %979 = vadd.xlane.f32.xlu0 %v831
        %v980 = vpop.xlane.xlu0 %979
        %981 = vadd.xlane.f32.xlu0 %v832
        %v982 = vpop.xlane.xlu0 %981
        %983 = vadd.xlane.f32.xlu0 %v833
        %v984 = vpop.xlane.xlu0 %983
        %985 = vadd.xlane.f32.xlu0 %v834
        %v986 = vpop.xlane.xlu0 %985
        %v987 = vrcp.pop 128.0
        %v988 = vmul.f32 %v980, %v987
        %v989 = vmul.f32 %v982, %v987
        %v990 = vmul.f32 %v984, %v987
        %v991 = vmul.f32 %v986, %v987
        %v992 = vsub.f32 %v831, %v988
        %v993 = vsub.f32 %v832, %v989
        %v994 = vsub.f32 %v833, %v990
        %v995 = vsub.f32 %v834, %v991
        %v996 = vmul.f32 %v992, %v992
        %v997 = vmul.f32 %v993, %v993
        %v998 = vmul.f32 %v994, %v994
        %v999 = vmul.f32 %v995, %v995
        %1000 = vadd.xlane.f32.xlu0 %v996
        %v1001 = vpop.xlane.xlu0 %1000
        %1002 = vadd.xlane.f32.xlu0 %v997
        %v1003 = vpop.xlane.xlu0 %1002
        %1004 = vadd.xlane.f32.xlu0 %v998
        %v1005 = vpop.xlane.xlu0 %1004
        %1006 = vadd.xlane.f32.xlu0 %v999
        %v1007 = vpop.xlane.xlu0 %1006
        %v1008 = vmul.f32 %v1001, %v987
        %v1009 = vmul.f32 %v1003, %v987
        %v1010 = vmul.f32 %v1005, %v987
        %v1011 = vmul.f32 %v1007, %v987
        %v1012 = vadd.f32 %v1008, 1e-05
        %v1013 = vadd.f32 %v1009, 1e-05
        %v1014 = vadd.f32 %v1010, 1e-05
        %v1015 = vadd.f32 %v1011, 1e-05
        %v1016 = vrsqrt.pop %v1012
        %v1017 = vrsqrt.pop %v1013
        %v1018 = vrsqrt.pop %v1014
        %v1019 = vrsqrt.pop %v1015
        %v1020 = vmul.f32 %v992, %v1016
        %v1021 = vmul.f32 %v993, %v1017
        %v1022 = vmul.f32 %v994, %v1018
        %v1023 = vmul.f32 %v995, %v1019
        %v1025 = vlaneseq
        %v1026 = vshrl.u32 %v1025, 7
        %v1027 = vsub.s32 0, %v1026
        %v1028 = vrot.slane %v977, %v1027
        %v1030 = vmul.f32 %v1020, %v1028
        %v1031 = vmul.f32 %v1021, %v1028
        %v1032 = vmul.f32 %v1022, %v1028
        %v1033 = vmul.f32 %v1023, %v1028
        %v1035 = vlaneseq
        %v1036 = vshrl.u32 %v1035, 7
        %v1037 = vsub.s32 0, %v1036
        %v1038 = vrot.slane %v978, %v1037
        %v1040 = vadd.f32 %v1030, %v1038
        %v1041 = vadd.f32 %v1031, %v1038
        %v1042 = vadd.f32 %v1032, %v1038
        %v1043 = vadd.f32 %v1033, %v1038
        %v1044 = vld [vmem:[#allocation10] sm:$0xff]
        %v1045 = vld [vmem:[#allocation10 + $0x8] sm:$0xff]
        %v1046 = vld [vmem:[#allocation10 + $0x10] sm:$0xff]
        %v1047 = vld [vmem:[#allocation10 + $0x18] sm:$0xff]
        %v1048 = vld [vmem:[#allocation10 + $0x20] sm:$0xff]
        %v1049 = vld [vmem:[#allocation10 + $0x28] sm:$0xff]
        %v1050 = vld [vmem:[#allocation10 + $0x30] sm:$0xff]
        %v1051 = vld [vmem:[#allocation10 + $0x38] sm:$0xff]
        %v1052 = vld [vmem:[#allocation10 + $0x40] sm:$0xff]
        %v1053 = vld [vmem:[#allocation10 + $0x48] sm:$0xff]
        %v1054 = vld [vmem:[#allocation10 + $0x50] sm:$0xff]
        %v1055 = vld [vmem:[#allocation10 + $0x58] sm:$0xff]
        %v1056 = vld [vmem:[#allocation10 + $0x60] sm:$0xff]
        %v1057 = vld [vmem:[#allocation10 + $0x68] sm:$0xff]
        %v1058 = vld [vmem:[#allocation10 + $0x70] sm:$0xff]
        %v1059 = vld [vmem:[#allocation10 + $0x78] sm:$0xff]
        %v1060 = vld [vmem:[#allocation10 + $0x80] sm:$0xff]
        %v1061 = vld [vmem:[#allocation10 + $0x88] sm:$0xff]
        %v1062 = vld [vmem:[#allocation10 + $0x90] sm:$0xff]
        %v1063 = vld [vmem:[#allocation10 + $0x98] sm:$0xff]
        %v1064 = vld [vmem:[#allocation10 + $0xa0] sm:$0xff]
        %v1065 = vld [vmem:[#allocation10 + $0xa8] sm:$0xff]
        %v1066 = vld [vmem:[#allocation10 + $0xb0] sm:$0xff]
        %v1067 = vld [vmem:[#allocation10 + $0xb8] sm:$0xff]
        %v1068 = vld [vmem:[#allocation10 + $0xc0] sm:$0xff]
        %v1069 = vld [vmem:[#allocation10 + $0xc8] sm:$0xff]
        %v1070 = vld [vmem:[#allocation10 + $0xd0] sm:$0xff]
        %v1071 = vld [vmem:[#allocation10 + $0xd8] sm:$0xff]
        %v1072 = vld [vmem:[#allocation10 + $0xe0] sm:$0xff]
        %v1073 = vld [vmem:[#allocation10 + $0xe8] sm:$0xff]
        %v1074 = vld [vmem:[#allocation10 + $0xf0] sm:$0xff]
        %v1075 = vld [vmem:[#allocation10 + $0xf8] sm:$0xff]
        %v1076 = vld [vmem:[#allocation10 + $0x100] sm:$0xff]
        %v1077 = vld [vmem:[#allocation10 + $0x108] sm:$0xff]
        %v1078 = vld [vmem:[#allocation10 + $0x110] sm:$0xff]
        %v1079 = vld [vmem:[#allocation10 + $0x118] sm:$0xff]
        %v1080 = vld [vmem:[#allocation10 + $0x120] sm:$0xff]
        %v1081 = vld [vmem:[#allocation10 + $0x128] sm:$0xff]
        %v1082 = vld [vmem:[#allocation10 + $0x130] sm:$0xff]
        %v1083 = vld [vmem:[#allocation10 + $0x138] sm:$0xff]
        %v1084 = vld [vmem:[#allocation10 + $0x140] sm:$0xff]
        %v1085 = vld [vmem:[#allocation10 + $0x148] sm:$0xff]
        %v1086 = vld [vmem:[#allocation10 + $0x150] sm:$0xff]
        %v1087 = vld [vmem:[#allocation10 + $0x158] sm:$0xff]
        %v1088 = vld [vmem:[#allocation10 + $0x160] sm:$0xff]
        %v1089 = vld [vmem:[#allocation10 + $0x168] sm:$0xff]
        %v1090 = vld [vmem:[#allocation10 + $0x170] sm:$0xff]
        %v1091 = vld [vmem:[#allocation10 + $0x178] sm:$0xff]
        %v1092 = vld [vmem:[#allocation11] sm:$0x7]
        %v1094 = vlaneseq
        %v1095 = vshrl.u32 %v1094, 7
        %v1096 = vsub.s32 0, %v1095
        %v1097 = vrot.slane %v1092, %v1096
        %v1098 = vlaneseq
        %v1099 = vshrl.u32 %v1098, 7
        %v1100 = vsub.s32 1, %v1099
        %v1101 = vrot.slane %v1092, %v1100
        %v1102 = vlaneseq
        %v1103 = vshrl.u32 %v1102, 7
        %v1104 = vsub.s32 2, %v1103
        %v1105 = vrot.slane %v1092, %v1104
        %1109 = vmatprep.subr.mxu0 %v1045
        %1110 = vmatpush1.msra.mxu0 %v1044
        %1111 = vmatprep.subr.mxu0 %v1048
        %1112 = vmatpush1.msra.mxu0 %v1047
        %1113 = vmatprep.subr.mxu0 %v1051
        %1114 = vmatpush1.msra.mxu0 %v1050
        %1115 = vmatprep.subr.mxu0 %v1054
        %1116 = vmatpush1.msra.mxu0 %v1053
        %1117 = vmatprep.subr.mxu0 %v1057
        %1118 = vmatpush1.msra.mxu0 %v1056
        %1119 = vmatprep.subr.mxu0 %v1060
        %1120 = vmatpush1.msra.mxu0 %v1059
        %1121 = vmatprep.subr.mxu0 %v1063
        %1122 = vmatpush1.msra.mxu0 %v1062
        %1123 = vmatprep.subr.mxu0 %v1066
        %1124 = vmatpush1.msra.mxu0 %v1065
        %1125 = vmatprep.subr.mxu0 %v1069
        %1126 = vmatpush1.msra.mxu0 %v1068
        %1127 = vmatprep.subr.mxu0 %v1072
        %1128 = vmatpush1.msra.mxu0 %v1071
        %1129 = vmatprep.subr.mxu0 %v1075
        %1130 = vmatpush1.msra.mxu0 %v1074
        %1131 = vmatprep.subr.mxu0 %v1078
        %1132 = vmatpush1.msra.mxu0 %v1077
        %1133 = vmatprep.subr.mxu0 %v1081
        %1134 = vmatpush1.msra.mxu0 %v1080
        %1135 = vmatprep.subr.mxu0 %v1084
        %1136 = vmatpush1.msra.mxu0 %v1083
        %1137 = vmatprep.subr.mxu0 %v1087
        %1138 = vmatpush1.msra.mxu0 %v1086
        %1139 = vmatprep.subr.mxu0 %v1090
        %1140 = vmatpush1.msra.mxu0 %v1089
        %1141 = vmatprep.subr.mxu0 0.0
        %1142 = vmatpush1.msra.mxu0 0.0
        %1143 = vmatprep.subr.mxu0 0.0
        %1144 = vmatpush1.msra.mxu0 0.0
        %1145 = vmatprep.subr.mxu0 0.0
        %1146 = vmatpush1.msra.mxu0 0.0
        %1147 = vmatprep.subr.mxu0 0.0
        %1148 = vmatpush1.msra.mxu0 0.0
        %1149 = vmatprep.subr.mxu0 0.0
        %1150 = vmatpush1.msra.mxu0 0.0
        %1151 = vmatprep.subr.mxu0 0.0
        %1152 = vmatpush1.msra.mxu0 0.0
        %1153 = vmatprep.subr.mxu0 0.0
        %1154 = vmatpush1.msra.mxu0 0.0
        %1155 = vmatprep.subr.mxu0 0.0
        %1156 = vmatpush1.msra.mxu0 0.0
        %1157 = vmatprep.subr.mxu0 0.0
        %1158 = vmatpush1.msra.mxu0 0.0
        %1159 = vmatprep.subr.mxu0 0.0
        %1160 = vmatpush1.msra.mxu0 0.0
        %1161 = vmatprep.subr.mxu0 0.0
        %1162 = vmatpush1.msra.mxu0 0.0
        %1163 = vmatprep.subr.mxu0 0.0
        %1164 = vmatpush1.msra.mxu0 0.0
        %1165 = vmatprep.subr.mxu0 0.0
        %1166 = vmatpush1.msra.mxu0 0.0
        %1167 = vmatprep.subr.mxu0 0.0
        %1168 = vmatpush1.msra.mxu0 0.0
        %1169 = vmatprep.subr.mxu0 0.0
        %1170 = vmatpush1.msra.mxu0 0.0
        %1171 = vmatprep.subr.mxu0 0.0
        %1172 = vmatpush1.msra.mxu0 0.0
        %1173 = vmatprep.mubr.f32.mxu0 0.0
        %1174 = vmatmul.mubr.f32.gmra.mrb[0].mxu0 %v1040
        %v1175 = vpop.f32.mrb[0].mxu0
        %v1176 = vadd.f32 %v1097, %v1175
        %v1177 = vpop.f32.mrb[0].mxu0
        %v1178 = vadd.f32 %v1101, %v1177
        %1179 = vmatprep.mubr.f32.mxu0 0.0
        %1180 = vmatmul.mubr.f32.gmra.mrb[0].mxu0 %v1041
        %v1181 = vpop.f32.mrb[0].mxu0
        %v1182 = vadd.f32 %v1097, %v1181
        %v1183 = vpop.f32.mrb[0].mxu0
        %v1184 = vadd.f32 %v1101, %v1183
        %1185 = vmatprep.mubr.f32.mxu0 0.0
        %1186 = vmatmul.mubr.f32.gmra.mrb[0].mxu0 %v1042
        %v1187 = vpop.f32.mrb[0].mxu0
        %v1188 = vadd.f32 %v1097, %v1187
        %v1189 = vpop.f32.mrb[0].mxu0
        %v1190 = vadd.f32 %v1101, %v1189
        %1191 = vmatprep.mubr.f32.mxu0 0.0
        %1192 = vmatmul.mubr.f32.gmra.mrb[0].mxu0 %v1043
        %v1193 = vpop.f32.mrb[0].mxu0
        %v1194 = vadd.f32 %v1097, %v1193
        %v1195 = vpop.f32.mrb[0].mxu0
        %v1196 = vadd.f32 %v1101, %v1195
        %1197 = vdwg.mxu0
        %1198 = vmatprep.subr.mxu0 0.0
        %1199 = vmatpush1.msra.mxu0 %v1046
        %1200 = vmatprep.subr.mxu0 0.0
        %1201 = vmatpush1.msra.mxu0 %v1049
        %1202 = vmatprep.subr.mxu0 0.0
        %1203 = vmatpush1.msra.mxu0 %v1052
        %1204 = vmatprep.subr.mxu0 0.0
        %1205 = vmatpush1.msra.mxu0 %v1055
        %1206 = vmatprep.subr.mxu0 0.0
        %1207 = vmatpush1.msra.mxu0 %v1058
        %1208 = vmatprep.subr.mxu0 0.0
        %1209 = vmatpush1.msra.mxu0 %v1061
        %1210 = vmatprep.subr.mxu0 0.0
        %1211 = vmatpush1.msra.mxu0 %v1064
        %1212 = vmatprep.subr.mxu0 0.0
        %1213 = vmatpush1.msra.mxu0 %v1067
        %1214 = vmatprep.subr.mxu0 0.0
        %1215 = vmatpush1.msra.mxu0 %v1070
        %1216 = vmatprep.subr.mxu0 0.0
        %1217 = vmatpush1.msra.mxu0 %v1073
        %1218 = vmatprep.subr.mxu0 0.0
        %1219 = vmatpush1.msra.mxu0 %v1076
        %1220 = vmatprep.subr.mxu0 0.0
        %1221 = vmatpush1.msra.mxu0 %v1079
        %1222 = vmatprep.subr.mxu0 0.0
        %1223 = vmatpush1.msra.mxu0 %v1082
        %1224 = vmatprep.subr.mxu0 0.0
        %1225 = vmatpush1.msra.mxu0 %v1085
        %1226 = vmatprep.subr.mxu0 0.0
        %1227 = vmatpush1.msra.mxu0 %v1088
        %1228 = vmatprep.subr.mxu0 0.0
        %1229 = vmatpush1.msra.mxu0 %v1091
        %1230 = vmatprep.subr.mxu0 0.0
        %1231 = vmatpush1.msra.mxu0 0.0
        %1232 = vmatprep.subr.mxu0 0.0
        %1233 = vmatpush1.msra.mxu0 0.0
        %1234 = vmatprep.subr.mxu0 0.0
        %1235 = vmatpush1.msra.mxu0 0.0
        %1236 = vmatprep.subr.mxu0 0.0
        %1237 = vmatpush1.msra.mxu0 0.0
        %1238 = vmatprep.subr.mxu0 0.0
        %1239 = vmatpush1.msra.mxu0 0.0
        %1240 = vmatprep.subr.mxu0 0.0
        %1241 = vmatpush1.msra.mxu0 0.0
        %1242 = vmatprep.subr.mxu0 0.0
        %1243 = vmatpush1.msra.mxu0 0.0
        %1244 = vmatprep.subr.mxu0 0.0
        %1245 = vmatpush1.msra.mxu0 0.0
        %1246 = vmatprep.subr.mxu0 0.0
        %1247 = vmatpush1.msra.mxu0 0.0
        %1248 = vmatprep.subr.mxu0 0.0
        %1249 = vmatpush1.msra.mxu0 0.0
        %1250 = vmatprep.subr.mxu0 0.0
        %1251 = vmatpush1.msra.mxu0 0.0
        %1252 = vmatprep.subr.mxu0 0.0
        %1253 = vmatpush1.msra.mxu0 0.0
        %1254 = vmatprep.subr.mxu0 0.0
        %1255 = vmatpush1.msra.mxu0 0.0
        %1256 = vmatprep.subr.mxu0 0.0
        %1257 = vmatpush1.msra.mxu0 0.0
        %1258 = vmatprep.subr.mxu0 0.0
        %1259 = vmatpush1.msra.mxu0 0.0
        %1260 = vmatprep.subr.mxu0 0.0
        %1261 = vmatpush1.msra.mxu0 0.0
        %1262 = vmatprep.mubr.f32.mxu0 0.0
        %1263 = vmatmul.mubr.f32.gmra.mrb[0].mxu0 %v1040
        %v1264 = vpop.f32.mrb[0].mxu0
        %v1265 = vadd.f32 %v1105, %v1264
        %v1266 = vpop.f32.mrb[0].mxu0
        %1267 = vmatprep.mubr.f32.mxu0 0.0
        %1268 = vmatmul.mubr.f32.gmra.mrb[0].mxu0 %v1041
        %v1269 = vpop.f32.mrb[0].mxu0
        %v1270 = vadd.f32 %v1105, %v1269
        %v1271 = vpop.f32.mrb[0].mxu0
        %1272 = vmatprep.mubr.f32.mxu0 0.0
        %1273 = vmatmul.mubr.f32.gmra.mrb[0].mxu0 %v1042
        %v1274 = vpop.f32.mrb[0].mxu0
        %v1275 = vadd.f32 %v1105, %v1274
        %v1276 = vpop.f32.mrb[0].mxu0
        %1277 = vmatprep.mubr.f32.mxu0 0.0
        %1278 = vmatmul.mubr.f32.gmra.mrb[0].mxu0 %v1043
        %v1279 = vpop.f32.mrb[0].mxu0
        %v1280 = vadd.f32 %v1105, %v1279
        %v1281 = vpop.f32.mrb[0].mxu0
        %1282 = vdwg.mxu0
        %v1283 = vld [vmem:[%s17] sm:$0xff]
        %v1284 = vld [vmem:[%s17 + $0x8] sm:$0xff]
        %v1285 = vld [vmem:[%s18] sm:$0xff]
        %v1286 = vld [vmem:[%s18 + $0x8] sm:$0xff]
        %v1287 = vmul.f32 %v1176, %v1283
        %v1288 = vmul.f32 %v1182, %v1284
        %v1289 = vmul.f32 %v1188, %v1283
        %v1290 = vmul.f32 %v1194, %v1284
        %v1291 = vmul.f32 %v1178, %v1285
        %v1292 = vmul.f32 %v1184, %v1286
        %v1293 = vmul.f32 %v1190, %v1285
        %v1294 = vmul.f32 %v1196, %v1286
        %v1295 = vadd.f32 %v1287, %v1291
        %v1296 = vadd.f32 %v1288, %v1292
        %v1297 = vadd.f32 %v1289, %v1293
        %v1298 = vadd.f32 %v1290, %v1294
        %v1301 = vrot.slane %v833, 7
        %vm1302 = vcmask 1041409
        %v1303 = vsel %vm1302, %v1301, %v831
        %vm1305 = vcmask 1041408
        %v1306 = vsel %vm1305, %v1303, 0.0
        %1307 = vadd.xlane.f32.xlu0 %v1306
        %v1308 = vpop.xlane.xlu0 %1307
        %v1309 = vmul.f32 %v1308, %v987
        %v1311 = vrot.slane %v1309, 1
        %v1314 = vsub.f32 %v831, %v1309
        %v1315 = vsub.f32 %v833, %v1311
        %v1316 = vmul.f32 %v1314, %v1314
        %v1317 = vmul.f32 %v1315, %v1315
        %v1320 = vrot.slane %v1317, 7
        %v1321 = vsel %vm1302, %v1320, %v1316
        %v1323 = vsel %vm1305, %v1321, 0.0
        %1324 = vadd.xlane.f32.xlu0 %v1323
        %v1325 = vpop.xlane.xlu0 %1324
        %v1326 = vmul.f32 %v1325, %v987
        %v1327 = vadd.f32 %v1326, 1e-05
        %v1328 = vrsqrt.pop %v1327
        %v1330 = vrot.slane %v1328, 1
        %v1333 = vmul.f32 %v1314, %v1328
        %v1334 = vmul.f32 %v1315, %v1330
        %v1335 = vmul.f32 %v1333, %v1028
        %v1336 = vmul.f32 %v1334, %v1028
        %v1337 = vadd.f32 %v1335, %v1038
        %v1338 = vadd.f32 %v1336, %v1038
        %v1339 = vld [vmem:[#allocation7] sm:$0xff]
        %v1340 = vld [vmem:[#allocation7 + $0x8] sm:$0xff]
        %v1341 = vld [vmem:[#allocation7 + $0x10] sm:$0xff]
        %v1342 = vld [vmem:[#allocation7 + $0x18] sm:$0xff]
        %v1343 = vld [vmem:[#allocation7 + $0x20] sm:$0xff]
        %v1344 = vld [vmem:[#allocation7 + $0x28] sm:$0xff]
        %v1345 = vld [vmem:[#allocation7 + $0x30] sm:$0xff]
        %v1346 = vld [vmem:[#allocation7 + $0x38] sm:$0xff]
        %v1347 = vld [vmem:[#allocation7 + $0x40] sm:$0xff]
        %v1348 = vld [vmem:[#allocation7 + $0x48] sm:$0xff]
        %v1349 = vld [vmem:[#allocation7 + $0x50] sm:$0xff]
        %v1350 = vld [vmem:[#allocation7 + $0x58] sm:$0xff]
        %v1351 = vld [vmem:[#allocation7 + $0x60] sm:$0xff]
        %v1352 = vld [vmem:[#allocation7 + $0x68] sm:$0xff]
        %v1353 = vld [vmem:[#allocation7 + $0x70] sm:$0xff]
        %v1354 = vld [vmem:[#allocation7 + $0x78] sm:$0xff]
        %v1355 = vld [vmem:[#allocation8] sm:$0x1]
        %v1357 = vlaneseq
        %v1358 = vshrl.u32 %v1357, 7
        %v1359 = vsub.s32 0, %v1358
        %v1360 = vrot.slane %v1355, %v1359
        %v1364 = vrot.slane %v1338, 7
        %v1365 = vsel %vm1302, %v1364, %v1337
        %1367 = vmatprep.subr.mxu0 0.0
        %1368 = vmatpush1.msra.mxu0 %v1339
        %1369 = vmatprep.subr.mxu0 0.0
        %1370 = vmatpush1.msra.mxu0 %v1340
        %1371 = vmatprep.subr.mxu0 0.0
        %1372 = vmatpush1.msra.mxu0 %v1341
        %1373 = vmatprep.subr.mxu0 0.0
        %1374 = vmatpush1.msra.mxu0 %v1342
        %1375 = vmatprep.subr.mxu0 0.0
        %1376 = vmatpush1.msra.mxu0 %v1343
        %1377 = vmatprep.subr.mxu0 0.0
        %1378 = vmatpush1.msra.mxu0 %v1344
        %1379 = vmatprep.subr.mxu0 0.0
        %1380 = vmatpush1.msra.mxu0 %v1345
        %1381 = vmatprep.subr.mxu0 0.0
        %1382 = vmatpush1.msra.mxu0 %v1346
        %1383 = vmatprep.subr.mxu0 0.0
        %1384 = vmatpush1.msra.mxu0 %v1347
        %1385 = vmatprep.subr.mxu0 0.0
        %1386 = vmatpush1.msra.mxu0 %v1348
        %1387 = vmatprep.subr.mxu0 0.0
        %1388 = vmatpush1.msra.mxu0 %v1349
        %1389 = vmatprep.subr.mxu0 0.0
        %1390 = vmatpush1.msra.mxu0 %v1350
        %1391 = vmatprep.subr.mxu0 0.0
        %1392 = vmatpush1.msra.mxu0 %v1351
        %1393 = vmatprep.subr.mxu0 0.0
        %1394 = vmatpush1.msra.mxu0 %v1352
        %1395 = vmatprep.subr.mxu0 0.0
        %1396 = vmatpush1.msra.mxu0 %v1353
        %1397 = vmatprep.subr.mxu0 0.0
        %1398 = vmatpush1.msra.mxu0 %v1354
        %1399 = vmatprep.subr.mxu0 0.0
        %1400 = vmatpush1.msra.mxu0 0.0
        %1401 = vmatprep.subr.mxu0 0.0
        %1402 = vmatpush1.msra.mxu0 0.0
        %1403 = vmatprep.subr.mxu0 0.0
        %1404 = vmatpush1.msra.mxu0 0.0
        %1405 = vmatprep.subr.mxu0 0.0
        %1406 = vmatpush1.msra.mxu0 0.0
        %1407 = vmatprep.subr.mxu0 0.0
        %1408 = vmatpush1.msra.mxu0 0.0
        %1409 = vmatprep.subr.mxu0 0.0
        %1410 = vmatpush1.msra.mxu0 0.0
        %1411 = vmatprep.subr.mxu0 0.0
        %1412 = vmatpush1.msra.mxu0 0.0
        %1413 = vmatprep.subr.mxu0 0.0
        %1414 = vmatpush1.msra.mxu0 0.0
        %1415 = vmatprep.subr.mxu0 0.0
        %1416 = vmatpush1.msra.mxu0 0.0
        %1417 = vmatprep.subr.mxu0 0.0
        %1418 = vmatpush1.msra.mxu0 0.0
        %1419 = vmatprep.subr.mxu0 0.0
        %1420 = vmatpush1.msra.mxu0 0.0
        %1421 = vmatprep.subr.mxu0 0.0
        %1422 = vmatpush1.msra.mxu0 0.0
        %1423 = vmatprep.subr.mxu0 0.0
        %1424 = vmatpush1.msra.mxu0 0.0
        %1425 = vmatprep.subr.mxu0 0.0
        %1426 = vmatpush1.msra.mxu0 0.0
        %1427 = vmatprep.subr.mxu0 0.0
        %1428 = vmatpush1.msra.mxu0 0.0
        %1429 = vmatprep.subr.mxu0 0.0
        %1430 = vmatpush1.msra.mxu0 0.0
        %1431 = vmatprep.mubr.f32.mxu0 0.0
        %1432 = vmatmul.mubr.f32.gmra.mrb[0].mxu0 %v1365
        %v1433 = vpop.f32.mrb[0].mxu0
        %v1434 = vadd.f32 %v1360, %v1433
        %v1435 = vpop.f32.mrb[0].mxu0
        %1436 = vdwg.mxu0
        %v1437 = vld [vmem:[%s19] sm:$0xf]
        %v1440 = vunpack.c.l.s4 1966171168
        %v1441 = vunpack.c.0.s8 %v1440
        %v1442 = vlaneseq
        %v1443 = vshrl.u32 %v1442, 7
        %v1444 = vsub.s32 %v1441, %v1443
        %v1445 = vrot.slane %v1434, %v1444
        %v1446 = vcombine.high %v1445, %v1445
        %v1448 = vunpack.c.l.s4 1966171168
        %v1449 = vunpack.c.0.s8 %v1448
        %v1450 = vlaneseq
        %v1451 = vshrl.u32 %v1450, 7
        %v1452 = vsub.s32 %v1449, %v1451
        %v1453 = vrot.slane %v1445, %v1452
        %v1455 = vunpack.c.l.s4 1966171168
        %v1456 = vunpack.c.0.s8 %v1455
        %v1457 = vlaneseq
        %v1458 = vshrl.u32 %v1457, 7
        %v1459 = vsub.s32 %v1456, %v1458
        %v1460 = vrot.slane %v1446, %v1459
        %v1461 = vlaneseq
        %v1462 = vshrl.u32 %v1461, 7
        %v1463 = vsub.s32 0, %v1462
        %v1464 = vrot.slane %v1453, %v1463
        %v1465 = vlaneseq
        %v1466 = vshrl.u32 %v1465, 7
        %v1467 = vsub.s32 0, %v1466
        %v1468 = vrot.slane %v1460, %v1467
        %v1471 = vmul.f32 %v1464, %v1437
        %v1472 = vmul.f32 %v1468, %v1437
        %1473 = vmatprep.subr.mxu0 0.0
        %1474 = vmatpush1.xpose.msra.mxu0 %v1295
        %1475 = vmatprep.subr.mxu0 0.0
        %1476 = vmatpush1.xpose.msra.mxu0 %v1296
        %1477 = vmatprep.subr.mxu0 0.0
        %1478 = vmatpush1.xpose.msra.mxu0 0.0
        %1479 = vmatprep.subr.mxu0 0.0
        %1480 = vmatpush1.xpose.msra.mxu0 0.0
        %1481 = vmatprep.subr.mxu0 0.0
        %1482 = vmatpush1.xpose.msra.mxu0 0.0
        %1483 = vmatprep.subr.mxu0 0.0
        %1484 = vmatpush1.xpose.msra.mxu0 0.0
        %1485 = vmatprep.subr.mxu0 0.0
        %1486 = vmatpush1.xpose.msra.mxu0 0.0
        %1487 = vmatprep.subr.mxu0 0.0
        %1488 = vmatpush1.xpose.msra.mxu0 0.0
        %1489 = vmatprep.subr.mxu0 0.0
        %1490 = vmatpush1.xpose.msra.mxu0 0.0
        %1491 = vmatprep.subr.mxu0 0.0
        %1492 = vmatpush1.xpose.msra.mxu0 0.0
        %1493 = vmatprep.subr.mxu0 0.0
        %1494 = vmatpush1.xpose.msra.mxu0 0.0
        %1495 = vmatprep.subr.mxu0 0.0
        %1496 = vmatpush1.xpose.msra.mxu0 0.0
        %1497 = vmatprep.subr.mxu0 0.0
        %1498 = vmatpush1.xpose.msra.mxu0 0.0
        %1499 = vmatprep.subr.mxu0 0.0
        %1500 = vmatpush1.xpose.msra.mxu0 0.0
        %1501 = vmatprep.subr.mxu0 0.0
        %1502 = vmatpush1.xpose.msra.mxu0 0.0
        %1503 = vmatprep.subr.mxu0 0.0
        %1504 = vmatpush1.xpose.msra.mxu0 0.0
        %1505 = vmatprep.subr.mxu0 0.0
        %1506 = vmatpush1.xpose.msra.mxu0 0.0
        %1507 = vmatprep.subr.mxu0 0.0
        %1508 = vmatpush1.xpose.msra.mxu0 0.0
        %1509 = vmatprep.subr.mxu0 0.0
        %1510 = vmatpush1.xpose.msra.mxu0 0.0
        %1511 = vmatprep.subr.mxu0 0.0
        %1512 = vmatpush1.xpose.msra.mxu0 0.0
        %1513 = vmatprep.subr.mxu0 0.0
        %1514 = vmatpush1.xpose.msra.mxu0 0.0
        %1515 = vmatprep.subr.mxu0 0.0
        %1516 = vmatpush1.xpose.msra.mxu0 0.0
        %1517 = vmatprep.subr.mxu0 0.0
        %1518 = vmatpush1.xpose.msra.mxu0 0.0
        %1519 = vmatprep.subr.mxu0 0.0
        %1520 = vmatpush1.xpose.msra.mxu0 0.0
        %1521 = vmatprep.subr.mxu0 0.0
        %1522 = vmatpush1.xpose.msra.mxu0 0.0
        %1523 = vmatprep.subr.mxu0 0.0
        %1524 = vmatpush1.xpose.msra.mxu0 0.0
        %1525 = vmatprep.subr.mxu0 0.0
        %1526 = vmatpush1.xpose.msra.mxu0 0.0
        %1527 = vmatprep.subr.mxu0 0.0
        %1528 = vmatpush1.xpose.msra.mxu0 0.0
        %1529 = vmatprep.subr.mxu0 0.0
        %1530 = vmatpush1.xpose.msra.mxu0 0.0
        %1531 = vmatprep.subr.mxu0 0.0
        %1532 = vmatpush1.xpose.msra.mxu0 0.0
        %1533 = vmatprep.subr.mxu0 0.0
        %1534 = vmatpush1.xpose.msra.mxu0 0.0
        %1535 = vmatprep.subr.mxu0 0.0
        %1536 = vmatpush1.xpose.msra.mxu0 0.0
        %1537 = vmatprep.mubr.f32.mxu0 0.0
        %1538 = vmatmul.mubr.f32.gmra.mrb[0].mxu0 %v1471
        %v1539 = vpop.f32.mrb[0].mxu0
        %v1540 = vadd.f32 0.0, %v1539
        %v1541 = vpop.f32.mrb[0].mxu0
        %1542 = vdwg.mxu0
        %1543 = vmatprep.subr.mxu0 0.0
        %1544 = vmatpush1.xpose.msra.mxu0 %v1297
        %1545 = vmatprep.subr.mxu0 0.0
        %1546 = vmatpush1.xpose.msra.mxu0 %v1298
        %1547 = vmatprep.subr.mxu0 0.0
        %1548 = vmatpush1.xpose.msra.mxu0 0.0
        %1549 = vmatprep.subr.mxu0 0.0
        %1550 = vmatpush1.xpose.msra.mxu0 0.0
        %1551 = vmatprep.subr.mxu0 0.0
        %1552 = vmatpush1.xpose.msra.mxu0 0.0
        %1553 = vmatprep.subr.mxu0 0.0
        %1554 = vmatpush1.xpose.msra.mxu0 0.0
        %1555 = vmatprep.subr.mxu0 0.0
        %1556 = vmatpush1.xpose.msra.mxu0 0.0
        %1557 = vmatprep.subr.mxu0 0.0
        %1558 = vmatpush1.xpose.msra.mxu0 0.0
        %1559 = vmatprep.subr.mxu0 0.0
        %1560 = vmatpush1.xpose.msra.mxu0 0.0
        %1561 = vmatprep.subr.mxu0 0.0
        %1562 = vmatpush1.xpose.msra.mxu0 0.0
        %1563 = vmatprep.subr.mxu0 0.0
        %1564 = vmatpush1.xpose.msra.mxu0 0.0
        %1565 = vmatprep.subr.mxu0 0.0
        %1566 = vmatpush1.xpose.msra.mxu0 0.0
        %1567 = vmatprep.subr.mxu0 0.0
        %1568 = vmatpush1.xpose.msra.mxu0 0.0
        %1569 = vmatprep.subr.mxu0 0.0
        %1570 = vmatpush1.xpose.msra.mxu0 0.0
        %1571 = vmatprep.subr.mxu0 0.0
        %1572 = vmatpush1.xpose.msra.mxu0 0.0
        %1573 = vmatprep.subr.mxu0 0.0
        %1574 = vmatpush1.xpose.msra.mxu0 0.0
        %1575 = vmatprep.subr.mxu0 0.0
        %1576 = vmatpush1.xpose.msra.mxu0 0.0
        %1577 = vmatprep.subr.mxu0 0.0
        %1578 = vmatpush1.xpose.msra.mxu0 0.0
        %1579 = vmatprep.subr.mxu0 0.0
        %1580 = vmatpush1.xpose.msra.mxu0 0.0
        %1581 = vmatprep.subr.mxu0 0.0
        %1582 = vmatpush1.xpose.msra.mxu0 0.0
        %1583 = vmatprep.subr.mxu0 0.0
        %1584 = vmatpush1.xpose.msra.mxu0 0.0
        %1585 = vmatprep.subr.mxu0 0.0
        %1586 = vmatpush1.xpose.msra.mxu0 0.0
        %1587 = vmatprep.subr.mxu0 0.0
        %1588 = vmatpush1.xpose.msra.mxu0 0.0
        %1589 = vmatprep.subr.mxu0 0.0
        %1590 = vmatpush1.xpose.msra.mxu0 0.0
        %1591 = vmatprep.subr.mxu0 0.0
        %1592 = vmatpush1.xpose.msra.mxu0 0.0
        %1593 = vmatprep.subr.mxu0 0.0
        %1594 = vmatpush1.xpose.msra.mxu0 0.0
        %1595 = vmatprep.subr.mxu0 0.0
        %1596 = vmatpush1.xpose.msra.mxu0 0.0
        %1597 = vmatprep.subr.mxu0 0.0
        %1598 = vmatpush1.xpose.msra.mxu0 0.0
        %1599 = vmatprep.subr.mxu0 0.0
        %1600 = vmatpush1.xpose.msra.mxu0 0.0
        %1601 = vmatprep.subr.mxu0 0.0
        %1602 = vmatpush1.xpose.msra.mxu0 0.0
        %1603 = vmatprep.subr.mxu0 0.0
        %1604 = vmatpush1.xpose.msra.mxu0 0.0
        %1605 = vmatprep.subr.mxu0 0.0
        %1606 = vmatpush1.xpose.msra.mxu0 0.0
        %1607 = vmatprep.mubr.f32.mxu0 0.0
        %1608 = vmatmul.mubr.f32.gmra.mrb[0].mxu0 %v1472
        %v1609 = vpop.f32.mrb[0].mxu0
        %v1610 = vadd.f32 0.0, %v1609
        %v1611 = vpop.f32.mrb[0].mxu0
        %1612 = vdwg.mxu0
        %v1613 = vsel %vm975, 1, 0
        %v1614 = vsel %vm976, 1, 0
        %v1615 = vlaneseq
        %v1616 = vshrl.u32 %v1615, 7
        %v1617 = vsub.s32 0, %v1616
        %v1618 = vrot.slane %v1613, %v1617
        %v1619 = vlaneseq
        %v1620 = vshrl.u32 %v1619, 7
        %v1621 = vsub.s32 0, %v1620
        %v1622 = vrot.slane %v1614, %v1621
        %vm1623 = vcmp.eq.s32.totalorder %v1618, 1
        %vm1624 = vcmp.eq.s32.totalorder %v1622, 1
        %v1625 = vsel %vm1623, -1e+30, %v1540
        %v1626 = vsel %vm1624, -1e+30, %v1610
        %vm1627 = vcmask 125952
        %v1628 = vsel %vm1627, %v1625, -inf
        %1629 = vmax.xlane.f32.xlu0 %v1628
        %v1630 = vpop.xlane.xlu0 %1629
        %v1631 = vsel %vm1627, %v1626, -inf
        %1632 = vmax.xlane.f32.xlu0 %v1631
        %v1633 = vpop.xlane.xlu0 %1632
        %v1634 = vsub.f32 %v1625, %v1630
        %v1635 = vsub.f32 %v1626, %v1633
        %v1636 = vmul.f32 %v1634, 1.442695
        %v1637 = vpow.pop %v1636
        %v1638 = vmul.f32 %v1635, 1.442695
        %v1639 = vpow.pop %v1638
        %v1640 = vsel %vm1627, %v1637, 0.0
        %1641 = vadd.xlane.f32.xlu0 %v1640
        %v1642 = vpop.xlane.xlu0 %1641
        %v1643 = vsel %vm1627, %v1639, 0.0
        %1644 = vadd.xlane.f32.xlu0 %v1643
        %v1645 = vpop.xlane.xlu0 %1644
        %v1646 = vrcp.pop %v1642
        %v1647 = vmul.f32 %v1637, %v1646
        %v1648 = vrcp.pop %v1645
        %v1649 = vmul.f32 %v1639, %v1648
        %vm1650 = vcmask 130048
        %v1652 = vsel %vm1650, %v1647, 0
        %1654 = vmatprep.subr.mxu0 0.0
        %1655 = vmatpush1.msra.mxu0 %v1265
        %1656 = vmatprep.subr.mxu0 0.0
        %1657 = vmatpush1.msra.mxu0 %v1270
        %1658 = vmatprep.subr.mxu0 0.0
        %1659 = vmatpush1.msra.mxu0 0.0
        %1660 = vmatprep.subr.mxu0 0.0
        %1661 = vmatpush1.msra.mxu0 0.0
        %1662 = vmatprep.subr.mxu0 0.0
        %1663 = vmatpush1.msra.mxu0 0.0
        %1664 = vmatprep.subr.mxu0 0.0
        %1665 = vmatpush1.msra.mxu0 0.0
        %1666 = vmatprep.subr.mxu0 0.0
        %1667 = vmatpush1.msra.mxu0 0.0
        %1668 = vmatprep.subr.mxu0 0.0
        %1669 = vmatpush1.msra.mxu0 0.0
        %1670 = vmatprep.subr.mxu0 0.0
        %1671 = vmatpush1.msra.mxu0 0.0
        %1672 = vmatprep.subr.mxu0 0.0
        %1673 = vmatpush1.msra.mxu0 0.0
        %1674 = vmatprep.subr.mxu0 0.0
        %1675 = vmatpush1.msra.mxu0 0.0
        %1676 = vmatprep.subr.mxu0 0.0
        %1677 = vmatpush1.msra.mxu0 0.0
        %1678 = vmatprep.subr.mxu0 0.0
        %1679 = vmatpush1.msra.mxu0 0.0
        %1680 = vmatprep.subr.mxu0 0.0
        %1681 = vmatpush1.msra.mxu0 0.0
        %1682 = vmatprep.subr.mxu0 0.0
        %1683 = vmatpush1.msra.mxu0 0.0
        %1684 = vmatprep.subr.mxu0 0.0
        %1685 = vmatpush1.msra.mxu0 0.0
        %1686 = vmatprep.subr.mxu0 0.0
        %1687 = vmatpush1.msra.mxu0 0.0
        %1688 = vmatprep.subr.mxu0 0.0
        %1689 = vmatpush1.msra.mxu0 0.0
        %1690 = vmatprep.subr.mxu0 0.0
        %1691 = vmatpush1.msra.mxu0 0.0
        %1692 = vmatprep.subr.mxu0 0.0
        %1693 = vmatpush1.msra.mxu0 0.0
        %1694 = vmatprep.subr.mxu0 0.0
        %1695 = vmatpush1.msra.mxu0 0.0
        %1696 = vmatprep.subr.mxu0 0.0
        %1697 = vmatpush1.msra.mxu0 0.0
        %1698 = vmatprep.subr.mxu0 0.0
        %1699 = vmatpush1.msra.mxu0 0.0
        %1700 = vmatprep.subr.mxu0 0.0
        %1701 = vmatpush1.msra.mxu0 0.0
        %1702 = vmatprep.subr.mxu0 0.0
        %1703 = vmatpush1.msra.mxu0 0.0
        %1704 = vmatprep.subr.mxu0 0.0
        %1705 = vmatpush1.msra.mxu0 0.0
        %1706 = vmatprep.subr.mxu0 0.0
        %1707 = vmatpush1.msra.mxu0 0.0
        %1708 = vmatprep.subr.mxu0 0.0
        %1709 = vmatpush1.msra.mxu0 0.0
        %1710 = vmatprep.subr.mxu0 0.0
        %1711 = vmatpush1.msra.mxu0 0.0
        %1712 = vmatprep.subr.mxu0 0.0
        %1713 = vmatpush1.msra.mxu0 0.0
        %1714 = vmatprep.subr.mxu0 0.0
        %1715 = vmatpush1.msra.mxu0 0.0
        %1716 = vmatprep.subr.mxu0 0.0
        %1717 = vmatpush1.msra.mxu0 0.0
        %1718 = vmatprep.mubr.f32.mxu0 0.0
        %1719 = vmatmul.mubr.f32.gmra.mrb[0].mxu0 %v1652
        %v1720 = vpop.f32.mrb[0].mxu0
        %v1721 = vadd.f32 0.0, %v1720
        %v1722 = vpop.f32.mrb[0].mxu0
        %1723 = vdwg.mxu0
        %v1725 = vsel %vm1650, %v1649, 0
        %1727 = vmatprep.subr.mxu0 0.0
        %1728 = vmatpush1.msra.mxu0 %v1275
        %1729 = vmatprep.subr.mxu0 0.0
        %1730 = vmatpush1.msra.mxu0 %v1280
        %1731 = vmatprep.subr.mxu0 0.0
        %1732 = vmatpush1.msra.mxu0 0.0
        %1733 = vmatprep.subr.mxu0 0.0
        %1734 = vmatpush1.msra.mxu0 0.0
        %1735 = vmatprep.subr.mxu0 0.0
        %1736 = vmatpush1.msra.mxu0 0.0
        %1737 = vmatprep.subr.mxu0 0.0
        %1738 = vmatpush1.msra.mxu0 0.0
        %1739 = vmatprep.subr.mxu0 0.0
        %1740 = vmatpush1.msra.mxu0 0.0
        %1741 = vmatprep.subr.mxu0 0.0
        %1742 = vmatpush1.msra.mxu0 0.0
        %1743 = vmatprep.subr.mxu0 0.0
        %1744 = vmatpush1.msra.mxu0 0.0
        %1745 = vmatprep.subr.mxu0 0.0
        %1746 = vmatpush1.msra.mxu0 0.0
        %1747 = vmatprep.subr.mxu0 0.0
        %1748 = vmatpush1.msra.mxu0 0.0
        %1749 = vmatprep.subr.mxu0 0.0
        %1750 = vmatpush1.msra.mxu0 0.0
        %1751 = vmatprep.subr.mxu0 0.0
        %1752 = vmatpush1.msra.mxu0 0.0
        %1753 = vmatprep.subr.mxu0 0.0
        %1754 = vmatpush1.msra.mxu0 0.0
        %1755 = vmatprep.subr.mxu0 0.0
        %1756 = vmatpush1.msra.mxu0 0.0
        %1757 = vmatprep.subr.mxu0 0.0
        %1758 = vmatpush1.msra.mxu0 0.0
        %1759 = vmatprep.subr.mxu0 0.0
        %1760 = vmatpush1.msra.mxu0 0.0
        %1761 = vmatprep.subr.mxu0 0.0
        %1762 = vmatpush1.msra.mxu0 0.0
        %1763 = vmatprep.subr.mxu0 0.0
        %1764 = vmatpush1.msra.mxu0 0.0
        %1765 = vmatprep.subr.mxu0 0.0
        %1766 = vmatpush1.msra.mxu0 0.0
        %1767 = vmatprep.subr.mxu0 0.0
        %1768 = vmatpush1.msra.mxu0 0.0
        %1769 = vmatprep.subr.mxu0 0.0
        %1770 = vmatpush1.msra.mxu0 0.0
        %1771 = vmatprep.subr.mxu0 0.0
        %1772 = vmatpush1.msra.mxu0 0.0
        %1773 = vmatprep.subr.mxu0 0.0
        %1774 = vmatpush1.msra.mxu0 0.0
        %1775 = vmatprep.subr.mxu0 0.0
        %1776 = vmatpush1.msra.mxu0 0.0
        %1777 = vmatprep.subr.mxu0 0.0
        %1778 = vmatpush1.msra.mxu0 0.0
        %1779 = vmatprep.subr.mxu0 0.0
        %1780 = vmatpush1.msra.mxu0 0.0
        %1781 = vmatprep.subr.mxu0 0.0
        %1782 = vmatpush1.msra.mxu0 0.0
        %1783 = vmatprep.subr.mxu0 0.0
        %1784 = vmatpush1.msra.mxu0 0.0
        %1785 = vmatprep.subr.mxu0 0.0
        %1786 = vmatpush1.msra.mxu0 0.0
        %1787 = vmatprep.subr.mxu0 0.0
        %1788 = vmatpush1.msra.mxu0 0.0
        %1789 = vmatprep.subr.mxu0 0.0
        %1790 = vmatpush1.msra.mxu0 0.0
        %1791 = vmatprep.mubr.f32.mxu0 0.0
        %1792 = vmatmul.mubr.f32.gmra.mrb[0].mxu0 %v1725
        %v1793 = vpop.f32.mrb[0].mxu0
        %v1794 = vadd.f32 0.0, %v1793
        %v1795 = vpop.f32.mrb[0].mxu0
        %1796 = vdwg.mxu0
        %v1797 = vmul.f32 %v1721, %v1437
        %v1798 = vmul.f32 %v1794, %v1437
        %vm1799 = vcmask 1043456
        %v1800 = vsel %vm1799, %v1797, 0.0
        %v1801 = vrot.slane %v1800, 4
        %v1802 = vadd.f32 %v1800, %v1801
        %v1803 = vrot.slane %v1802, 2
        %v1804 = vadd.f32 %v1802, %v1803
        %v1805 = vrot.slane %v1804, 1
        %v1806 = vadd.f32 %v1804, %v1805
        %v1807 = vsel %vm1799, %v1798, 0.0
        %v1808 = vrot.slane %v1807, 4
        %v1809 = vadd.f32 %v1807, %v1808
        %v1810 = vrot.slane %v1809, 2
        %v1811 = vadd.f32 %v1809, %v1810
        %v1812 = vrot.slane %v1811, 1
        %v1813 = vadd.f32 %v1811, %v1812
        %v1814 = vld [vmem:[#allocation13] sm:$0xff]
        %v1815 = vld [vmem:[#allocation13 + $0x8] sm:$0xff]
        %v1816 = vld [vmem:[#allocation13 + $0x10] sm:$0xff]
        %v1817 = vld [vmem:[#allocation13 + $0x18] sm:$0xff]
        %v1818 = vld [vmem:[#allocation13 + $0x20] sm:$0xff]
        %v1819 = vld [vmem:[#allocation13 + $0x28] sm:$0xff]
        %v1820 = vld [vmem:[#allocation13 + $0x30] sm:$0xff]
        %v1821 = vld [vmem:[#allocation13 + $0x38] sm:$0xff]
        %v1822 = vld [vmem:[#allocation13 + $0x40] sm:$0xff]
        %v1823 = vld [vmem:[#allocation13 + $0x48] sm:$0xff]
        %v1824 = vld [vmem:[#allocation13 + $0x50] sm:$0xff]
        %v1825 = vld [vmem:[#allocation13 + $0x58] sm:$0xff]
        %v1826 = vld [vmem:[#allocation13 + $0x60] sm:$0xff]
        %v1827 = vld [vmem:[#allocation13 + $0x68] sm:$0xff]
        %v1828 = vld [vmem:[#allocation13 + $0x70] sm:$0xff]
        %v1829 = vld [vmem:[#allocation13 + $0x78] sm:$0xff]
        %v1830 = vld [vmem:[#allocation14] sm:$0x1]
        %v1832 = vlaneseq
        %v1833 = vshrl.u32 %v1832, 7
        %v1834 = vsub.s32 0, %v1833
        %v1835 = vrot.slane %v1830, %v1834
        %v1839 = vsel %vm1302, %v1813, %v1806
        %1841 = vmatprep.subr.mxu0 0.0
        %1842 = vmatpush1.msra.mxu0 %v1814
        %1843 = vmatprep.subr.mxu0 0.0
        %1844 = vmatpush1.msra.mxu0 %v1815
        %1845 = vmatprep.subr.mxu0 0.0
        %1846 = vmatpush1.msra.mxu0 %v1816
        %1847 = vmatprep.subr.mxu0 0.0
        %1848 = vmatpush1.msra.mxu0 %v1817
        %1849 = vmatprep.subr.mxu0 0.0
        %1850 = vmatpush1.msra.mxu0 %v1818
        %1851 = vmatprep.subr.mxu0 0.0
        %1852 = vmatpush1.msra.mxu0 %v1819
        %1853 = vmatprep.subr.mxu0 0.0
        %1854 = vmatpush1.msra.mxu0 %v1820
        %1855 = vmatprep.subr.mxu0 0.0
        %1856 = vmatpush1.msra.mxu0 %v1821
        %1857 = vmatprep.subr.mxu0 0.0
        %1858 = vmatpush1.msra.mxu0 %v1822
        %1859 = vmatprep.subr.mxu0 0.0
        %1860 = vmatpush1.msra.mxu0 %v1823
        %1861 = vmatprep.subr.mxu0 0.0
        %1862 = vmatpush1.msra.mxu0 %v1824
        %1863 = vmatprep.subr.mxu0 0.0
        %1864 = vmatpush1.msra.mxu0 %v1825
        %1865 = vmatprep.subr.mxu0 0.0
        %1866 = vmatpush1.msra.mxu0 %v1826
        %1867 = vmatprep.subr.mxu0 0.0
        %1868 = vmatpush1.msra.mxu0 %v1827
        %1869 = vmatprep.subr.mxu0 0.0
        %1870 = vmatpush1.msra.mxu0 %v1828
        %1871 = vmatprep.subr.mxu0 0.0
        %1872 = vmatpush1.msra.mxu0 %v1829
        %1873 = vmatprep.subr.mxu0 0.0
        %1874 = vmatpush1.msra.mxu0 0.0
        %1875 = vmatprep.subr.mxu0 0.0
        %1876 = vmatpush1.msra.mxu0 0.0
        %1877 = vmatprep.subr.mxu0 0.0
        %1878 = vmatpush1.msra.mxu0 0.0
        %1879 = vmatprep.subr.mxu0 0.0
        %1880 = vmatpush1.msra.mxu0 0.0
        %1881 = vmatprep.subr.mxu0 0.0
        %1882 = vmatpush1.msra.mxu0 0.0
        %1883 = vmatprep.subr.mxu0 0.0
        %1884 = vmatpush1.msra.mxu0 0.0
        %1885 = vmatprep.subr.mxu0 0.0
        %1886 = vmatpush1.msra.mxu0 0.0
        %1887 = vmatprep.subr.mxu0 0.0
        %1888 = vmatpush1.msra.mxu0 0.0
        %1889 = vmatprep.subr.mxu0 0.0
        %1890 = vmatpush1.msra.mxu0 0.0
        %1891 = vmatprep.subr.mxu0 0.0
        %1892 = vmatpush1.msra.mxu0 0.0
        %1893 = vmatprep.subr.mxu0 0.0
        %1894 = vmatpush1.msra.mxu0 0.0
        %1895 = vmatprep.subr.mxu0 0.0
        %1896 = vmatpush1.msra.mxu0 0.0
        %1897 = vmatprep.subr.mxu0 0.0
        %1898 = vmatpush1.msra.mxu0 0.0
        %1899 = vmatprep.subr.mxu0 0.0
        %1900 = vmatpush1.msra.mxu0 0.0
        %1901 = vmatprep.subr.mxu0 0.0
        %1902 = vmatpush1.msra.mxu0 0.0
        %1903 = vmatprep.subr.mxu0 0.0
        %1904 = vmatpush1.msra.mxu0 0.0
        %1905 = vmatprep.mubr.f32.mxu0 0.0
        %1906 = vmatmul.mubr.f32.gmra.mrb[0].mxu0 %v1839
        %v1907 = vpop.f32.mrb[0].mxu0
        %v1908 = vadd.f32 %v1835, %v1907
        %v1909 = vpop.f32.mrb[0].mxu0
        %1910 = vdwg.mxu0
        %v1912 = vrot.slane %v1908, 1
        %v1915 = vadd.f32 %v831, %v1908
        %v1916 = vadd.f32 %v833, %v1912
        %v1917 = vld [vmem:[#allocation16] sm:$0x1]
        %v1918 = vld [vmem:[#allocation17] sm:$0x1]
        %v1921 = vrot.slane %v1916, 7
        %v1922 = vsel %vm1302, %v1921, %v1915
        %v1924 = vsel %vm1305, %v1922, 0.0
        %1925 = vadd.xlane.f32.xlu0 %v1924
        %v1926 = vpop.xlane.xlu0 %1925
        %v1927 = vmul.f32 %v1926, %v987
        %v1929 = vrot.slane %v1927, 1
        %v1932 = vsub.f32 %v1915, %v1927
        %v1933 = vsub.f32 %v1916, %v1929
        %v1934 = vmul.f32 %v1932, %v1932
        %v1935 = vmul.f32 %v1933, %v1933
        %v1938 = vrot.slane %v1935, 7
        %v1939 = vsel %vm1302, %v1938, %v1934
        %v1941 = vsel %vm1305, %v1939, 0.0
        %1942 = vadd.xlane.f32.xlu0 %v1941
        %v1943 = vpop.xlane.xlu0 %1942
        %v1944 = vmul.f32 %v1943, %v987
        %v1945 = vadd.f32 %v1944, 1e-05
        %v1946 = vrsqrt.pop %v1945
        %v1948 = vrot.slane %v1946, 1
        %v1951 = vmul.f32 %v1932, %v1946
        %v1952 = vmul.f32 %v1933, %v1948
        %v1954 = vlaneseq
        %v1955 = vshrl.u32 %v1954, 7
        %v1956 = vsub.s32 0, %v1955
        %v1957 = vrot.slane %v1917, %v1956
        %v1959 = vmul.f32 %v1951, %v1957
        %v1960 = vmul.f32 %v1952, %v1957
        %v1962 = vlaneseq
        %v1963 = vshrl.u32 %v1962, 7
        %v1964 = vsub.s32 0, %v1963
        %v1965 = vrot.slane %v1918, %v1964
        %v1967 = vadd.f32 %v1959, %v1965
        %v1968 = vadd.f32 %v1960, %v1965
        %v1969 = vld [vmem:[#allocation19] sm:$0xff]
        %v1970 = vld [vmem:[#allocation19 + $0x8] sm:$0xff]
        %v1971 = vld [vmem:[#allocation19 + $0x10] sm:$0xff]
        %v1972 = vld [vmem:[#allocation19 + $0x18] sm:$0xff]
        %v1973 = vld [vmem:[#allocation19 + $0x20] sm:$0xff]
        %v1974 = vld [vmem:[#allocation19 + $0x28] sm:$0xff]
        %v1975 = vld [vmem:[#allocation19 + $0x30] sm:$0xff]
        %v1976 = vld [vmem:[#allocation19 + $0x38] sm:$0xff]
        %v1977 = vld [vmem:[#allocation19 + $0x40] sm:$0xff]
        %v1978 = vld [vmem:[#allocation19 + $0x48] sm:$0xff]
        %v1979 = vld [vmem:[#allocation19 + $0x50] sm:$0xff]
        %v1980 = vld [vmem:[#allocation19 + $0x58] sm:$0xff]
        %v1981 = vld [vmem:[#allocation19 + $0x60] sm:$0xff]
        %v1982 = vld [vmem:[#allocation19 + $0x68] sm:$0xff]
        %v1983 = vld [vmem:[#allocation19 + $0x70] sm:$0xff]
        %v1984 = vld [vmem:[#allocation19 + $0x78] sm:$0xff]
        %v1985 = vld [vmem:[#allocation19 + $0x80] sm:$0xff]
        %v1986 = vld [vmem:[#allocation19 + $0x88] sm:$0xff]
        %v1987 = vld [vmem:[#allocation19 + $0x90] sm:$0xff]
        %v1988 = vld [vmem:[#allocation19 + $0x98] sm:$0xff]
        %v1989 = vld [vmem:[#allocation19 + $0xa0] sm:$0xff]
        %v1990 = vld [vmem:[#allocation19 + $0xa8] sm:$0xff]
        %v1991 = vld [vmem:[#allocation19 + $0xb0] sm:$0xff]
        %v1992 = vld [vmem:[#allocation19 + $0xb8] sm:$0xff]
        %v1993 = vld [vmem:[#allocation19 + $0xc0] sm:$0xff]
        %v1994 = vld [vmem:[#allocation19 + $0xc8] sm:$0xff]
        %v1995 = vld [vmem:[#allocation19 + $0xd0] sm:$0xff]
        %v1996 = vld [vmem:[#allocation19 + $0xd8] sm:$0xff]
        %v1997 = vld [vmem:[#allocation19 + $0xe0] sm:$0xff]
        %v1998 = vld [vmem:[#allocation19 + $0xe8] sm:$0xff]
        %v1999 = vld [vmem:[#allocation19 + $0xf0] sm:$0xff]
        %v2000 = vld [vmem:[#allocation19 + $0xf8] sm:$0xff]
        %v2001 = vld [vmem:[#allocation19 + $0x100] sm:$0xff]
        %v2002 = vld [vmem:[#allocation19 + $0x108] sm:$0xff]
        %v2003 = vld [vmem:[#allocation19 + $0x110] sm:$0xff]
        %v2004 = vld [vmem:[#allocation19 + $0x118] sm:$0xff]
        %v2005 = vld [vmem:[#allocation19 + $0x120] sm:$0xff]
        %v2006 = vld [vmem:[#allocation19 + $0x128] sm:$0xff]
        %v2007 = vld [vmem:[#allocation19 + $0x130] sm:$0xff]
        %v2008 = vld [vmem:[#allocation19 + $0x138] sm:$0xff]
        %v2009 = vld [vmem:[#allocation19 + $0x140] sm:$0xff]
        %v2010 = vld [vmem:[#allocation19 + $0x148] sm:$0xff]
        %v2011 = vld [vmem:[#allocation19 + $0x150] sm:$0xff]
        %v2012 = vld [vmem:[#allocation19 + $0x158] sm:$0xff]
        %v2013 = vld [vmem:[#allocation19 + $0x160] sm:$0xff]
        %v2014 = vld [vmem:[#allocation19 + $0x168] sm:$0xff]
        %v2015 = vld [vmem:[#allocation19 + $0x170] sm:$0xff]
        %v2016 = vld [vmem:[#allocation19 + $0x178] sm:$0xff]
        %v2017 = vld [vmem:[#allocation19 + $0x180] sm:$0xff]
        %v2018 = vld [vmem:[#allocation19 + $0x188] sm:$0xff]
        %v2019 = vld [vmem:[#allocation19 + $0x190] sm:$0xff]
        %v2020 = vld [vmem:[#allocation19 + $0x198] sm:$0xff]
        %v2021 = vld [vmem:[#allocation19 + $0x1a0] sm:$0xff]
        %v2022 = vld [vmem:[#allocation19 + $0x1a8] sm:$0xff]
        %v2023 = vld [vmem:[#allocation19 + $0x1b0] sm:$0xff]
        %v2024 = vld [vmem:[#allocation19 + $0x1b8] sm:$0xff]
        %v2025 = vld [vmem:[#allocation19 + $0x1c0] sm:$0xff]
        %v2026 = vld [vmem:[#allocation19 + $0x1c8] sm:$0xff]
        %v2027 = vld [vmem:[#allocation19 + $0x1d0] sm:$0xff]
        %v2028 = vld [vmem:[#allocation19 + $0x1d8] sm:$0xff]
        %v2029 = vld [vmem:[#allocation19 + $0x1e0] sm:$0xff]
        %v2030 = vld [vmem:[#allocation19 + $0x1e8] sm:$0xff]
        %v2031 = vld [vmem:[#allocation19 + $0x1f0] sm:$0xff]
        %v2032 = vld [vmem:[#allocation19 + $0x1f8] sm:$0xff]
        %v2033 = vld [vmem:[%s12] sm:$0xf]
        %v2035 = vlaneseq
        %v2036 = vshrl.u32 %v2035, 7
        %v2037 = vsub.s32 0, %v2036
        %v2038 = vrot.slane %v2033, %v2037
        %v2039 = vlaneseq
        %v2040 = vshrl.u32 %v2039, 7
        %v2041 = vsub.s32 1, %v2040
        %v2042 = vrot.slane %v2033, %v2041
        %v2043 = vlaneseq
        %v2044 = vshrl.u32 %v2043, 7
        %v2045 = vsub.s32 2, %v2044
        %v2046 = vrot.slane %v2033, %v2045
        %v2047 = vlaneseq
        %v2048 = vshrl.u32 %v2047, 7
        %v2049 = vsub.s32 3, %v2048
        %v2050 = vrot.slane %v2033, %v2049
        %v2057 = vrot.slane %v1968, 7
        %v2058 = vsel %vm1302, %v2057, %v1967
        %2060 = vmatprep.subr.mxu0 %v1970
        %2061 = vmatpush1.msra.mxu0 %v1969
        %2062 = vmatprep.subr.mxu0 %v1974
        %2063 = vmatpush1.msra.mxu0 %v1973
        %2064 = vmatprep.subr.mxu0 %v1978
        %2065 = vmatpush1.msra.mxu0 %v1977
        %2066 = vmatprep.subr.mxu0 %v1982
        %2067 = vmatpush1.msra.mxu0 %v1981
        %2068 = vmatprep.subr.mxu0 %v1986
        %2069 = vmatpush1.msra.mxu0 %v1985
        %2070 = vmatprep.subr.mxu0 %v1990
        %2071 = vmatpush1.msra.mxu0 %v1989
        %2072 = vmatprep.subr.mxu0 %v1994
        %2073 = vmatpush1.msra.mxu0 %v1993
        %2074 = vmatprep.subr.mxu0 %v1998
        %2075 = vmatpush1.msra.mxu0 %v1997
        %2076 = vmatprep.subr.mxu0 %v2002
        %2077 = vmatpush1.msra.mxu0 %v2001
        %2078 = vmatprep.subr.mxu0 %v2006
        %2079 = vmatpush1.msra.mxu0 %v2005
        %2080 = vmatprep.subr.mxu0 %v2010
        %2081 = vmatpush1.msra.mxu0 %v2009
        %2082 = vmatprep.subr.mxu0 %v2014
        %2083 = vmatpush1.msra.mxu0 %v2013
        %2084 = vmatprep.subr.mxu0 %v2018
        %2085 = vmatpush1.msra.mxu0 %v2017
        %2086 = vmatprep.subr.mxu0 %v2022
        %2087 = vmatpush1.msra.mxu0 %v2021
        %2088 = vmatprep.subr.mxu0 %v2026
        %2089 = vmatpush1.msra.mxu0 %v2025
        %2090 = vmatprep.subr.mxu0 %v2030
        %2091 = vmatpush1.msra.mxu0 %v2029
        %2092 = vmatprep.subr.mxu0 0.0
        %2093 = vmatpush1.msra.mxu0 0.0
        %2094 = vmatprep.subr.mxu0 0.0
        %2095 = vmatpush1.msra.mxu0 0.0
        %2096 = vmatprep.subr.mxu0 0.0
        %2097 = vmatpush1.msra.mxu0 0.0
        %2098 = vmatprep.subr.mxu0 0.0
        %2099 = vmatpush1.msra.mxu0 0.0
        %2100 = vmatprep.subr.mxu0 0.0
        %2101 = vmatpush1.msra.mxu0 0.0
        %2102 = vmatprep.subr.mxu0 0.0
        %2103 = vmatpush1.msra.mxu0 0.0
        %2104 = vmatprep.subr.mxu0 0.0
        %2105 = vmatpush1.msra.mxu0 0.0
        %2106 = vmatprep.subr.mxu0 0.0
        %2107 = vmatpush1.msra.mxu0 0.0
        %2108 = vmatprep.subr.mxu0 0.0
        %2109 = vmatpush1.msra.mxu0 0.0
        %2110 = vmatprep.subr.mxu0 0.0
        %2111 = vmatpush1.msra.mxu0 0.0
        %2112 = vmatprep.subr.mxu0 0.0
        %2113 = vmatpush1.msra.mxu0 0.0
        %2114 = vmatprep.subr.mxu0 0.0
        %2115 = vmatpush1.msra.mxu0 0.0
        %2116 = vmatprep.subr.mxu0 0.0
        %2117 = vmatpush1.msra.mxu0 0.0
        %2118 = vmatprep.subr.mxu0 0.0
        %2119 = vmatpush1.msra.mxu0 0.0
        %2120 = vmatprep.subr.mxu0 0.0
        %2121 = vmatpush1.msra.mxu0 0.0
        %2122 = vmatprep.subr.mxu0 0.0
        %2123 = vmatpush1.msra.mxu0 0.0
        %2124 = vmatprep.mubr.f32.mxu0 0.0
        %2125 = vmatmul.mubr.f32.gmra.mrb[0].mxu0 %v2058
        %v2126 = vpop.f32.mrb[0].mxu0
        %v2127 = vadd.f32 %v2038, %v2126
        %v2128 = vpop.f32.mrb[0].mxu0
        %v2129 = vadd.f32 %v2042, %v2128
        %2130 = vdwg.mxu0
        %2131 = vmatprep.subr.mxu0 %v1972
        %2132 = vmatpush1.msra.mxu0 %v1971
        %2133 = vmatprep.subr.mxu0 %v1976
        %2134 = vmatpush1.msra.mxu0 %v1975
        %2135 = vmatprep.subr.mxu0 %v1980
        %2136 = vmatpush1.msra.mxu0 %v1979
        %2137 = vmatprep.subr.mxu0 %v1984
        %2138 = vmatpush1.msra.mxu0 %v1983
        %2139 = vmatprep.subr.mxu0 %v1988
        %2140 = vmatpush1.msra.mxu0 %v1987
        %2141 = vmatprep.subr.mxu0 %v1992
        %2142 = vmatpush1.msra.mxu0 %v1991
        %2143 = vmatprep.subr.mxu0 %v1996
        %2144 = vmatpush1.msra.mxu0 %v1995
        %2145 = vmatprep.subr.mxu0 %v2000
        %2146 = vmatpush1.msra.mxu0 %v1999
        %2147 = vmatprep.subr.mxu0 %v2004
        %2148 = vmatpush1.msra.mxu0 %v2003
        %2149 = vmatprep.subr.mxu0 %v2008
        %2150 = vmatpush1.msra.mxu0 %v2007
        %2151 = vmatprep.subr.mxu0 %v2012
        %2152 = vmatpush1.msra.mxu0 %v2011
        %2153 = vmatprep.subr.mxu0 %v2016
        %2154 = vmatpush1.msra.mxu0 %v2015
        %2155 = vmatprep.subr.mxu0 %v2020
        %2156 = vmatpush1.msra.mxu0 %v2019
        %2157 = vmatprep.subr.mxu0 %v2024
        %2158 = vmatpush1.msra.mxu0 %v2023
        %2159 = vmatprep.subr.mxu0 %v2028
        %2160 = vmatpush1.msra.mxu0 %v2027
        %2161 = vmatprep.subr.mxu0 %v2032
        %2162 = vmatpush1.msra.mxu0 %v2031
        %2163 = vmatprep.subr.mxu0 0.0
        %2164 = vmatpush1.msra.mxu0 0.0
        %2165 = vmatprep.subr.mxu0 0.0
        %2166 = vmatpush1.msra.mxu0 0.0
        %2167 = vmatprep.subr.mxu0 0.0
        %2168 = vmatpush1.msra.mxu0 0.0
        %2169 = vmatprep.subr.mxu0 0.0
        %2170 = vmatpush1.msra.mxu0 0.0
        %2171 = vmatprep.subr.mxu0 0.0
        %2172 = vmatpush1.msra.mxu0 0.0
        %2173 = vmatprep.subr.mxu0 0.0
        %2174 = vmatpush1.msra.mxu0 0.0
        %2175 = vmatprep.subr.mxu0 0.0
        %2176 = vmatpush1.msra.mxu0 0.0
        %2177 = vmatprep.subr.mxu0 0.0
        %2178 = vmatpush1.msra.mxu0 0.0
        %2179 = vmatprep.subr.mxu0 0.0
        %2180 = vmatpush1.msra.mxu0 0.0
        %2181 = vmatprep.subr.mxu0 0.0
        %2182 = vmatpush1.msra.mxu0 0.0
        %2183 = vmatprep.subr.mxu0 0.0
        %2184 = vmatpush1.msra.mxu0 0.0
        %2185 = vmatprep.subr.mxu0 0.0
        %2186 = vmatpush1.msra.mxu0 0.0
        %2187 = vmatprep.subr.mxu0 0.0
        %2188 = vmatpush1.msra.mxu0 0.0
        %2189 = vmatprep.subr.mxu0 0.0
        %2190 = vmatpush1.msra.mxu0 0.0
        %2191 = vmatprep.subr.mxu0 0.0
        %2192 = vmatpush1.msra.mxu0 0.0
        %2193 = vmatprep.subr.mxu0 0.0
        %2194 = vmatpush1.msra.mxu0 0.0
        %2195 = vmatprep.mubr.f32.mxu0 0.0
        %2196 = vmatmul.mubr.f32.gmra.mrb[0].mxu0 %v2058
        %v2197 = vpop.f32.mrb[0].mxu0
        %v2198 = vadd.f32 %v2046, %v2197
        %v2199 = vpop.f32.mrb[0].mxu0
        %v2200 = vadd.f32 %v2050, %v2199
        %2201 = vdwg.mxu0
        %v2202 = vmul.f32 %v2127, 0.5
        %v2203 = vmul.f32 %v2129, 0.5
        %v2204 = vmul.f32 %v2198, 0.5
        %v2205 = vmul.f32 %v2200, 0.5
        %v2206 = vmul.f32 %v2127, 0.70710677
        %v2207 = vmul.f32 %v2129, 0.70710677
        %v2208 = vmul.f32 %v2198, 0.70710677
        %v2209 = vmul.f32 %v2200, 0.70710677
        %vm2210 = vcmp.ge.f32.partialorder %v2206, 0.0
        %vm2211 = vcmp.ge.f32.partialorder %v2207, 0.0
        %vm2212 = vcmp.ge.f32.partialorder %v2208, 0.0
        %vm2213 = vcmp.ge.f32.partialorder %v2209, 0.0
        %v2214 = vsel %vm2210, 1.0, -1.0
        %v2215 = vsel %vm2211, 1.0, -1.0
        %v2216 = vsel %vm2212, 1.0, -1.0
        %v2217 = vsel %vm2213, 1.0, -1.0
        %v2218 = vand.u32 2147483647, %v2206
        %v2219 = vand.u32 2147483647, %v2207
        %v2220 = vand.u32 2147483647, %v2208
        %v2221 = vand.u32 2147483647, %v2209
        %v2222 = vmul.f32 %v2218, 0.3275911
        %v2223 = vmul.f32 %v2219, 0.3275911
        %v2224 = vmul.f32 %v2220, 0.3275911
        %v2225 = vmul.f32 %v2221, 0.3275911
        %v2226 = vadd.f32 %v2222, 1.0
        %v2227 = vadd.f32 %v2223, 1.0
        %v2228 = vadd.f32 %v2224, 1.0
        %v2229 = vadd.f32 %v2225, 1.0
        %v2230 = vrcp.pop %v2226
        %v2231 = vmul.f32 1.0, %v2230
        %v2232 = vrcp.pop %v2227
        %v2233 = vmul.f32 1.0, %v2232
        %v2234 = vrcp.pop %v2228
        %v2235 = vmul.f32 1.0, %v2234
        %v2236 = vrcp.pop %v2229
        %v2237 = vmul.f32 1.0, %v2236
        %v2238 = vmul.f32 %v2231, 1.0614054
        %v2239 = vmul.f32 %v2233, 1.0614054
        %v2240 = vmul.f32 %v2235, 1.0614054
        %v2241 = vmul.f32 %v2237, 1.0614054
        %v2242 = vadd.f32 %v2238, -1.4531521
        %v2243 = vadd.f32 %v2239, -1.4531521
        %v2244 = vadd.f32 %v2240, -1.4531521
        %v2245 = vadd.f32 %v2241, -1.4531521
        %v2246 = vmul.f32 %v2242, %v2231
        %v2247 = vmul.f32 %v2243, %v2233
        %v2248 = vmul.f32 %v2244, %v2235
        %v2249 = vmul.f32 %v2245, %v2237
        %v2250 = vadd.f32 %v2246, 1.4214138
        %v2251 = vadd.f32 %v2247, 1.4214138
        %v2252 = vadd.f32 %v2248, 1.4214138
        %v2253 = vadd.f32 %v2249, 1.4214138
        %v2254 = vmul.f32 %v2250, %v2231
        %v2255 = vmul.f32 %v2251, %v2233
        %v2256 = vmul.f32 %v2252, %v2235
        %v2257 = vmul.f32 %v2253, %v2237
        %v2258 = vadd.f32 %v2254, -0.28449672
        %v2259 = vadd.f32 %v2255, -0.28449672
        %v2260 = vadd.f32 %v2256, -0.28449672
        %v2261 = vadd.f32 %v2257, -0.28449672
        %v2262 = vmul.f32 %v2258, %v2231
        %v2263 = vmul.f32 %v2259, %v2233
        %v2264 = vmul.f32 %v2260, %v2235
        %v2265 = vmul.f32 %v2261, %v2237
        %v2266 = vadd.f32 %v2262, 0.2548296
        %v2267 = vadd.f32 %v2263, 0.2548296
        %v2268 = vadd.f32 %v2264, 0.2548296
        %v2269 = vadd.f32 %v2265, 0.2548296
        %v2270 = vmul.f32 %v2266, %v2231
        %v2271 = vmul.f32 %v2267, %v2233
        %v2272 = vmul.f32 %v2268, %v2235
        %v2273 = vmul.f32 %v2269, %v2237
        %v2274 = vsub.f32 0.0, %v2218
        %v2275 = vsub.f32 0.0, %v2219
        %v2276 = vsub.f32 0.0, %v2220
        %v2277 = vsub.f32 0.0, %v2221
        %v2278 = vmul.f32 %v2274, %v2218
        %v2279 = vmul.f32 %v2275, %v2219
        %v2280 = vmul.f32 %v2276, %v2220
        %v2281 = vmul.f32 %v2277, %v2221
        %v2282 = vmul.f32 %v2278, 1.442695
        %v2283 = vpow.pop %v2282
        %v2284 = vmul.f32 %v2279, 1.442695
        %v2285 = vpow.pop %v2284
        %v2286 = vmul.f32 %v2280, 1.442695
        %v2287 = vpow.pop %v2286
        %v2288 = vmul.f32 %v2281, 1.442695
        %v2289 = vpow.pop %v2288
        %v2290 = vmul.f32 %v2270, %v2283
        %v2291 = vmul.f32 %v2271, %v2285
        %v2292 = vmul.f32 %v2272, %v2287
        %v2293 = vmul.f32 %v2273, %v2289
        %v2294 = vsub.f32 1.0, %v2290
        %v2295 = vsub.f32 1.0, %v2291
        %v2296 = vsub.f32 1.0, %v2292
        %v2297 = vsub.f32 1.0, %v2293
        %v2298 = vmul.f32 %v2214, %v2294
        %v2299 = vmul.f32 %v2215, %v2295
        %v2300 = vmul.f32 %v2216, %v2296
        %v2301 = vmul.f32 %v2217, %v2297
        %v2302 = vadd.f32 %v2298, 1.0
        %v2303 = vadd.f32 %v2299, 1.0
        %v2304 = vadd.f32 %v2300, 1.0
        %v2305 = vadd.f32 %v2301, 1.0
        %v2306 = vmul.f32 %v2202, %v2302
        %v2307 = vmul.f32 %v2203, %v2303
        %v2308 = vmul.f32 %v2204, %v2304
        %v2309 = vmul.f32 %v2205, %v2305
        %v2310 = vld [vmem:[#allocation20] sm:$0xff]
        %v2311 = vld [vmem:[#allocation20 + $0x8] sm:$0xff]
        %v2312 = vld [vmem:[#allocation20 + $0x10] sm:$0xff]
        %v2313 = vld [vmem:[#allocation20 + $0x18] sm:$0xff]
        %v2314 = vld [vmem:[#allocation20 + $0x20] sm:$0xff]
        %v2315 = vld [vmem:[#allocation20 + $0x28] sm:$0xff]
        %v2316 = vld [vmem:[#allocation20 + $0x30] sm:$0xff]
        %v2317 = vld [vmem:[#allocation20 + $0x38] sm:$0xff]
        %v2318 = vld [vmem:[#allocation20 + $0x40] sm:$0xff]
        %v2319 = vld [vmem:[#allocation20 + $0x48] sm:$0xff]
        %v2320 = vld [vmem:[#allocation20 + $0x50] sm:$0xff]
        %v2321 = vld [vmem:[#allocation20 + $0x58] sm:$0xff]
        %v2322 = vld [vmem:[#allocation20 + $0x60] sm:$0xff]
        %v2323 = vld [vmem:[#allocation20 + $0x68] sm:$0xff]
        %v2324 = vld [vmem:[#allocation20 + $0x70] sm:$0xff]
        %v2325 = vld [vmem:[#allocation20 + $0x78] sm:$0xff]
        %v2326 = vld [vmem:[#allocation20 + $0x80] sm:$0xff]
        %v2327 = vld [vmem:[#allocation20 + $0x88] sm:$0xff]
        %v2328 = vld [vmem:[#allocation20 + $0x90] sm:$0xff]
        %v2329 = vld [vmem:[#allocation20 + $0x98] sm:$0xff]
        %v2330 = vld [vmem:[#allocation20 + $0xa0] sm:$0xff]
        %v2331 = vld [vmem:[#allocation20 + $0xa8] sm:$0xff]
        %v2332 = vld [vmem:[#allocation20 + $0xb0] sm:$0xff]
        %v2333 = vld [vmem:[#allocation20 + $0xb8] sm:$0xff]
        %v2334 = vld [vmem:[#allocation20 + $0xc0] sm:$0xff]
        %v2335 = vld [vmem:[#allocation20 + $0xc8] sm:$0xff]
        %v2336 = vld [vmem:[#allocation20 + $0xd0] sm:$0xff]
        %v2337 = vld [vmem:[#allocation20 + $0xd8] sm:$0xff]
        %v2338 = vld [vmem:[#allocation20 + $0xe0] sm:$0xff]
        %v2339 = vld [vmem:[#allocation20 + $0xe8] sm:$0xff]
        %v2340 = vld [vmem:[#allocation20 + $0xf0] sm:$0xff]
        %v2341 = vld [vmem:[#allocation20 + $0xf8] sm:$0xff]
        %v2342 = vld [vmem:[#allocation20 + $0x100] sm:$0xff]
        %v2343 = vld [vmem:[#allocation20 + $0x108] sm:$0xff]
        %v2344 = vld [vmem:[#allocation20 + $0x110] sm:$0xff]
        %v2345 = vld [vmem:[#allocation20 + $0x118] sm:$0xff]
        %v2346 = vld [vmem:[#allocation20 + $0x120] sm:$0xff]
        %v2347 = vld [vmem:[#allocation20 + $0x128] sm:$0xff]
        %v2348 = vld [vmem:[#allocation20 + $0x130] sm:$0xff]
        %v2349 = vld [vmem:[#allocation20 + $0x138] sm:$0xff]
        %v2350 = vld [vmem:[#allocation20 + $0x140] sm:$0xff]
        %v2351 = vld [vmem:[#allocation20 + $0x148] sm:$0xff]
        %v2352 = vld [vmem:[#allocation20 + $0x150] sm:$0xff]
        %v2353 = vld [vmem:[#allocation20 + $0x158] sm:$0xff]
        %v2354 = vld [vmem:[#allocation20 + $0x160] sm:$0xff]
        %v2355 = vld [vmem:[#allocation20 + $0x168] sm:$0xff]
        %v2356 = vld [vmem:[#allocation20 + $0x170] sm:$0xff]
        %v2357 = vld [vmem:[#allocation20 + $0x178] sm:$0xff]
        %v2358 = vld [vmem:[#allocation20 + $0x180] sm:$0xff]
        %v2359 = vld [vmem:[#allocation20 + $0x188] sm:$0xff]
        %v2360 = vld [vmem:[#allocation20 + $0x190] sm:$0xff]
        %v2361 = vld [vmem:[#allocation20 + $0x198] sm:$0xff]
        %v2362 = vld [vmem:[#allocation20 + $0x1a0] sm:$0xff]
        %v2363 = vld [vmem:[#allocation20 + $0x1a8] sm:$0xff]
        %v2364 = vld [vmem:[#allocation20 + $0x1b0] sm:$0xff]
        %v2365 = vld [vmem:[#allocation20 + $0x1b8] sm:$0xff]
        %v2366 = vld [vmem:[#allocation20 + $0x1c0] sm:$0xff]
        %v2367 = vld [vmem:[#allocation20 + $0x1c8] sm:$0xff]
        %v2368 = vld [vmem:[#allocation20 + $0x1d0] sm:$0xff]
        %v2369 = vld [vmem:[#allocation20 + $0x1d8] sm:$0xff]
        %v2370 = vld [vmem:[#allocation20 + $0x1e0] sm:$0xff]
        %v2371 = vld [vmem:[#allocation20 + $0x1e8] sm:$0xff]
        %v2372 = vld [vmem:[#allocation20 + $0x1f0] sm:$0xff]
        %v2373 = vld [vmem:[#allocation20 + $0x1f8] sm:$0xff]
        %v2374 = vld [vmem:[%s14] sm:$0x1]
        %v2376 = vlaneseq
        %v2377 = vshrl.u32 %v2376, 7
        %v2378 = vsub.s32 0, %v2377
        %v2379 = vrot.slane %v2374, %v2378
        %2381 = vmatprep.subr.mxu0 0.0
        %2382 = vmatpush1.msra.mxu0 %v2310
        %2383 = vmatprep.subr.mxu0 0.0
        %2384 = vmatpush1.msra.mxu0 %v2311
        %2385 = vmatprep.subr.mxu0 0.0
        %2386 = vmatpush1.msra.mxu0 %v2312
        %2387 = vmatprep.subr.mxu0 0.0
        %2388 = vmatpush1.msra.mxu0 %v2313
        %2389 = vmatprep.subr.mxu0 0.0
        %2390 = vmatpush1.msra.mxu0 %v2314
        %2391 = vmatprep.subr.mxu0 0.0
        %2392 = vmatpush1.msra.mxu0 %v2315
        %2393 = vmatprep.subr.mxu0 0.0
        %2394 = vmatpush1.msra.mxu0 %v2316
        %2395 = vmatprep.subr.mxu0 0.0
        %2396 = vmatpush1.msra.mxu0 %v2317
        %2397 = vmatprep.subr.mxu0 0.0
        %2398 = vmatpush1.msra.mxu0 %v2318
        %2399 = vmatprep.subr.mxu0 0.0
        %2400 = vmatpush1.msra.mxu0 %v2319
        %2401 = vmatprep.subr.mxu0 0.0
        %2402 = vmatpush1.msra.mxu0 %v2320
        %2403 = vmatprep.subr.mxu0 0.0
        %2404 = vmatpush1.msra.mxu0 %v2321
        %2405 = vmatprep.subr.mxu0 0.0
        %2406 = vmatpush1.msra.mxu0 %v2322
        %2407 = vmatprep.subr.mxu0 0.0
        %2408 = vmatpush1.msra.mxu0 %v2323
        %2409 = vmatprep.subr.mxu0 0.0
        %2410 = vmatpush1.msra.mxu0 %v2324
        %2411 = vmatprep.subr.mxu0 0.0
        %2412 = vmatpush1.msra.mxu0 %v2325
        %2413 = vmatprep.subr.mxu0 0.0
        %2414 = vmatpush1.msra.mxu0 %v2326
        %2415 = vmatprep.subr.mxu0 0.0
        %2416 = vmatpush1.msra.mxu0 %v2327
        %2417 = vmatprep.subr.mxu0 0.0
        %2418 = vmatpush1.msra.mxu0 %v2328
        %2419 = vmatprep.subr.mxu0 0.0
        %2420 = vmatpush1.msra.mxu0 %v2329
        %2421 = vmatprep.subr.mxu0 0.0
        %2422 = vmatpush1.msra.mxu0 %v2330
        %2423 = vmatprep.subr.mxu0 0.0
        %2424 = vmatpush1.msra.mxu0 %v2331
        %2425 = vmatprep.subr.mxu0 0.0
        %2426 = vmatpush1.msra.mxu0 %v2332
        %2427 = vmatprep.subr.mxu0 0.0
        %2428 = vmatpush1.msra.mxu0 %v2333
        %2429 = vmatprep.subr.mxu0 0.0
        %2430 = vmatpush1.msra.mxu0 %v2334
        %2431 = vmatprep.subr.mxu0 0.0
        %2432 = vmatpush1.msra.mxu0 %v2335
        %2433 = vmatprep.subr.mxu0 0.0
        %2434 = vmatpush1.msra.mxu0 %v2336
        %2435 = vmatprep.subr.mxu0 0.0
        %2436 = vmatpush1.msra.mxu0 %v2337
        %2437 = vmatprep.subr.mxu0 0.0
        %2438 = vmatpush1.msra.mxu0 %v2338
        %2439 = vmatprep.subr.mxu0 0.0
        %2440 = vmatpush1.msra.mxu0 %v2339
        %2441 = vmatprep.subr.mxu0 0.0
        %2442 = vmatpush1.msra.mxu0 %v2340
        %2443 = vmatprep.subr.mxu0 0.0
        %2444 = vmatpush1.msra.mxu0 %v2341
        %2445 = vmatprep.mubr.f32.mxu0 %v2307
        %2446 = vmatmul.mubr.f32.gmra.mrb[0].mxu0 %v2306
        %v2447 = vpop.f32.mrb[0].mxu0
        %v2448 = vadd.f32 %v2379, %v2447
        %v2449 = vpop.f32.mrb[0].mxu0
        %2450 = vdwg.mxu0
        %2451 = vmatprep.subr.mxu0 0.0
        %2452 = vmatpush1.msra.mxu0 %v2342
        %2453 = vmatprep.subr.mxu0 0.0
        %2454 = vmatpush1.msra.mxu0 %v2343
        %2455 = vmatprep.subr.mxu0 0.0
        %2456 = vmatpush1.msra.mxu0 %v2344
        %2457 = vmatprep.subr.mxu0 0.0
        %2458 = vmatpush1.msra.mxu0 %v2345
        %2459 = vmatprep.subr.mxu0 0.0
        %2460 = vmatpush1.msra.mxu0 %v2346
        %2461 = vmatprep.subr.mxu0 0.0
        %2462 = vmatpush1.msra.mxu0 %v2347
        %2463 = vmatprep.subr.mxu0 0.0
        %2464 = vmatpush1.msra.mxu0 %v2348
        %2465 = vmatprep.subr.mxu0 0.0
        %2466 = vmatpush1.msra.mxu0 %v2349
        %2467 = vmatprep.subr.mxu0 0.0
        %2468 = vmatpush1.msra.mxu0 %v2350
        %2469 = vmatprep.subr.mxu0 0.0
        %2470 = vmatpush1.msra.mxu0 %v2351
        %2471 = vmatprep.subr.mxu0 0.0
        %2472 = vmatpush1.msra.mxu0 %v2352
        %2473 = vmatprep.subr.mxu0 0.0
        %2474 = vmatpush1.msra.mxu0 %v2353
        %2475 = vmatprep.subr.mxu0 0.0
        %2476 = vmatpush1.msra.mxu0 %v2354
        %2477 = vmatprep.subr.mxu0 0.0
        %2478 = vmatpush1.msra.mxu0 %v2355
        %2479 = vmatprep.subr.mxu0 0.0
        %2480 = vmatpush1.msra.mxu0 %v2356
        %2481 = vmatprep.subr.mxu0 0.0
        %2482 = vmatpush1.msra.mxu0 %v2357
        %2483 = vmatprep.subr.mxu0 0.0
        %2484 = vmatpush1.msra.mxu0 %v2358
        %2485 = vmatprep.subr.mxu0 0.0
        %2486 = vmatpush1.msra.mxu0 %v2359
        %2487 = vmatprep.subr.mxu0 0.0
        %2488 = vmatpush1.msra.mxu0 %v2360
        %2489 = vmatprep.subr.mxu0 0.0
        %2490 = vmatpush1.msra.mxu0 %v2361
        %2491 = vmatprep.subr.mxu0 0.0
        %2492 = vmatpush1.msra.mxu0 %v2362
        %2493 = vmatprep.subr.mxu0 0.0
        %2494 = vmatpush1.msra.mxu0 %v2363
        %2495 = vmatprep.subr.mxu0 0.0
        %2496 = vmatpush1.msra.mxu0 %v2364
        %2497 = vmatprep.subr.mxu0 0.0
        %2498 = vmatpush1.msra.mxu0 %v2365
        %2499 = vmatprep.subr.mxu0 0.0
        %2500 = vmatpush1.msra.mxu0 %v2366
        %2501 = vmatprep.subr.mxu0 0.0
        %2502 = vmatpush1.msra.mxu0 %v2367
        %2503 = vmatprep.subr.mxu0 0.0
        %2504 = vmatpush1.msra.mxu0 %v2368
        %2505 = vmatprep.subr.mxu0 0.0
        %2506 = vmatpush1.msra.mxu0 %v2369
        %2507 = vmatprep.subr.mxu0 0.0
        %2508 = vmatpush1.msra.mxu0 %v2370
        %2509 = vmatprep.subr.mxu0 0.0
        %2510 = vmatpush1.msra.mxu0 %v2371
        %2511 = vmatprep.subr.mxu0 0.0
        %2512 = vmatpush1.msra.mxu0 %v2372
        %2513 = vmatprep.subr.mxu0 0.0
        %2514 = vmatpush1.msra.mxu0 %v2373
        %2515 = vmatprep.mubr.f32.mxu0 %v2309
        %2516 = vmatmul.mubr.f32.gmra.mrb[0].mxu0 %v2308
        %v2517 = vpop.f32.mrb[0].mxu0
        %v2518 = vadd.f32 %v2448, %v2517
        %v2519 = vpop.f32.mrb[0].mxu0
        %2520 = vdwg.mxu0
        %v2522 = vrot.slane %v2518, 1
        %v2525 = vadd.f32 %v1915, %v2518
        %v2526 = vadd.f32 %v1916, %v2522
        %v2527 = vld [vmem:[%s15] sm:$0x1]
        %v2528 = vld [vmem:[%s16] sm:$0x1]
        %v2531 = vrot.slane %v2526, 7
        %v2532 = vsel %vm1302, %v2531, %v2525
        %v2534 = vsel %vm1305, %v2532, 0.0
        %2535 = vadd.xlane.f32.xlu0 %v2534
        %v2536 = vpop.xlane.xlu0 %2535
        %v2537 = vmul.f32 %v2536, %v987
        %v2539 = vrot.slane %v2537, 1
        %v2542 = vsub.f32 %v2525, %v2537
        %v2543 = vsub.f32 %v2526, %v2539
        %v2544 = vmul.f32 %v2542, %v2542
        %v2545 = vmul.f32 %v2543, %v2543
        %v2548 = vrot.slane %v2545, 7
        %v2549 = vsel %vm1302, %v2548, %v2544
        %v2551 = vsel %vm1305, %v2549, 0.0
        %2552 = vadd.xlane.f32.xlu0 %v2551
        %v2553 = vpop.xlane.xlu0 %2552
        %v2554 = vmul.f32 %v2553, %v987
        %v2555 = vadd.f32 %v2554, 1e-05
        %v2556 = vrsqrt.pop %v2555
        %v2558 = vrot.slane %v2556, 1
        %v2561 = vmul.f32 %v2542, %v2556
        %v2562 = vmul.f32 %v2543, %v2558
        %v2564 = vlaneseq
        %v2565 = vshrl.u32 %v2564, 7
        %v2566 = vsub.s32 0, %v2565
        %v2567 = vrot.slane %v2527, %v2566
        %v2569 = vmul.f32 %v2561, %v2567
        %v2570 = vmul.f32 %v2562, %v2567
        %v2572 = vlaneseq
        %v2573 = vshrl.u32 %v2572, 7
        %v2574 = vsub.s32 0, %v2573
        %v2575 = vrot.slane %v2528, %v2574
        %v2577 = vadd.f32 %v2569, %v2575
        %v2578 = vadd.f32 %v2570, %v2575
        %2579 = vst [vmem:[%s796] sm:$0x1] %v2577
        %2580 = vst [vmem:[%s796 + $0x1] sm:$0x1] %v2578
        %s2581 = sand.u32 %s476, 1
        %s2582 = scalar_lea.sflag [#allocation4], %s2581
        %s2583 = sand.u32 %s476, 1
        %s2584 = smul.addr %s2583, 2
        %s2585 = scalar_lea.vmem [#allocation22], %s2584
        // Predicated region
        $region149: #{tpu_custom_call.1} parent=99 // pred_check
          %p2586 = pneg %p486
        $region150: #{tpu_custom_call.1} parent=99 // pred_check_branch
          %2588 = sbr.rel (%p2586) target = $region152
        $region151: #{tpu_custom_call.1} parent=99 // pred_region
          %s2589 = smul.u32 2, %s43
          %s2591 = ssub.s32 32, 32
          %2592 = vsyncadd %s2582, %s2591
          %s2593 = smul.addr %s2589, 16
          %s2594 = scalar_lea.hbm %s20, %s2593
          %s2595 = sshll.u32 %s2585, 4
          %s2596 = int_to_ptr.vmem [resolvable:$true] %s2595
          %2601 = dma.vmem_to_hbm [thread:$0]  %s2596, 32, %s2594, %s2582, 16, 16, 1
        $region152: #{tpu_custom_call.1} parent=99 // pred_fallthru
          _
      $region100: #{tpu_custom_call.1} parent=5 // pred_fallthru
        _
      %p2602 = scmp.le.s32.totalorder 2, %s38
      // Predicated region
      $region153: #{tpu_custom_call.1} parent=5 // pred_check
        %p2603 = pneg %p2602
      $region154: #{tpu_custom_call.1} parent=5 // pred_check_branch
        %2605 = sbr.rel (%p2603) target = $region156
      $region155: #{tpu_custom_call.1} parent=5 // pred_region
        %s2606 = ssub.s32 %s38, 2
        // Predicated region
        $region157: #{tpu_custom_call.1} parent=155 // pred_check
          %p2607 = pneg %p492
        $region158: #{tpu_custom_call.1} parent=155 // pred_check_branch
          %2609 = sbr.rel (%p2607) target = $region160
        $region159: #{tpu_custom_call.1} parent=155 // pred_region
          %s2610 = sand.u32 %s477, 1
          %s2611 = scalar_lea.sflag [#allocation4], %s2610
          %s2612 = sand.u32 %s477, 1
          %s2613 = smul.addr %s2612, 2
          %s2614 = scalar_lea.vmem [#allocation22], %s2613
          %2615 = dma.done %s2611, 32
        $region160: #{tpu_custom_call.1} parent=155 // pred_fallthru
          _
      $region156: #{tpu_custom_call.1} parent=5 // pred_fallthru
        _
    $region6: #{tpu_custom_call.1} parent=1 // loop_footer
      %s42 = sadd.s32 1, %s38
    $region7: #{tpu_custom_call.1} parent=1 // loop_footer_branch
      %37 = sbr.rel target = $region3
    $region8: #{tpu_custom_call.1} parent=1 // loop_exit
      _
    %2616 = vsyncpa [#allocation3], 1
    %s2617 = scalar_lea.sflag [#allocation3], 1
    %2618 = vsyncpa %s2617, 1
    %2619 = vsyncpa [#allocation6], 1
    %2620 = vsyncpa [#allocation9], 1
    %2621 = vsyncpa [#allocation12], 1
    %2622 = vsyncpa [#allocation15], 1
    %2623 = vsyncpa [#allocation18], 1
    %2624 = vsyncpa [#allocation21], 1
    %2625 = vsyncpa [#allocation4], 1
    %s2626 = scalar_lea.sflag [#allocation4], 1
    %2627 = vsyncpa %s2626, 1

</llo_original>
